<compile_context>
chip_gen: v6e
topology: v6e:2x2x1
jax: 0.10.0
libtpu: 0.0.40
codegen_flags: <defaults>
</compile_context>

<pallas_src>
import functools

import jax
import jax.numpy as jnp
from jax.experimental import pallas as pl
from jax.experimental.pallas import tpu as pltpu


def _round_up(x, m):
    return ((x + m - 1) // m) * m


# ----------------------------------------------------------------------------
# Fused per-frame math: conv-as-matmul -> PReLU -> MLP -> sigmoid gate -> transpose-conv matmul
# ----------------------------------------------------------------------------
def _fused_core(frames, wct_ref, bc_ref, alpha_ref, wmt_ref, wt_ref):
    """frames: (tn, K) f32.  Returns (tn, K) f32 per-frame transpose-conv contributions."""
    # Conv1d over one frame == frame @ W_c^T + b_c   (bf16 operands, f32 accumulation)
    spec = jnp.dot(frames.astype(jnp.bfloat16), wct_ref[...],
                   preferred_element_type=jnp.float32) + bc_ref[...]
    # PReLU (single shared alpha, read from SMEM)
    alpha = alpha_ref[0, 0]
    spec = jnp.where(spec >= 0.0, spec, alpha * spec)
    # BitwiseMLP with fc_sizes=[] == single K->K linear, bias=False, then sigmoid gate
    logits = jnp.dot(spec.astype(jnp.bfloat16), wmt_ref[...],
                     preferred_element_type=jnp.float32)
    gate = pl.reciprocal(1.0 + jnp.exp(-logits), approx=True)   # exp+recip -> EUP slot
    gated = gate * spec
    # ConvTranspose1d per-frame contribution == gated @ W_t (overlap-add done outside)
    return jnp.dot(gated.astype(jnp.bfloat16), wt_ref[...],
                   preferred_element_type=jnp.float32)


def _chunked_kernel(cur_ref, nxt_ref, wct_ref, bc_ref, alpha_ref, wmt_ref, wt_ref,
                    out_ref, *, R, tn, nh):
    """Builds the (tn, K) frame tile in-kernel from S-wide chunks (no HBM inflation)."""
    cur = cur_ref[0]                       # (tn, S)  chunks [j*tn, (j+1)*tn)
    head = nxt_ref[0, 0:nh, :]             # (nh, S)  first chunks of the next tile
    win = jnp.concatenate([cur, head], axis=0)                               # (tn+nh, S)
    frames = jnp.concatenate([win[r:r + tn, :] for r in range(R)], axis=1)   # (tn, K)
    out_ref[0] = _fused_core(frames, wct_ref, bc_ref, alpha_ref,
                             wmt_ref, wt_ref).astype(out_ref.dtype)


def _preframed_kernel(f_ref, wct_ref, bc_ref, alpha_ref, wmt_ref, wt_ref, out_ref):
    """Fallback: frames already materialized as (tn, K) rows."""
    out_ref[...] = _fused_core(f_ref[...], wct_ref, bc_ref, alpha_ref,
                               wmt_ref, wt_ref).astype(out_ref.dtype)


# ----------------------------------------------------------------------------
# pallas_call wrappers
# ----------------------------------------------------------------------------
def _call_chunked(x2, wct, bc2, alpha2, wmt, wtb, *, B, T, K, S, L, tn, vmem_limit):
    R = K // S
    nh = _round_up(max(R - 1, 1), 8)        # extra chunks needed from the next tile
    assert tn >= nh
    L_pad = _round_up(L, tn)
    nj = L_pad // tn
    C_pad = L_pad + tn                      # chunk count incl. the extra "next" block
    assert C_pad * S >= T + 2 * K
    # Conv1d padding = K on both sides, then zero-fill to exactly C_pad chunks of S samples.
    x_pad = jnp.pad(x2, ((0, 0), (K, C_pad * S - (T + K))))
    x3 = x_pad.reshape(B, C_pad, S)

    kernel = functools.partial(_chunked_kernel, R=R, tn=tn, nh=nh)
    out = pl.pallas_call(
        kernel,
        out_shape=jax.ShapeDtypeStruct((B, L_pad, K), jnp.float32),
        grid_spec=pltpu.PrefetchScalarGridSpec(
            num_scalar_prefetch=0,
            grid=(B, nj),
            in_specs=[
                # current tile's chunks + the next tile's chunks (head used for overlap)
                pl.BlockSpec((1, tn, S), lambda b, j: (b, j, 0)),
                pl.BlockSpec((1, tn, S), lambda b, j: (b, j + 1, 0)),
                # weights: constant block index -> stay resident in VMEM across steps
                pl.BlockSpec((K, K), lambda b, j: (0, 0)),                 # W_c^T   bf16
                pl.BlockSpec((1, K), lambda b, j: (0, 0)),                 # b_c     f32
                pl.BlockSpec(memory_space=pltpu.MemorySpace.SMEM),         # PReLU alpha
                pl.BlockSpec((K, K), lambda b, j: (0, 0)),                 # W_mlp^T bf16
                pl.BlockSpec((K, K), lambda b, j: (0, 0)),                 # W_t     bf16
            ],
            out_specs=pl.BlockSpec((1, tn, K), lambda b, j: (b, j, 0)),    # lane-dense
        ),
        compiler_params=pltpu.CompilerParams(
            dimension_semantics=("parallel", "parallel"),
            vmem_limit_bytes=vmem_limit,
        ),
    )(x3, x3, wct, bc2, alpha2, wmt, wtb)
    return out[:, :L, :]


def _call_preframed(x2, wct, bc2, alpha2, wmt, wtb, *, B, T, K, S, L, tn, vmem_limit):
    R = K // S
    # Frames built by XLA (slice+concat, no gather).  Materializes the K/S expansion in
    # HBM, hence only used as a fallback path.
    n_chunks = L + R - 1
    x_pad = jnp.pad(x2, ((0, 0), (K, n_chunks * S - (T + K))))
    ch = x_pad.reshape(B, n_chunks, S)
    frames = jnp.concatenate([ch[:, r:r + L, :] for r in range(R)], axis=2)  # (B, L, K)
    N = B * L
    n_pad = _round_up(N, tn)
    F = jnp.pad(frames.reshape(N, K), ((0, n_pad - N), (0, 0)))

    out = pl.pallas_call(
        _preframed_kernel,
        out_shape=jax.ShapeDtypeStruct((n_pad, K), jnp.float32),
        grid_spec=pltpu.PrefetchScalarGridSpec(
            num_scalar_prefetch=0,
            grid=(n_pad // tn,),
            in_specs=[
                pl.BlockSpec((tn, K), lambda i: (i, 0)),
                pl.BlockSpec((K, K), lambda i: (0, 0)),
                pl.BlockSpec((1, K), lambda i: (0, 0)),
                pl.BlockSpec(memory_space=pltpu.MemorySpace.SMEM),
                pl.BlockSpec((K, K), lambda i: (0, 0)),
                pl.BlockSpec((K, K), lambda i: (0, 0)),
            ],
            out_specs=pl.BlockSpec((tn, K), lambda i: (i, 0)),
        ),
        compiler_params=pltpu.CompilerParams(
            dimension_semantics=("parallel",),
            vmem_limit_bytes=vmem_limit,
        ),
    )(F, wct, bc2, alpha2, wmt, wtb)
    return out[:N].reshape(B, L, K)


@functools.partial(jax.jit, static_argnames=("stride", "time_len"))
def _overlap_add(res, bt, *, stride, time_len):
    """Scatter-free overlap-add of ConvTranspose1d + bias + [K:T+K] slice."""
    B, L, K = res.shape
    S, T = stride, time_len
    R = K // S
    out_len = (L - 1) * S + K
    res4 = res.reshape(B, L, R, S)
    y = None
    for r in range(R):       # R pad+add terms; XLA fuses into one pass (no scatter)
        seg = jnp.pad(res4[:, :, r, :].reshape(B, L * S),
                      ((0, 0), (r * S, (R - 1 - r) * S)))
        y = seg if y is None else y + seg
    y = y + bt[0]
    return y[:, None, K:T + K]


def bitwise_adaptive_transform(x, wc, bc, alpha, wm, wt, bt, *,
                               kernel_size, stride, tn=1024):
    """x: (B, 1, T) float32.  Returns (B, 1, T) float32."""
    B, C, T = x.shape
    assert C == 1
    K, S = kernel_size, stride
    assert K % S == 0, "overlap-add glue assumes kernel_size % stride == 0"

    L = (T + 2 * K - K) // S + 1                         # Conv1d output length
    # Frame-tile size: big enough to keep the MXU busy, multiple of 256, shrunk for tiny L.
    tn_eff = min(_round_up(tn, 256), _round_up(L, 256))
    vmem_limit = 48 * 1024 * 1024                        # headroom on v7x (64 MiB physical)

    x2 = x[:, 0, :]
    wct = wc.T.astype(jnp.bfloat16)                      # (K, K)  Conv1d weight^T
    wmt = wm.T.astype(jnp.bfloat16)                      # (K, K)  MLP weight^T
    wtb = wt.astype(jnp.bfloat16)                        # (K, K)  ConvTranspose1d weight
    bc2 = bc.reshape(1, K).astype(jnp.float32)
    alpha2 = jnp.full((1, 1), alpha, jnp.float32)

    common = dict(B=B, T=T, K=K, S=S, L=L, tn=tn_eff, vmem_limit=vmem_limit)
    try:
        # Preferred path: frames built inside the kernel (no K/S-fold HBM inflation).
        res = _call_chunked(x2, wct, bc2, alpha2, wmt, wtb, **common)
    except Exception:
        # Fallback for Mosaic versions without unaligned slice/concat support.
        res = _call_preframed(x2, wct, bc2, alpha2, wmt, wtb, **common)

    return _overlap_add(res, bt, stride=S, time_len=T)


# ----------------------------------------------------------------------------
# Pure-JAX f32 reference (for validation of the Pallas path)
# ----------------------------------------------------------------------------
def _reference_forward(x, wc, bc, alpha, wm, wt, bt, *, kernel_size, stride):
    B, _, T = x.shape
    K, S = kernel_size, stride
    R = K // S
    x2 = x[:, 0, :]
    x_pad = jnp.pad(x2, ((0, 0), (K, K)))
    L = (T + 2 * K - K) // S + 1
    idx = jnp.arange(L)[:, None] * S + jnp.arange(K)[None, :]
    frames = x_pad[:, idx]                                  # (B, L, K)
    spec = jnp.einsum('blk,ok->blo', frames, wc) + bc
    spec = jnp.where(spec >= 0.0, spec, alpha * spec)
    gate = jax.nn.sigmoid(jnp.einsum('blk,ok->blo', spec, wm))
    gated = gate * spec
    res = jnp.einsum('blk,ko->blo', gated, wt)              # (B, L, K)
    out_len = (L - 1) * S + K
    y = jnp.zeros((B, out_len), jnp.float32)
    res4 = res.reshape(B, L, R, S)
    for r in range(R):
        y = y.at[:, r * S:r * S + L * S].add(res4[:, :, r, :].reshape(B, L * S))
    y = y + bt[0]
    return y[:, None, K:T + K]


if __name__ == "__main__":
    K, S = 128, 16          # kernel_size, stride (small version of the 256/16 default)
    B, T = 2, 128

    key = jax.random.PRNGKey(0)
    k1, k2, k3, k4, k5, k6 = jax.random.split(key, 6)
    x = jax.random.normal(k1, (B, 1, T), jnp.float32)

    # Deterministic synthetic parameters (shapes per module __init__):
    wc = jax.random.normal(k2, (K, K), jnp.float32) / jnp.sqrt(K)   # Conv1d weight (K,1,K) squeezed
    bc = 0.1 * jax.random.normal(k3, (K,), jnp.float32)             # Conv1d bias
    alpha = jnp.float32(0.25)                                       # PReLU default init
    wm = jax.random.normal(k4, (K, K), jnp.float32) / jnp.sqrt(K)   # MLP K->K, bias=False
    wt = jax.random.normal(k5, (K, K), jnp.float32) / jnp.sqrt(K)   # ConvTranspose1d weight (K,1,K) squeezed
    bt = 0.1 * jax.random.normal(k6, (1,), jnp.float32)             # ConvTranspose1d bias

    y = bitwise_adaptive_transform(x, wc, bc, alpha, wm, wt, bt,
                                   kernel_size=K, stride=S)
    jax.block_until_ready(y)
    assert y.shape == (B, 1, T) and y.dtype == jnp.float32

    # Validate against the pure-f32 reference (bf16 matmul operands -> loose tolerance).
    y_ref = _reference_forward(x, wc, bc, alpha, wm, wt, bt, kernel_size=K, stride=S)
    err = float(jnp.max(jnp.abs(y - y_ref)))
    scale = float(jnp.max(jnp.abs(y_ref))) + 1.0
    assert err < 0.08 * scale, f"mismatch vs reference: max|err|={err}, scale={scale}"

    print("KERNEL_OK")
</pallas_src>

<mosaic_0001>
module attributes {stable_mosaic.version = 11 : i64} {
  func.func @_chunked_kernel(%arg0: i32, %arg1: i32, %arg2: memref<1x256x16xf32, #tpu.memory_space<vmem>>, %arg3: memref<1x256x16xf32, #tpu.memory_space<vmem>>, %arg4: memref<128x128xbf16, #tpu.memory_space<vmem>>, %arg5: memref<1x128xf32, #tpu.memory_space<vmem>>, %arg6: memref<1x1xf32, #tpu.memory_space<smem>>, %arg7: memref<128x128xbf16, #tpu.memory_space<vmem>>, %arg8: memref<128x128xbf16, #tpu.memory_space<vmem>>, %arg9: memref<1x256x128xf32, #tpu.memory_space<vmem>>) attributes {dimension_semantics = [#tpu.dimension_semantics<parallel>, #tpu.dimension_semantics<parallel>], iteration_bounds = array<i64: 2, 1>, scalar_prefetch = 0 : i64, scratch_operands = 0 : i64, tpu.core_type = #tpu.core_type<tc>, window_params = [{transform_indices = @transform_0, window_bounds = array<i64: 1, 256, 16>}, {transform_indices = @transform_1, window_bounds = array<i64: 1, 256, 16>}, {pipeline_mode = #tpu.pipeline_mode<synchronous>, transform_indices = @transform_2, window_bounds = array<i64: 128, 128>}, {pipeline_mode = #tpu.pipeline_mode<synchronous>, transform_indices = @transform_3, window_bounds = array<i64: 1, 128>}, {transform_indices = @transform_4, window_bounds = array<i64: 1, 1>}, {pipeline_mode = #tpu.pipeline_mode<synchronous>, transform_indices = @transform_5, window_bounds = array<i64: 128, 128>}, {pipeline_mode = #tpu.pipeline_mode<synchronous>, transform_indices = @transform_6, window_bounds = array<i64: 128, 128>}, {transform_indices = @transform_7, window_bounds = array<i64: 1, 256, 128>}]} {
    %c0 = arith.constant 0 : index
    %c0_0 = arith.constant 0 : index
    %c0_1 = arith.constant 0 : index
    %0 = vector.load %arg2[%c0, %c0_0, %c0_1] : memref<1x256x16xf32, #tpu.memory_space<vmem>>, vector<1x256x16xf32>
    %1 = vector.shape_cast %0 : vector<1x256x16xf32> to vector<256x16xf32>
    %c0_2 = arith.constant 0 : index
    %c0_3 = arith.constant 0 : index
    %c0_4 = arith.constant 0 : index
    %2 = vector.load %arg3[%c0_2, %c0_3, %c0_4] : memref<1x256x16xf32, #tpu.memory_space<vmem>>, vector<1x8x16xf32>
    %3 = vector.shape_cast %2 : vector<1x8x16xf32> to vector<8x16xf32>
    %4 = tpu.concatenate %1, %3 in 0 : vector<256x16xf32>, vector<8x16xf32> -> vector<264x16xf32>
    %5 = vector.extract_strided_slice %4 {offsets = [0, 0], sizes = [256, 16], strides = [1, 1]} : vector<264x16xf32> to vector<256x16xf32>
    %6 = vector.extract_strided_slice %4 {offsets = [1, 0], sizes = [256, 16], strides = [1, 1]} : vector<264x16xf32> to vector<256x16xf32>
    %7 = vector.extract_strided_slice %4 {offsets = [2, 0], sizes = [256, 16], strides = [1, 1]} : vector<264x16xf32> to vector<256x16xf32>
    %8 = vector.extract_strided_slice %4 {offsets = [3, 0], sizes = [256, 16], strides = [1, 1]} : vector<264x16xf32> to vector<256x16xf32>
    %9 = vector.extract_strided_slice %4 {offsets = [4, 0], sizes = [256, 16], strides = [1, 1]} : vector<264x16xf32> to vector<256x16xf32>
    %10 = vector.extract_strided_slice %4 {offsets = [5, 0], sizes = [256, 16], strides = [1, 1]} : vector<264x16xf32> to vector<256x16xf32>
    %11 = vector.extract_strided_slice %4 {offsets = [6, 0], sizes = [256, 16], strides = [1, 1]} : vector<264x16xf32> to vector<256x16xf32>
    %12 = vector.extract_strided_slice %4 {offsets = [7, 0], sizes = [256, 16], strides = [1, 1]} : vector<264x16xf32> to vector<256x16xf32>
    %13 = tpu.concatenate %5, %6, %7, %8, %9, %10, %11, %12 in 1 : vector<256x16xf32>, vector<256x16xf32>, vector<256x16xf32>, vector<256x16xf32>, vector<256x16xf32>, vector<256x16xf32>, vector<256x16xf32>, vector<256x16xf32> -> vector<256x128xf32>
    %14 = arith.truncf %13 : vector<256x128xf32> to vector<256x128xbf16>
    %c0_5 = arith.constant 0 : index
    %c0_6 = arith.constant 0 : index
    %15 = vector.load %arg4[%c0_5, %c0_6] : memref<128x128xbf16, #tpu.memory_space<vmem>>, vector<128x128xbf16>
    %cst = arith.constant dense<0.000000e+00> : vector<256x128xf32>
    %16 = tpu.matmul %14, %15, %cst {dimension_numbers = #tpu.dot_dimension_numbers<[1], [0], [0], [1], [0, 0, 1, 1], [], []>} : vector<256x128xbf16>, vector<128x128xbf16>, vector<256x128xf32> -> vector<256x128xf32>
    %c0_7 = arith.constant 0 : index
    %c0_8 = arith.constant 0 : index
    %17 = vector.load %arg5[%c0_7, %c0_8] : memref<1x128xf32, #tpu.memory_space<vmem>>, vector<1x128xf32>
    %18 = vector.broadcast %17 : vector<1x128xf32> to vector<256x128xf32>
    %19 = arith.addf %16, %18 : vector<256x128xf32>
    %c0_9 = arith.constant 0 : index
    %c0_10 = arith.constant 0 : index
    %20 = memref.load %arg6[%c0_9, %c0_10] : memref<1x1xf32, #tpu.memory_space<smem>>
    %cst_11 = arith.constant 0.000000e+00 : f32
    %21 = vector.broadcast %cst_11 : f32 to vector<256x128xf32>
    %22 = arith.cmpf oge, %19, %21 : vector<256x128xf32>
    %23 = vector.broadcast %20 : f32 to vector<256x128xf32>
    %24 = arith.mulf %23, %19 : vector<256x128xf32>
    %25 = arith.select %22, %19, %24 : vector<256x128xi1>, vector<256x128xf32>
    %26 = arith.truncf %25 : vector<256x128xf32> to vector<256x128xbf16>
    %c0_12 = arith.constant 0 : index
    %c0_13 = arith.constant 0 : index
    %27 = vector.load %arg7[%c0_12, %c0_13] : memref<128x128xbf16, #tpu.memory_space<vmem>>, vector<128x128xbf16>
    %cst_14 = arith.constant dense<0.000000e+00> : vector<256x128xf32>
    %28 = tpu.matmul %26, %27, %cst_14 {dimension_numbers = #tpu.dot_dimension_numbers<[1], [0], [0], [1], [0, 0, 1, 1], [], []>} : vector<256x128xbf16>, vector<128x128xbf16>, vector<256x128xf32> -> vector<256x128xf32>
    %cst_15 = arith.constant 0.000000e+00 : f32
    %29 = vector.broadcast %cst_15 : f32 to vector<256x128xf32>
    %30 = arith.subf %29, %28 : vector<256x128xf32>
    %31 = math.exp %30 : vector<256x128xf32>
    %cst_16 = arith.constant 1.000000e+00 : f32
    %32 = vector.broadcast %cst_16 : f32 to vector<256x128xf32>
    %33 = arith.addf %32, %31 : vector<256x128xf32>
    %34 = tpu.reciprocal %33 {approx = true} : vector<256x128xf32> -> vector<256x128xf32>
    %35 = arith.mulf %34, %25 : vector<256x128xf32>
    %36 = arith.truncf %35 : vector<256x128xf32> to vector<256x128xbf16>
    %c0_17 = arith.constant 0 : index
    %c0_18 = arith.constant 0 : index
    %37 = vector.load %arg8[%c0_17, %c0_18] : memref<128x128xbf16, #tpu.memory_space<vmem>>, vector<128x128xbf16>
    %cst_19 = arith.constant dense<0.000000e+00> : vector<256x128xf32>
    %38 = tpu.matmul %36, %37, %cst_19 {dimension_numbers = #tpu.dot_dimension_numbers<[1], [0], [0], [1], [0, 0, 1, 1], [], []>} : vector<256x128xbf16>, vector<128x128xbf16>, vector<256x128xf32> -> vector<256x128xf32>
    %c0_20 = arith.constant 0 : index
    %c0_21 = arith.constant 0 : index
    %c0_22 = arith.constant 0 : index
    %39 = vector.load %arg9[%c0_20, %c0_21, %c0_22] : memref<1x256x128xf32, #tpu.memory_space<vmem>>, vector<1x256x128xf32>
    %40 = vector.shape_cast %39 : vector<1x256x128xf32> to vector<256x128xf32>
    %41 = vector.shape_cast %38 : vector<256x128xf32> to vector<1x256x128xf32>
    tpu.vector_store %arg9[%c0_20, %c0_21, %c0_22], %41 {strides = array<i32>} : memref<1x256x128xf32, #tpu.memory_space<vmem>>, vector<1x256x128xf32>,
    return
  }
  func.func @transform_0(%arg0: i32, %arg1: i32) -> (i32, i32, i32) {
    %c0_i32 = arith.constant 0 : i32
    %c0_i32_0 = arith.constant 0 : i32
    return %arg0, %arg1, %c0_i32 : i32, i32, i32
  }
  func.func @transform_1(%arg0: i32, %arg1: i32) -> (i32, i32, i32) {
    %c1_i32 = arith.constant 1 : i32
    %0 = arith.addi %arg1, %c1_i32 : i32
    %c0_i32 = arith.constant 0 : i32
    %c0_i32_0 = arith.constant 0 : i32
    return %arg0, %0, %c0_i32 : i32, i32, i32
  }
  func.func @transform_2(%arg0: i32, %arg1: i32) -> (i32, i32) {
    %c0_i32 = arith.constant 0 : i32
    %c0_i32_0 = arith.constant 0 : i32
    %c0_i32_1 = arith.constant 0 : i32
    return %c0_i32, %c0_i32_0 : i32, i32
  }
  func.func @transform_3(%arg0: i32, %arg1: i32) -> (i32, i32) {
    %c0_i32 = arith.constant 0 : i32
    %c0_i32_0 = arith.constant 0 : i32
    %c0_i32_1 = arith.constant 0 : i32
    return %c0_i32, %c0_i32_0 : i32, i32
  }
  func.func @transform_4(%arg0: i32, %arg1: i32) -> (i32, i32) {
    %c0_i32 = arith.constant 0 : i32
    %c0_i32_0 = arith.constant 0 : i32
    %c0_i32_1 = arith.constant 0 : i32
    return %c0_i32, %c0_i32_0 : i32, i32
  }
  func.func @transform_5(%arg0: i32, %arg1: i32) -> (i32, i32) {
    %c0_i32 = arith.constant 0 : i32
    %c0_i32_0 = arith.constant 0 : i32
    %c0_i32_1 = arith.constant 0 : i32
    return %c0_i32, %c0_i32_0 : i32, i32
  }
  func.func @transform_6(%arg0: i32, %arg1: i32) -> (i32, i32) {
    %c0_i32 = arith.constant 0 : i32
    %c0_i32_0 = arith.constant 0 : i32
    %c0_i32_1 = arith.constant 0 : i32
    return %c0_i32, %c0_i32_0 : i32, i32
  }
  func.func @transform_7(%arg0: i32, %arg1: i32) -> (i32, i32, i32) {
    %c0_i32 = arith.constant 0 : i32
    %c0_i32_0 = arith.constant 0 : i32
    return %arg0, %arg1, %c0_i32 : i32, i32, i32
  }
}

module attributes {stable_mosaic.version = 11 : i64} {
  func.func @_preframed_kernel(%arg0: i32, %arg1: memref<256x128xf32, #tpu.memory_space<vmem>>, %arg2: memref<128x128xbf16, #tpu.memory_space<vmem>>, %arg3: memref<1x128xf32, #tpu.memory_space<vmem>>, %arg4: memref<1x1xf32, #tpu.memory_space<smem>>, %arg5: memref<128x128xbf16, #tpu.memory_space<vmem>>, %arg6: memref<128x128xbf16, #tpu.memory_space<vmem>>, %arg7: memref<256x128xf32, #tpu.memory_space<vmem>>) attributes {dimension_semantics = [#tpu.dimension_semantics<parallel>], iteration_bounds = array<i64: 1>, scalar_prefetch = 0 : i64, scratch_operands = 0 : i64, tpu.core_type = #tpu.core_type<tc>, window_params = [{transform_indices = @transform_0, window_bounds = array<i64: 256, 128>}, {pipeline_mode = #tpu.pipeline_mode<synchronous>, transform_indices = @transform_1, window_bounds = array<i64: 128, 128>}, {pipeline_mode = #tpu.pipeline_mode<synchronous>, transform_indices = @transform_2, window_bounds = array<i64: 1, 128>}, {transform_indices = @transform_3, window_bounds = array<i64: 1, 1>}, {pipeline_mode = #tpu.pipeline_mode<synchronous>, transform_indices = @transform_4, window_bounds = array<i64: 128, 128>}, {pipeline_mode = #tpu.pipeline_mode<synchronous>, transform_indices = @transform_5, window_bounds = array<i64: 128, 128>}, {transform_indices = @transform_6, window_bounds = array<i64: 256, 128>}]} {
    %c0 = arith.constant 0 : index
    %c0_0 = arith.constant 0 : index
    %0 = vector.load %arg1[%c0, %c0_0] : memref<256x128xf32, #tpu.memory_space<vmem>>, vector<256x128xf32>
    %1 = arith.truncf %0 : vector<256x128xf32> to vector<256x128xbf16>
    %c0_1 = arith.constant 0 : index
    %c0_2 = arith.constant 0 : index
    %2 = vector.load %arg2[%c0_1, %c0_2] : memref<128x128xbf16, #tpu.memory_space<vmem>>, vector<128x128xbf16>
    %cst = arith.constant dense<0.000000e+00> : vector<256x128xf32>
    %3 = tpu.matmul %1, %2, %cst {dimension_numbers = #tpu.dot_dimension_numbers<[1], [0], [0], [1], [0, 0, 1, 1], [], []>} : vector<256x128xbf16>, vector<128x128xbf16>, vector<256x128xf32> -> vector<256x128xf32>
    %c0_3 = arith.constant 0 : index
    %c0_4 = arith.constant 0 : index
    %4 = vector.load %arg3[%c0_3, %c0_4] : memref<1x128xf32, #tpu.memory_space<vmem>>, vector<1x128xf32>
    %5 = vector.broadcast %4 : vector<1x128xf32> to vector<256x128xf32>
    %6 = arith.addf %3, %5 : vector<256x128xf32>
    %c0_5 = arith.constant 0 : index
    %c0_6 = arith.constant 0 : index
    %7 = memref.load %arg4[%c0_5, %c0_6] : memref<1x1xf32, #tpu.memory_space<smem>>
    %cst_7 = arith.constant 0.000000e+00 : f32
    %8 = vector.broadcast %cst_7 : f32 to vector<256x128xf32>
    %9 = arith.cmpf oge, %6, %8 : vector<256x128xf32>
    %10 = vector.broadcast %7 : f32 to vector<256x128xf32>
    %11 = arith.mulf %10, %6 : vector<256x128xf32>
    %12 = arith.select %9, %6, %11 : vector<256x128xi1>, vector<256x128xf32>
    %13 = arith.truncf %12 : vector<256x128xf32> to vector<256x128xbf16>
    %c0_8 = arith.constant 0 : index
    %c0_9 = arith.constant 0 : index
    %14 = vector.load %arg5[%c0_8, %c0_9] : memref<128x128xbf16, #tpu.memory_space<vmem>>, vector<128x128xbf16>
    %cst_10 = arith.constant dense<0.000000e+00> : vector<256x128xf32>
    %15 = tpu.matmul %13, %14, %cst_10 {dimension_numbers = #tpu.dot_dimension_numbers<[1], [0], [0], [1], [0, 0, 1, 1], [], []>} : vector<256x128xbf16>, vector<128x128xbf16>, vector<256x128xf32> -> vector<256x128xf32>
    %cst_11 = arith.constant 0.000000e+00 : f32
    %16 = vector.broadcast %cst_11 : f32 to vector<256x128xf32>
    %17 = arith.subf %16, %15 : vector<256x128xf32>
    %18 = math.exp %17 : vector<256x128xf32>
    %cst_12 = arith.constant 1.000000e+00 : f32
    %19 = vector.broadcast %cst_12 : f32 to vector<256x128xf32>
    %20 = arith.addf %19, %18 : vector<256x128xf32>
    %21 = tpu.reciprocal %20 {approx = true} : vector<256x128xf32> -> vector<256x128xf32>
    %22 = arith.mulf %21, %12 : vector<256x128xf32>
    %23 = arith.truncf %22 : vector<256x128xf32> to vector<256x128xbf16>
    %c0_13 = arith.constant 0 : index
    %c0_14 = arith.constant 0 : index
    %24 = vector.load %arg6[%c0_13, %c0_14] : memref<128x128xbf16, #tpu.memory_space<vmem>>, vector<128x128xbf16>
    %cst_15 = arith.constant dense<0.000000e+00> : vector<256x128xf32>
    %25 = tpu.matmul %23, %24, %cst_15 {dimension_numbers = #tpu.dot_dimension_numbers<[1], [0], [0], [1], [0, 0, 1, 1], [], []>} : vector<256x128xbf16>, vector<128x128xbf16>, vector<256x128xf32> -> vector<256x128xf32>
    %c0_16 = arith.constant 0 : index
    %c0_17 = arith.constant 0 : index
    %26 = vector.load %arg7[%c0_16, %c0_17] : memref<256x128xf32, #tpu.memory_space<vmem>>, vector<256x128xf32>
    tpu.vector_store %arg7[%c0_16, %c0_17], %25 {strides = array<i32>} : memref<256x128xf32, #tpu.memory_space<vmem>>, vector<256x128xf32>,
    return
  }
  func.func @transform_0(%arg0: i32) -> (i32, i32) {
    %c0_i32 = arith.constant 0 : i32
    %c0_i32_0 = arith.constant 0 : i32
    return %arg0, %c0_i32 : i32, i32
  }
  func.func @transform_1(%arg0: i32) -> (i32, i32) {
    %c0_i32 = arith.constant 0 : i32
    %c0_i32_0 = arith.constant 0 : i32
    %c0_i32_1 = arith.constant 0 : i32
    return %c0_i32, %c0_i32_0 : i32, i32
  }
  func.func @transform_2(%arg0: i32) -> (i32, i32) {
    %c0_i32 = arith.constant 0 : i32
    %c0_i32_0 = arith.constant 0 : i32
    %c0_i32_1 = arith.constant 0 : i32
    return %c0_i32, %c0_i32_0 : i32, i32
  }
  func.func @transform_3(%arg0: i32) -> (i32, i32) {
    %c0_i32 = arith.constant 0 : i32
    %c0_i32_0 = arith.constant 0 : i32
    %c0_i32_1 = arith.constant 0 : i32
    return %c0_i32, %c0_i32_0 : i32, i32
  }
  func.func @transform_4(%arg0: i32) -> (i32, i32) {
    %c0_i32 = arith.constant 0 : i32
    %c0_i32_0 = arith.constant 0 : i32
    %c0_i32_1 = arith.constant 0 : i32
    return %c0_i32, %c0_i32_0 : i32, i32
  }
  func.func @transform_5(%arg0: i32) -> (i32, i32) {
    %c0_i32 = arith.constant 0 : i32
    %c0_i32_0 = arith.constant 0 : i32
    %c0_i32_1 = arith.constant 0 : i32
    return %c0_i32, %c0_i32_0 : i32, i32
  }
  func.func @transform_6(%arg0: i32) -> (i32, i32) {
    %c0_i32 = arith.constant 0 : i32
    %c0_i32_0 = arith.constant 0 : i32
    return %arg0, %c0_i32 : i32, i32
  }
}

</mosaic_0001>

<llo_original>
// kernel: tpu_custom_call.1
$region0: #{tpu_custom_call.1}
  #allocation0 [shape = 'u32[]', space=smem, size = 0x4, offset = 0x4, fixed_abs, tag = 'smem constant byte address 0x4 - core index']
  #allocation1 [shape = 'u32[144,128]{1,0:T(1,128)}', space=vmem, size = 0x12000, scoped, tag = 'internal scratch']
  #allocation2 [shape = 'f32[1,1]{1,0:T(1,128)S(6)}', space=smem, size = 0x200, scoped, tag = 'scoped memory for tpu_custom_call.1']
  %s0 = inlined_call_operand.vmem [shape: f32[2,512,16], index: 0, kind: input, shape index: {}]
  %s1 = inlined_call_operand.vmem [shape: f32[2,512,16], index: 1, kind: input, shape index: {}]
  %s2 = inlined_call_operand.vmem [shape: bf16[128,128], index: 2, kind: input, shape index: {}]
  %s3 = inlined_call_operand.vmem [shape: f32[1,128], index: 3, kind: input, shape index: {}]
  %s4 = inlined_call_operand.<no memory space> [shape: f32[1,1], index: 4, kind: input, shape index: {}]
  %s5 = inlined_call_operand.vmem [shape: bf16[128,128], index: 5, kind: input, shape index: {}]
  %s6 = inlined_call_operand.vmem [shape: bf16[128,128], index: 6, kind: input, shape index: {}]
  %s7 = inlined_call_operand.hbm [shape: f32[2,256,128], index: 7, kind: output, shape index: {}]
  %s8 = sld [smem:[#allocation0]]
  $region61: #{tpu_custom_call.1} parent=0
    _
  %s10 = ssub.s32 1, %s8
  %s11 = scalar_select 0, %s10, %s8
  %12 = sst [smem:[#allocation2]] %s4
  $region1: #{tpu_custom_call.1} parent=0
    #allocation3 [shape = 'u8[262144]{0}', space=vmem, size = 0x40000, scoped, tag = 'output window, operand 0']
    #allocation4 [shape = 's32[2]{0}', space=sflag, size = 0x8, scoped, tag = 'scoped memory for tpu_custom_call.1']
    %13 = vsyncpa [#allocation4], 0
    %s14 = scalar_lea.sflag [#allocation4], 1
    %15 = vsyncpa %s14, 0
    loop: start=0, step=1, limit=4
    $region2: #{tpu_custom_call.1} parent=1 // loop_pre_header
      _
    $region3: #{tpu_custom_call.1} parent=1 // loop_header
      %s17 = sphi 0, %s21
      %p18 = scmp.ge.s32.totalorder %s17, 4
      %s24 = sphi 0, %s36
      %s25 = sphi 0, %s32
      %s26 = sphi 0, %s24
      %s27 = sphi 0, %s25
      %s28 = sphi 0, %s26
      %s29 = sphi 0, %s27
      %s41 = sphi 0, %s43
      %s44 = sphi 0, %s41
      %s45 = sphi 0, %s44
      %s61 = sphi 0, %s45
      %s71 = sphi 0, %s73
      %s74 = sphi 0, %s71
      %s75 = sphi 0, %s74
      %s91 = sphi 0, %s75
      %s95 = sphi 0, %s95
      %s97 = sphi 0, %s95
      %s98 = sphi 0, %s97
      %s112 = sphi 0, %s98
      %s116 = sphi 0, %s116
      %s118 = sphi 0, %s116
      %s119 = sphi 0, %s118
      %s133 = sphi 0, %s119
      %s137 = sphi 0, %s137
      %s139 = sphi 0, %s137
      %s140 = sphi 0, %s139
      %s154 = sphi 0, %s140
      %s158 = sphi 0, %s158
      %s160 = sphi 0, %s158
      %s161 = sphi 0, %s160
      %s175 = sphi 0, %s161
      %s179 = sphi 0, %s179
      %s181 = sphi 0, %s179
      %s182 = sphi 0, %s181
      %s196 = sphi 0, %s182
      %s204 = sphi 0, %s206
      %s207 = sphi 0, %s204
      %s208 = sphi 0, %s207
      %s224 = sphi 0, %s208
    $region4: #{tpu_custom_call.1} parent=1 // loop_header_branch
      %20 = sbr.rel (%p18) target = $region8
    $region5: #{tpu_custom_call.1} parent=1 // loop_body
      %s22 = ssub.s32 %s17, 1
      %s23 = ssub.s32 %s17, 2
      %s30 = sadd.s32 1, %s25
      %p31 = scmp.ge.s32.totalorder %s30, 1
      %s32 = scalar_select %p31, 0, %s30
      %s33 = sadd.s32 1, %s24
      %s34 = scalar_select %p31, %s33, %s24
      %p35 = scmp.ge.s32.totalorder %s34, 2
      %s36 = scalar_select %p35, 0, %s34
      %s37 = ssub.s32 %s24, %s36
      %s38 = ssub.s32 %s25, %s32
      %s39 = sor.u32 %s37, %s38
      %p40 = scmp.eq.s32.totalorder %s39, 0
      %s42 = sadd.s32 %s41, 1
      %s43 = scalar_select %p40, %s41, %s42
      %p46 = pneg %p40
      %p47 = scmp.eq.s32.totalorder %s17, 1
      %p48 = por %p46, %p47
      %p49 = scmp.ne.s32.totalorder %s41, %s44
      %p50 = scmp.eq.s32.totalorder %s17, 0
      %p51 = por %p49, %p50
      %p52 = scmp.ne.s32.totalorder %s41, %s44
      %p53 = scmp.eq.s32.totalorder %s22, 1
      %p54 = por %p52, %p53
      %p55 = scmp.ne.s32.totalorder %s44, %s45
      %p56 = scmp.eq.s32.totalorder %s22, 0
      %p57 = por %p55, %p56
      %p58 = scmp.ne.s32.totalorder %s44, %s45
      %p59 = scmp.eq.s32.totalorder %s23, 1
      %p60 = por %p58, %p59
      %p62 = scmp.ne.s32.totalorder %s45, %s61
      %p63 = scmp.eq.s32.totalorder %s23, 0
      %p64 = por %p62, %p63
      %s65 = sadd.s32 %s25, 1
      %s66 = sadd.s32 %s32, 1
      %s67 = ssub.s32 %s24, %s36
      %s68 = ssub.s32 %s65, %s66
      %s69 = sor.u32 %s67, %s68
      %p70 = scmp.eq.s32.totalorder %s69, 0
      %s72 = sadd.s32 %s71, 1
      %s73 = scalar_select %p70, %s71, %s72
      %p76 = pneg %p70
      %p77 = scmp.eq.s32.totalorder %s17, 1
      %p78 = por %p76, %p77
      %p79 = scmp.ne.s32.totalorder %s71, %s74
      %p80 = scmp.eq.s32.totalorder %s17, 0
      %p81 = por %p79, %p80
      %p82 = scmp.ne.s32.totalorder %s71, %s74
      %p83 = scmp.eq.s32.totalorder %s22, 1
      %p84 = por %p82, %p83
      %p85 = scmp.ne.s32.totalorder %s74, %s75
      %p86 = scmp.eq.s32.totalorder %s22, 0
      %p87 = por %p85, %p86
      %p88 = scmp.ne.s32.totalorder %s74, %s75
      %p89 = scmp.eq.s32.totalorder %s23, 1
      %p90 = por %p88, %p89
      %p92 = scmp.ne.s32.totalorder %s75, %s91
      %p93 = scmp.eq.s32.totalorder %s23, 0
      %p94 = por %p92, %p93
      %s96 = sadd.s32 %s95, 1
      %p99 = scmp.eq.s32.totalorder %s17, 1
      %p100 = scmp.ne.s32.totalorder %s95, %s97
      %p101 = scmp.eq.s32.totalorder %s17, 0
      %p102 = por %p100, %p101
      %p103 = scmp.ne.s32.totalorder %s95, %s97
      %p104 = scmp.eq.s32.totalorder %s22, 1
      %p105 = por %p103, %p104
      %p106 = scmp.ne.s32.totalorder %s97, %s98
      %p107 = scmp.eq.s32.totalorder %s22, 0
      %p108 = por %p106, %p107
      %p109 = scmp.ne.s32.totalorder %s97, %s98
      %p110 = scmp.eq.s32.totalorder %s23, 1
      %p111 = por %p109, %p110
      %p113 = scmp.ne.s32.totalorder %s98, %s112
      %p114 = scmp.eq.s32.totalorder %s23, 0
      %p115 = por %p113, %p114
      %s117 = sadd.s32 %s116, 1
      %p120 = scmp.eq.s32.totalorder %s17, 1
      %p121 = scmp.ne.s32.totalorder %s116, %s118
      %p122 = scmp.eq.s32.totalorder %s17, 0
      %p123 = por %p121, %p122
      %p124 = scmp.ne.s32.totalorder %s116, %s118
      %p125 = scmp.eq.s32.totalorder %s22, 1
      %p126 = por %p124, %p125
      %p127 = scmp.ne.s32.totalorder %s118, %s119
      %p128 = scmp.eq.s32.totalorder %s22, 0
      %p129 = por %p127, %p128
      %p130 = scmp.ne.s32.totalorder %s118, %s119
      %p131 = scmp.eq.s32.totalorder %s23, 1
      %p132 = por %p130, %p131
      %p134 = scmp.ne.s32.totalorder %s119, %s133
      %p135 = scmp.eq.s32.totalorder %s23, 0
      %p136 = por %p134, %p135
      %s138 = sadd.s32 %s137, 1
      %p141 = scmp.eq.s32.totalorder %s17, 1
      %p142 = scmp.ne.s32.totalorder %s137, %s139
      %p143 = scmp.eq.s32.totalorder %s17, 0
      %p144 = por %p142, %p143
      %p145 = scmp.ne.s32.totalorder %s137, %s139
      %p146 = scmp.eq.s32.totalorder %s22, 1
      %p147 = por %p145, %p146
      %p148 = scmp.ne.s32.totalorder %s139, %s140
      %p149 = scmp.eq.s32.totalorder %s22, 0
      %p150 = por %p148, %p149
      %p151 = scmp.ne.s32.totalorder %s139, %s140
      %p152 = scmp.eq.s32.totalorder %s23, 1
      %p153 = por %p151, %p152
      %p155 = scmp.ne.s32.totalorder %s140, %s154
      %p156 = scmp.eq.s32.totalorder %s23, 0
      %p157 = por %p155, %p156
      %s159 = sadd.s32 %s158, 1
      %p162 = scmp.eq.s32.totalorder %s17, 1
      %p163 = scmp.ne.s32.totalorder %s158, %s160
      %p164 = scmp.eq.s32.totalorder %s17, 0
      %p165 = por %p163, %p164
      %p166 = scmp.ne.s32.totalorder %s158, %s160
      %p167 = scmp.eq.s32.totalorder %s22, 1
      %p168 = por %p166, %p167
      %p169 = scmp.ne.s32.totalorder %s160, %s161
      %p170 = scmp.eq.s32.totalorder %s22, 0
      %p171 = por %p169, %p170
      %p172 = scmp.ne.s32.totalorder %s160, %s161
      %p173 = scmp.eq.s32.totalorder %s23, 1
      %p174 = por %p172, %p173
      %p176 = scmp.ne.s32.totalorder %s161, %s175
      %p177 = scmp.eq.s32.totalorder %s23, 0
      %p178 = por %p176, %p177
      %s180 = sadd.s32 %s179, 1
      %p183 = scmp.eq.s32.totalorder %s17, 1
      %p184 = scmp.ne.s32.totalorder %s179, %s181
      %p185 = scmp.eq.s32.totalorder %s17, 0
      %p186 = por %p184, %p185
      %p187 = scmp.ne.s32.totalorder %s179, %s181
      %p188 = scmp.eq.s32.totalorder %s22, 1
      %p189 = por %p187, %p188
      %p190 = scmp.ne.s32.totalorder %s181, %s182
      %p191 = scmp.eq.s32.totalorder %s22, 0
      %p192 = por %p190, %p191
      %p193 = scmp.ne.s32.totalorder %s181, %s182
      %p194 = scmp.eq.s32.totalorder %s23, 1
      %p195 = por %p193, %p194
      %p197 = scmp.ne.s32.totalorder %s182, %s196
      %p198 = scmp.eq.s32.totalorder %s23, 0
      %p199 = por %p197, %p198
      %s200 = ssub.s32 %s24, %s36
      %s201 = ssub.s32 %s25, %s32
      %s202 = sor.u32 %s200, %s201
      %p203 = scmp.eq.s32.totalorder %s202, 0
      %s205 = sadd.s32 %s204, 1
      %s206 = scalar_select %p203, %s204, %s205
      %p209 = pneg %p203
      %p210 = scmp.eq.s32.totalorder %s17, 1
      %p211 = por %p209, %p210
      %p212 = scmp.ne.s32.totalorder %s204, %s207
      %p213 = scmp.eq.s32.totalorder %s17, 0
      %p214 = por %p212, %p213
      %p215 = scmp.ne.s32.totalorder %s204, %s207
      %p216 = scmp.eq.s32.totalorder %s22, 1
      %p217 = por %p215, %p216
      %p218 = scmp.ne.s32.totalorder %s207, %s208
      %p219 = scmp.eq.s32.totalorder %s22, 0
      %p220 = por %p218, %p219
      %p221 = scmp.ne.s32.totalorder %s207, %s208
      %p222 = scmp.eq.s32.totalorder %s23, 1
      %p223 = por %p221, %p222
      %p225 = scmp.ne.s32.totalorder %s208, %s224
      %p226 = scmp.eq.s32.totalorder %s23, 0
      %p227 = por %p225, %p226
      %p228 = scmp.le.s32.totalorder 1, %s17
      %p229 = scmp.lt.s32.totalorder %s17, 3
      %p230 = pnand %p228, %p229
      %p231 = pneg %p230
      // Predicated region
      $region9: #{tpu_custom_call.1} parent=5 // pred_check
        _
      $region10: #{tpu_custom_call.1} parent=5 // pred_check_branch
        %233 = sbr.rel (%p230) target = $region12
      $region11: #{tpu_custom_call.1} parent=5 // pred_region
        %s234 = ssub.s32 %s17, 1
        // Predicated region
        $region13: #{tpu_custom_call.1} parent=11 // pred_check
          %p235 = pneg %p108
        $region14: #{tpu_custom_call.1} parent=11 // pred_check_branch
          %237 = sbr.rel (%p235) target = $region16
        $region15: #{tpu_custom_call.1} parent=11 // pred_region
          _
        $region16: #{tpu_custom_call.1} parent=11 // pred_fallthru
          _
        // Predicated region
        $region17: #{tpu_custom_call.1} parent=11 // pred_check
          %p238 = pneg %p129
        $region18: #{tpu_custom_call.1} parent=11 // pred_check_branch
          %240 = sbr.rel (%p238) target = $region20
        $region19: #{tpu_custom_call.1} parent=11 // pred_region
          _
        $region20: #{tpu_custom_call.1} parent=11 // pred_fallthru
          _
        // Predicated region
        $region21: #{tpu_custom_call.1} parent=11 // pred_check
          %p241 = pneg %p150
        $region22: #{tpu_custom_call.1} parent=11 // pred_check_branch
          %243 = sbr.rel (%p241) target = $region24
        $region23: #{tpu_custom_call.1} parent=11 // pred_region
          _
        $region24: #{tpu_custom_call.1} parent=11 // pred_fallthru
          _
        // Predicated region
        $region25: #{tpu_custom_call.1} parent=11 // pred_check
          %p244 = pneg %p171
        $region26: #{tpu_custom_call.1} parent=11 // pred_check_branch
          %246 = sbr.rel (%p244) target = $region28
        $region27: #{tpu_custom_call.1} parent=11 // pred_region
          _
        $region28: #{tpu_custom_call.1} parent=11 // pred_fallthru
          _
        // Predicated region
        $region29: #{tpu_custom_call.1} parent=11 // pred_check
          %p247 = pneg %p192
        $region30: #{tpu_custom_call.1} parent=11 // pred_check_branch
          %249 = sbr.rel (%p247) target = $region32
        $region31: #{tpu_custom_call.1} parent=11 // pred_region
          _
        $region32: #{tpu_custom_call.1} parent=11 // pred_fallthru
          _
      $region12: #{tpu_custom_call.1} parent=5 // pred_fallthru
        _
      %p250 = scmp.lt.s32.totalorder %s17, 2
      // Predicated region
      $region33: #{tpu_custom_call.1} parent=5 // pred_check
        %p251 = pneg %p250
      $region34: #{tpu_custom_call.1} parent=5 // pred_check_branch
        %253 = sbr.rel (%p251) target = $region36
      $region35: #{tpu_custom_call.1} parent=5 // pred_region
        // Predicated region
        $region37: #{tpu_custom_call.1} parent=35 // pred_check
          %p254 = pneg %p51
        $region38: #{tpu_custom_call.1} parent=35 // pred_check_branch
          %256 = sbr.rel (%p254) target = $region40
        $region39: #{tpu_custom_call.1} parent=35 // pred_region
          %s257 = smul.u32 32, %s25
          %p258 = scmp.lt.s32.totalorder %s24, 1
          %s259 = scalar_select %p258, %s24, 1
          %p260 = scmp.lt.s32.totalorder %s257, 63
          %s261 = scalar_select %p260, %s257, 63
          %s262 = smul.addr %s259, 64
          %s263 = sadd.s32 %s261, %s262
          %s264 = smul.addr %s263, 8
          %s265 = scalar_lea.vmem %s0, %s264
          %s266 = smul.u32 32, %s25
        $region40: #{tpu_custom_call.1} parent=35 // pred_fallthru
          _
        // Predicated region
        $region41: #{tpu_custom_call.1} parent=35 // pred_check
          %p267 = pneg %p81
        $region42: #{tpu_custom_call.1} parent=35 // pred_check_branch
          %269 = sbr.rel (%p267) target = $region44
        $region43: #{tpu_custom_call.1} parent=35 // pred_region
          %s270 = sadd.s32 %s25, 1
          %s271 = smul.u32 32, %s270
          %p272 = scmp.lt.s32.totalorder %s24, 1
          %s273 = scalar_select %p272, %s24, 1
          %p274 = scmp.lt.s32.totalorder %s271, 63
          %s275 = scalar_select %p274, %s271, 63
          %s276 = smul.addr %s273, 64
          %s277 = sadd.s32 %s275, %s276
          %s278 = smul.addr %s277, 8
          %s279 = scalar_lea.vmem %s1, %s278
          %s280 = sadd.s32 %s25, 1
          %s281 = smul.u32 32, %s280
        $region44: #{tpu_custom_call.1} parent=35 // pred_fallthru
          _
      $region36: #{tpu_custom_call.1} parent=5 // pred_fallthru
        _
      %p282 = scmp.le.s32.totalorder 1, %s17
      %p283 = scmp.lt.s32.totalorder %s17, 3
      %p284 = pnand %p282, %p283
      %p285 = pneg %p284
      // Predicated region
      $region45: #{tpu_custom_call.1} parent=5 // pred_check
        _
      $region46: #{tpu_custom_call.1} parent=5 // pred_check_branch
        %287 = sbr.rel (%p284) target = $region48
      $region47: #{tpu_custom_call.1} parent=5 // pred_region
        %s288 = ssub.s32 %s17, 1
        %s289 = smul.u32 32, %s27
        %p290 = scmp.lt.s32.totalorder %s26, 1
        %s291 = scalar_select %p290, %s26, 1
        %p292 = scmp.lt.s32.totalorder %s289, 63
        %s293 = scalar_select %p292, %s289, 63
        %s294 = smul.addr %s291, 64
        %s295 = sadd.s32 %s293, %s294
        %s296 = smul.addr %s295, 8
        %s297 = scalar_lea.vmem %s0, %s296
        %p298 = pneg %p57
        %p299 = pneg %p54
        %s300 = sadd.s32 %s27, 1
        %s301 = smul.u32 32, %s300
        %p302 = scmp.lt.s32.totalorder %s26, 1
        %s303 = scalar_select %p302, %s26, 1
        %p304 = scmp.lt.s32.totalorder %s301, 63
        %s305 = scalar_select %p304, %s301, 63
        %s306 = smul.addr %s303, 64
        %s307 = sadd.s32 %s305, %s306
        %s308 = smul.addr %s307, 8
        %s309 = scalar_lea.vmem %s1, %s308
        %p310 = pneg %p87
        %p311 = pneg %p84
        %p312 = pneg %p108
        %p313 = pneg %p105
        %p314 = pneg %p129
        %p315 = pneg %p126
        %p316 = pneg %p150
        %p317 = pneg %p147
        %p318 = pneg %p171
        %p319 = pneg %p168
        %p320 = pneg %p192
        %p321 = pneg %p189
        %p322 = pneg %p220
        %p323 = pneg %p217
        %s324 = sand.u32 %s207, 1
        %s325 = scalar_lea.sflag [#allocation4], %s324
        %s326 = sand.u32 %s207, 1
        %s327 = smul.addr %s326, 256
        %s328 = scalar_lea.vmem [#allocation3], %s327
        %s329 = smul.u32 32, %s27
        %p330 = scmp.lt.s32.totalorder %s26, 1
        %s331 = scalar_select %p330, %s26, 1
        %p332 = scmp.lt.s32.totalorder %s329, 63
        %s333 = scalar_select %p332, %s329, 63
        %s334 = smul.addr %s331, 64
        %s335 = sadd.s32 %s333, %s334
        %s336 = smul.addr %s335, 8
        %s337 = scalar_lea.vmem %s0, %s336
        %s338 = smul.u32 32, %s27
        %s339 = sadd.s32 %s27, 1
        %s340 = smul.u32 32, %s339
        %p341 = scmp.lt.s32.totalorder %s26, 1
        %s342 = scalar_select %p341, %s26, 1
        %p343 = scmp.lt.s32.totalorder %s340, 63
        %s344 = scalar_select %p343, %s340, 63
        %s345 = smul.addr %s342, 64
        %s346 = sadd.s32 %s344, %s345
        %s347 = smul.addr %s346, 8
        %s348 = scalar_lea.vmem %s1, %s347
        %s349 = sadd.s32 %s27, 1
        %s350 = smul.u32 32, %s349
        %s351 = smul.u32 32, %s27
        %v353 = vld [vmem:[%s337] sm:$0xff]
        %v354 = vld [vmem:[%s337 + $0x8] sm:$0xff]
        %v355 = vld [vmem:[%s337 + $0x10] sm:$0xff]
        %v356 = vld [vmem:[%s337 + $0x18] sm:$0xff]
        %v357 = vld [vmem:[%s337 + $0x20] sm:$0xff]
        %v358 = vld [vmem:[%s337 + $0x28] sm:$0xff]
        %v359 = vld [vmem:[%s337 + $0x30] sm:$0xff]
        %v360 = vld [vmem:[%s337 + $0x38] sm:$0xff]
        %v361 = vld [vmem:[%s337 + $0x40] sm:$0xff]
        %v362 = vld [vmem:[%s337 + $0x48] sm:$0xff]
        %v363 = vld [vmem:[%s337 + $0x50] sm:$0xff]
        %v364 = vld [vmem:[%s337 + $0x58] sm:$0xff]
        %v365 = vld [vmem:[%s337 + $0x60] sm:$0xff]
        %v366 = vld [vmem:[%s337 + $0x68] sm:$0xff]
        %v367 = vld [vmem:[%s337 + $0x70] sm:$0xff]
        %v368 = vld [vmem:[%s337 + $0x78] sm:$0xff]
        %v369 = vld [vmem:[%s337 + $0x80] sm:$0xff]
        %v370 = vld [vmem:[%s337 + $0x88] sm:$0xff]
        %v371 = vld [vmem:[%s337 + $0x90] sm:$0xff]
        %v372 = vld [vmem:[%s337 + $0x98] sm:$0xff]
        %v373 = vld [vmem:[%s337 + $0xa0] sm:$0xff]
        %v374 = vld [vmem:[%s337 + $0xa8] sm:$0xff]
        %v375 = vld [vmem:[%s337 + $0xb0] sm:$0xff]
        %v376 = vld [vmem:[%s337 + $0xb8] sm:$0xff]
        %v377 = vld [vmem:[%s337 + $0xc0] sm:$0xff]
        %v378 = vld [vmem:[%s337 + $0xc8] sm:$0xff]
        %v379 = vld [vmem:[%s337 + $0xd0] sm:$0xff]
        %v380 = vld [vmem:[%s337 + $0xd8] sm:$0xff]
        %v381 = vld [vmem:[%s337 + $0xe0] sm:$0xff]
        %v382 = vld [vmem:[%s337 + $0xe8] sm:$0xff]
        %v383 = vld [vmem:[%s337 + $0xf0] sm:$0xff]
        %v384 = vld [vmem:[%s337 + $0xf8] sm:$0xff]
        %v385 = vld [vmem:[%s348] sm:$0xff]
        %vm419 = vcmask 1046528
        %v420 = vrot.slane %v353, 1
        %v421 = vrot.slane %v354, 1
        %v422 = vsel %vm419, %v420, %v421
        %v423 = vrot.slane %v355, 1
        %v424 = vsel %vm419, %v421, %v423
        %v425 = vrot.slane %v356, 1
        %v426 = vsel %vm419, %v423, %v425
        %v427 = vrot.slane %v357, 1
        %v428 = vsel %vm419, %v425, %v427
        %v429 = vrot.slane %v358, 1
        %v430 = vsel %vm419, %v427, %v429
        %v431 = vrot.slane %v359, 1
        %v432 = vsel %vm419, %v429, %v431
        %v433 = vrot.slane %v360, 1
        %v434 = vsel %vm419, %v431, %v433
        %v435 = vrot.slane %v361, 1
        %v436 = vsel %vm419, %v433, %v435
        %v437 = vrot.slane %v362, 1
        %v438 = vsel %vm419, %v435, %v437
        %v439 = vrot.slane %v363, 1
        %v440 = vsel %vm419, %v437, %v439
        %v441 = vrot.slane %v364, 1
        %v442 = vsel %vm419, %v439, %v441
        %v443 = vrot.slane %v365, 1
        %v444 = vsel %vm419, %v441, %v443
        %v445 = vrot.slane %v366, 1
        %v446 = vsel %vm419, %v443, %v445
        %v447 = vrot.slane %v367, 1
        %v448 = vsel %vm419, %v445, %v447
        %v449 = vrot.slane %v368, 1
        %v450 = vsel %vm419, %v447, %v449
        %v451 = vrot.slane %v369, 1
        %v452 = vsel %vm419, %v449, %v451
        %v453 = vrot.slane %v370, 1
        %v454 = vsel %vm419, %v451, %v453
        %v455 = vrot.slane %v371, 1
        %v456 = vsel %vm419, %v453, %v455
        %v457 = vrot.slane %v372, 1
        %v458 = vsel %vm419, %v455, %v457
        %v459 = vrot.slane %v373, 1
        %v460 = vsel %vm419, %v457, %v459
        %v461 = vrot.slane %v374, 1
        %v462 = vsel %vm419, %v459, %v461
        %v463 = vrot.slane %v375, 1
        %v464 = vsel %vm419, %v461, %v463
        %v465 = vrot.slane %v376, 1
        %v466 = vsel %vm419, %v463, %v465
        %v467 = vrot.slane %v377, 1
        %v468 = vsel %vm419, %v465, %v467
        %v469 = vrot.slane %v378, 1
        %v470 = vsel %vm419, %v467, %v469
        %v471 = vrot.slane %v379, 1
        %v472 = vsel %vm419, %v469, %v471
        %v473 = vrot.slane %v380, 1
        %v474 = vsel %vm419, %v471, %v473
        %v475 = vrot.slane %v381, 1
        %v476 = vsel %vm419, %v473, %v475
        %v477 = vrot.slane %v382, 1
        %v478 = vsel %vm419, %v475, %v477
        %v479 = vrot.slane %v383, 1
        %v480 = vsel %vm419, %v477, %v479
        %v481 = vrot.slane %v384, 1
        %v482 = vsel %vm419, %v479, %v481
        %v483 = vrot.slane %v385, 1
        %v484 = vsel %vm419, %v481, %v483
        %485 = vrot.lane.b32.xlu0 %v422, 16
        %v486 = vpop.permute.xlu0 %485
        %487 = vrot.lane.b32.xlu0 %v424, 16
        %v488 = vpop.permute.xlu0 %487
        %489 = vrot.lane.b32.xlu0 %v426, 16
        %v490 = vpop.permute.xlu0 %489
        %491 = vrot.lane.b32.xlu0 %v428, 16
        %v492 = vpop.permute.xlu0 %491
        %493 = vrot.lane.b32.xlu0 %v430, 16
        %v494 = vpop.permute.xlu0 %493
        %495 = vrot.lane.b32.xlu0 %v432, 16
        %v496 = vpop.permute.xlu0 %495
        %497 = vrot.lane.b32.xlu0 %v434, 16
        %v498 = vpop.permute.xlu0 %497
        %499 = vrot.lane.b32.xlu0 %v436, 16
        %v500 = vpop.permute.xlu0 %499
        %501 = vrot.lane.b32.xlu0 %v438, 16
        %v502 = vpop.permute.xlu0 %501
        %503 = vrot.lane.b32.xlu0 %v440, 16
        %v504 = vpop.permute.xlu0 %503
        %505 = vrot.lane.b32.xlu0 %v442, 16
        %v506 = vpop.permute.xlu0 %505
        %507 = vrot.lane.b32.xlu0 %v444, 16
        %v508 = vpop.permute.xlu0 %507
        %509 = vrot.lane.b32.xlu0 %v446, 16
        %v510 = vpop.permute.xlu0 %509
        %511 = vrot.lane.b32.xlu0 %v448, 16
        %v512 = vpop.permute.xlu0 %511
        %513 = vrot.lane.b32.xlu0 %v450, 16
        %v514 = vpop.permute.xlu0 %513
        %515 = vrot.lane.b32.xlu0 %v452, 16
        %v516 = vpop.permute.xlu0 %515
        %517 = vrot.lane.b32.xlu0 %v454, 16
        %v518 = vpop.permute.xlu0 %517
        %519 = vrot.lane.b32.xlu0 %v456, 16
        %v520 = vpop.permute.xlu0 %519
        %521 = vrot.lane.b32.xlu0 %v458, 16
        %v522 = vpop.permute.xlu0 %521
        %523 = vrot.lane.b32.xlu0 %v460, 16
        %v524 = vpop.permute.xlu0 %523
        %525 = vrot.lane.b32.xlu0 %v462, 16
        %v526 = vpop.permute.xlu0 %525
        %527 = vrot.lane.b32.xlu0 %v464, 16
        %v528 = vpop.permute.xlu0 %527
        %529 = vrot.lane.b32.xlu0 %v466, 16
        %v530 = vpop.permute.xlu0 %529
        %531 = vrot.lane.b32.xlu0 %v468, 16
        %v532 = vpop.permute.xlu0 %531
        %533 = vrot.lane.b32.xlu0 %v470, 16
        %v534 = vpop.permute.xlu0 %533
        %535 = vrot.lane.b32.xlu0 %v472, 16
        %v536 = vpop.permute.xlu0 %535
        %537 = vrot.lane.b32.xlu0 %v474, 16
        %v538 = vpop.permute.xlu0 %537
        %539 = vrot.lane.b32.xlu0 %v476, 16
        %v540 = vpop.permute.xlu0 %539
        %541 = vrot.lane.b32.xlu0 %v478, 16
        %v542 = vpop.permute.xlu0 %541
        %543 = vrot.lane.b32.xlu0 %v480, 16
        %v544 = vpop.permute.xlu0 %543
        %545 = vrot.lane.b32.xlu0 %v482, 16
        %v546 = vpop.permute.xlu0 %545
        %547 = vrot.lane.b32.xlu0 %v484, 16
        %v548 = vpop.permute.xlu0 %547
        %vm581 = vcmask 1045504
        %v582 = vrot.slane %v353, 2
        %v583 = vrot.slane %v354, 2
        %v584 = vsel %vm581, %v582, %v583
        %v585 = vrot.slane %v355, 2
        %v586 = vsel %vm581, %v583, %v585
        %v587 = vrot.slane %v356, 2
        %v588 = vsel %vm581, %v585, %v587
        %v589 = vrot.slane %v357, 2
        %v590 = vsel %vm581, %v587, %v589
        %v591 = vrot.slane %v358, 2
        %v592 = vsel %vm581, %v589, %v591
        %v593 = vrot.slane %v359, 2
        %v594 = vsel %vm581, %v591, %v593
        %v595 = vrot.slane %v360, 2
        %v596 = vsel %vm581, %v593, %v595
        %v597 = vrot.slane %v361, 2
        %v598 = vsel %vm581, %v595, %v597
        %v599 = vrot.slane %v362, 2
        %v600 = vsel %vm581, %v597, %v599
        %v601 = vrot.slane %v363, 2
        %v602 = vsel %vm581, %v599, %v601
        %v603 = vrot.slane %v364, 2
        %v604 = vsel %vm581, %v601, %v603
        %v605 = vrot.slane %v365, 2
        %v606 = vsel %vm581, %v603, %v605
        %v607 = vrot.slane %v366, 2
        %v608 = vsel %vm581, %v605, %v607
        %v609 = vrot.slane %v367, 2
        %v610 = vsel %vm581, %v607, %v609
        %v611 = vrot.slane %v368, 2
        %v612 = vsel %vm581, %v609, %v611
        %v613 = vrot.slane %v369, 2
        %v614 = vsel %vm581, %v611, %v613
        %v615 = vrot.slane %v370, 2
        %v616 = vsel %vm581, %v613, %v615
        %v617 = vrot.slane %v371, 2
        %v618 = vsel %vm581, %v615, %v617
        %v619 = vrot.slane %v372, 2
        %v620 = vsel %vm581, %v617, %v619
        %v621 = vrot.slane %v373, 2
        %v622 = vsel %vm581, %v619, %v621
        %v623 = vrot.slane %v374, 2
        %v624 = vsel %vm581, %v621, %v623
        %v625 = vrot.slane %v375, 2
        %v626 = vsel %vm581, %v623, %v625
        %v627 = vrot.slane %v376, 2
        %v628 = vsel %vm581, %v625, %v627
        %v629 = vrot.slane %v377, 2
        %v630 = vsel %vm581, %v627, %v629
        %v631 = vrot.slane %v378, 2
        %v632 = vsel %vm581, %v629, %v631
        %v633 = vrot.slane %v379, 2
        %v634 = vsel %vm581, %v631, %v633
        %v635 = vrot.slane %v380, 2
        %v636 = vsel %vm581, %v633, %v635
        %v637 = vrot.slane %v381, 2
        %v638 = vsel %vm581, %v635, %v637
        %v639 = vrot.slane %v382, 2
        %v640 = vsel %vm581, %v637, %v639
        %v641 = vrot.slane %v383, 2
        %v642 = vsel %vm581, %v639, %v641
        %v643 = vrot.slane %v384, 2
        %v644 = vsel %vm581, %v641, %v643
        %v645 = vrot.slane %v385, 2
        %v646 = vsel %vm581, %v643, %v645
        %647 = vrot.lane.b32.xlu0 %v584, 32
        %v648 = vpop.permute.xlu0 %647
        %649 = vrot.lane.b32.xlu0 %v586, 32
        %v650 = vpop.permute.xlu0 %649
        %651 = vrot.lane.b32.xlu0 %v588, 32
        %v652 = vpop.permute.xlu0 %651
        %653 = vrot.lane.b32.xlu0 %v590, 32
        %v654 = vpop.permute.xlu0 %653
        %655 = vrot.lane.b32.xlu0 %v592, 32
        %v656 = vpop.permute.xlu0 %655
        %657 = vrot.lane.b32.xlu0 %v594, 32
        %v658 = vpop.permute.xlu0 %657
        %659 = vrot.lane.b32.xlu0 %v596, 32
        %v660 = vpop.permute.xlu0 %659
        %661 = vrot.lane.b32.xlu0 %v598, 32
        %v662 = vpop.permute.xlu0 %661
        %663 = vrot.lane.b32.xlu0 %v600, 32
        %v664 = vpop.permute.xlu0 %663
        %665 = vrot.lane.b32.xlu0 %v602, 32
        %v666 = vpop.permute.xlu0 %665
        %667 = vrot.lane.b32.xlu0 %v604, 32
        %v668 = vpop.permute.xlu0 %667
        %669 = vrot.lane.b32.xlu0 %v606, 32
        %v670 = vpop.permute.xlu0 %669
        %671 = vrot.lane.b32.xlu0 %v608, 32
        %v672 = vpop.permute.xlu0 %671
        %673 = vrot.lane.b32.xlu0 %v610, 32
        %v674 = vpop.permute.xlu0 %673
        %675 = vrot.lane.b32.xlu0 %v612, 32
        %v676 = vpop.permute.xlu0 %675
        %677 = vrot.lane.b32.xlu0 %v614, 32
        %v678 = vpop.permute.xlu0 %677
        %679 = vrot.lane.b32.xlu0 %v616, 32
        %v680 = vpop.permute.xlu0 %679
        %681 = vrot.lane.b32.xlu0 %v618, 32
        %v682 = vpop.permute.xlu0 %681
        %683 = vrot.lane.b32.xlu0 %v620, 32
        %v684 = vpop.permute.xlu0 %683
        %685 = vrot.lane.b32.xlu0 %v622, 32
        %v686 = vpop.permute.xlu0 %685
        %687 = vrot.lane.b32.xlu0 %v624, 32
        %v688 = vpop.permute.xlu0 %687
        %689 = vrot.lane.b32.xlu0 %v626, 32
        %v690 = vpop.permute.xlu0 %689
        %691 = vrot.lane.b32.xlu0 %v628, 32
        %v692 = vpop.permute.xlu0 %691
        %693 = vrot.lane.b32.xlu0 %v630, 32
        %v694 = vpop.permute.xlu0 %693
        %695 = vrot.lane.b32.xlu0 %v632, 32
        %v696 = vpop.permute.xlu0 %695
        %697 = vrot.lane.b32.xlu0 %v634, 32
        %v698 = vpop.permute.xlu0 %697
        %699 = vrot.lane.b32.xlu0 %v636, 32
        %v700 = vpop.permute.xlu0 %699
        %701 = vrot.lane.b32.xlu0 %v638, 32
        %v702 = vpop.permute.xlu0 %701
        %703 = vrot.lane.b32.xlu0 %v640, 32
        %v704 = vpop.permute.xlu0 %703
        %705 = vrot.lane.b32.xlu0 %v642, 32
        %v706 = vpop.permute.xlu0 %705
        %707 = vrot.lane.b32.xlu0 %v644, 32
        %v708 = vpop.permute.xlu0 %707
        %709 = vrot.lane.b32.xlu0 %v646, 32
        %v710 = vpop.permute.xlu0 %709
        %vm743 = vcmask 1044480
        %v744 = vrot.slane %v353, 3
        %v745 = vrot.slane %v354, 3
        %v746 = vsel %vm743, %v744, %v745
        %v747 = vrot.slane %v355, 3
        %v748 = vsel %vm743, %v745, %v747
        %v749 = vrot.slane %v356, 3
        %v750 = vsel %vm743, %v747, %v749
        %v751 = vrot.slane %v357, 3
        %v752 = vsel %vm743, %v749, %v751
        %v753 = vrot.slane %v358, 3
        %v754 = vsel %vm743, %v751, %v753
        %v755 = vrot.slane %v359, 3
        %v756 = vsel %vm743, %v753, %v755
        %v757 = vrot.slane %v360, 3
        %v758 = vsel %vm743, %v755, %v757
        %v759 = vrot.slane %v361, 3
        %v760 = vsel %vm743, %v757, %v759
        %v761 = vrot.slane %v362, 3
        %v762 = vsel %vm743, %v759, %v761
        %v763 = vrot.slane %v363, 3
        %v764 = vsel %vm743, %v761, %v763
        %v765 = vrot.slane %v364, 3
        %v766 = vsel %vm743, %v763, %v765
        %v767 = vrot.slane %v365, 3
        %v768 = vsel %vm743, %v765, %v767
        %v769 = vrot.slane %v366, 3
        %v770 = vsel %vm743, %v767, %v769
        %v771 = vrot.slane %v367, 3
        %v772 = vsel %vm743, %v769, %v771
        %v773 = vrot.slane %v368, 3
        %v774 = vsel %vm743, %v771, %v773
        %v775 = vrot.slane %v369, 3
        %v776 = vsel %vm743, %v773, %v775
        %v777 = vrot.slane %v370, 3
        %v778 = vsel %vm743, %v775, %v777
        %v779 = vrot.slane %v371, 3
        %v780 = vsel %vm743, %v777, %v779
        %v781 = vrot.slane %v372, 3
        %v782 = vsel %vm743, %v779, %v781
        %v783 = vrot.slane %v373, 3
        %v784 = vsel %vm743, %v781, %v783
        %v785 = vrot.slane %v374, 3
        %v786 = vsel %vm743, %v783, %v785
        %v787 = vrot.slane %v375, 3
        %v788 = vsel %vm743, %v785, %v787
        %v789 = vrot.slane %v376, 3
        %v790 = vsel %vm743, %v787, %v789
        %v791 = vrot.slane %v377, 3
        %v792 = vsel %vm743, %v789, %v791
        %v793 = vrot.slane %v378, 3
        %v794 = vsel %vm743, %v791, %v793
        %v795 = vrot.slane %v379, 3
        %v796 = vsel %vm743, %v793, %v795
        %v797 = vrot.slane %v380, 3
        %v798 = vsel %vm743, %v795, %v797
        %v799 = vrot.slane %v381, 3
        %v800 = vsel %vm743, %v797, %v799
        %v801 = vrot.slane %v382, 3
        %v802 = vsel %vm743, %v799, %v801
        %v803 = vrot.slane %v383, 3
        %v804 = vsel %vm743, %v801, %v803
        %v805 = vrot.slane %v384, 3
        %v806 = vsel %vm743, %v803, %v805
        %v807 = vrot.slane %v385, 3
        %v808 = vsel %vm743, %v805, %v807
        %809 = vrot.lane.b32.xlu0 %v746, 48
        %v810 = vpop.permute.xlu0 %809
        %811 = vrot.lane.b32.xlu0 %v748, 48
        %v812 = vpop.permute.xlu0 %811
        %813 = vrot.lane.b32.xlu0 %v750, 48
        %v814 = vpop.permute.xlu0 %813
        %815 = vrot.lane.b32.xlu0 %v752, 48
        %v816 = vpop.permute.xlu0 %815
        %817 = vrot.lane.b32.xlu0 %v754, 48
        %v818 = vpop.permute.xlu0 %817
        %819 = vrot.lane.b32.xlu0 %v756, 48
        %v820 = vpop.permute.xlu0 %819
        %821 = vrot.lane.b32.xlu0 %v758, 48
        %v822 = vpop.permute.xlu0 %821
        %823 = vrot.lane.b32.xlu0 %v760, 48
        %v824 = vpop.permute.xlu0 %823
        %825 = vrot.lane.b32.xlu0 %v762, 48
        %v826 = vpop.permute.xlu0 %825
        %827 = vrot.lane.b32.xlu0 %v764, 48
        %v828 = vpop.permute.xlu0 %827
        %829 = vrot.lane.b32.xlu0 %v766, 48
        %v830 = vpop.permute.xlu0 %829
        %831 = vrot.lane.b32.xlu0 %v768, 48
        %v832 = vpop.permute.xlu0 %831
        %833 = vrot.lane.b32.xlu0 %v770, 48
        %v834 = vpop.permute.xlu0 %833
        %835 = vrot.lane.b32.xlu0 %v772, 48
        %v836 = vpop.permute.xlu0 %835
        %837 = vrot.lane.b32.xlu0 %v774, 48
        %v838 = vpop.permute.xlu0 %837
        %839 = vrot.lane.b32.xlu0 %v776, 48
        %v840 = vpop.permute.xlu0 %839
        %841 = vrot.lane.b32.xlu0 %v778, 48
        %v842 = vpop.permute.xlu0 %841
        %843 = vrot.lane.b32.xlu0 %v780, 48
        %v844 = vpop.permute.xlu0 %843
        %845 = vrot.lane.b32.xlu0 %v782, 48
        %v846 = vpop.permute.xlu0 %845
        %847 = vrot.lane.b32.xlu0 %v784, 48
        %v848 = vpop.permute.xlu0 %847
        %849 = vrot.lane.b32.xlu0 %v786, 48
        %v850 = vpop.permute.xlu0 %849
        %851 = vrot.lane.b32.xlu0 %v788, 48
        %v852 = vpop.permute.xlu0 %851
        %853 = vrot.lane.b32.xlu0 %v790, 48
        %v854 = vpop.permute.xlu0 %853
        %855 = vrot.lane.b32.xlu0 %v792, 48
        %v856 = vpop.permute.xlu0 %855
        %857 = vrot.lane.b32.xlu0 %v794, 48
        %v858 = vpop.permute.xlu0 %857
        %859 = vrot.lane.b32.xlu0 %v796, 48
        %v860 = vpop.permute.xlu0 %859
        %861 = vrot.lane.b32.xlu0 %v798, 48
        %v862 = vpop.permute.xlu0 %861
        %863 = vrot.lane.b32.xlu0 %v800, 48
        %v864 = vpop.permute.xlu0 %863
        %865 = vrot.lane.b32.xlu0 %v802, 48
        %v866 = vpop.permute.xlu0 %865
        %867 = vrot.lane.b32.xlu0 %v804, 48
        %v868 = vpop.permute.xlu0 %867
        %869 = vrot.lane.b32.xlu0 %v806, 48
        %v870 = vpop.permute.xlu0 %869
        %871 = vrot.lane.b32.xlu0 %v808, 48
        %v872 = vpop.permute.xlu0 %871
        %vm905 = vcmask 1043456
        %v906 = vrot.slane %v353, 4
        %v907 = vrot.slane %v354, 4
        %v908 = vsel %vm905, %v906, %v907
        %v909 = vrot.slane %v355, 4
        %v910 = vsel %vm905, %v907, %v909
        %v911 = vrot.slane %v356, 4
        %v912 = vsel %vm905, %v909, %v911
        %v913 = vrot.slane %v357, 4
        %v914 = vsel %vm905, %v911, %v913
        %v915 = vrot.slane %v358, 4
        %v916 = vsel %vm905, %v913, %v915
        %v917 = vrot.slane %v359, 4
        %v918 = vsel %vm905, %v915, %v917
        %v919 = vrot.slane %v360, 4
        %v920 = vsel %vm905, %v917, %v919
        %v921 = vrot.slane %v361, 4
        %v922 = vsel %vm905, %v919, %v921
        %v923 = vrot.slane %v362, 4
        %v924 = vsel %vm905, %v921, %v923
        %v925 = vrot.slane %v363, 4
        %v926 = vsel %vm905, %v923, %v925
        %v927 = vrot.slane %v364, 4
        %v928 = vsel %vm905, %v925, %v927
        %v929 = vrot.slane %v365, 4
        %v930 = vsel %vm905, %v927, %v929
        %v931 = vrot.slane %v366, 4
        %v932 = vsel %vm905, %v929, %v931
        %v933 = vrot.slane %v367, 4
        %v934 = vsel %vm905, %v931, %v933
        %v935 = vrot.slane %v368, 4
        %v936 = vsel %vm905, %v933, %v935
        %v937 = vrot.slane %v369, 4
        %v938 = vsel %vm905, %v935, %v937
        %v939 = vrot.slane %v370, 4
        %v940 = vsel %vm905, %v937, %v939
        %v941 = vrot.slane %v371, 4
        %v942 = vsel %vm905, %v939, %v941
        %v943 = vrot.slane %v372, 4
        %v944 = vsel %vm905, %v941, %v943
        %v945 = vrot.slane %v373, 4
        %v946 = vsel %vm905, %v943, %v945
        %v947 = vrot.slane %v374, 4
        %v948 = vsel %vm905, %v945, %v947
        %v949 = vrot.slane %v375, 4
        %v950 = vsel %vm905, %v947, %v949
        %v951 = vrot.slane %v376, 4
        %v952 = vsel %vm905, %v949, %v951
        %v953 = vrot.slane %v377, 4
        %v954 = vsel %vm905, %v951, %v953
        %v955 = vrot.slane %v378, 4
        %v956 = vsel %vm905, %v953, %v955
        %v957 = vrot.slane %v379, 4
        %v958 = vsel %vm905, %v955, %v957
        %v959 = vrot.slane %v380, 4
        %v960 = vsel %vm905, %v957, %v959
        %v961 = vrot.slane %v381, 4
        %v962 = vsel %vm905, %v959, %v961
        %v963 = vrot.slane %v382, 4
        %v964 = vsel %vm905, %v961, %v963
        %v965 = vrot.slane %v383, 4
        %v966 = vsel %vm905, %v963, %v965
        %v967 = vrot.slane %v384, 4
        %v968 = vsel %vm905, %v965, %v967
        %v969 = vrot.slane %v385, 4
        %v970 = vsel %vm905, %v967, %v969
        %971 = vrot.lane.b32.xlu0 %v908, 64
        %v972 = vpop.permute.xlu0 %971
        %973 = vrot.lane.b32.xlu0 %v910, 64
        %v974 = vpop.permute.xlu0 %973
        %975 = vrot.lane.b32.xlu0 %v912, 64
        %v976 = vpop.permute.xlu0 %975
        %977 = vrot.lane.b32.xlu0 %v914, 64
        %v978 = vpop.permute.xlu0 %977
        %979 = vrot.lane.b32.xlu0 %v916, 64
        %v980 = vpop.permute.xlu0 %979
        %981 = vrot.lane.b32.xlu0 %v918, 64
        %v982 = vpop.permute.xlu0 %981
        %983 = vrot.lane.b32.xlu0 %v920, 64
        %v984 = vpop.permute.xlu0 %983
        %985 = vrot.lane.b32.xlu0 %v922, 64
        %v986 = vpop.permute.xlu0 %985
        %987 = vrot.lane.b32.xlu0 %v924, 64
        %v988 = vpop.permute.xlu0 %987
        %989 = vrot.lane.b32.xlu0 %v926, 64
        %v990 = vpop.permute.xlu0 %989
        %991 = vrot.lane.b32.xlu0 %v928, 64
        %v992 = vpop.permute.xlu0 %991
        %993 = vrot.lane.b32.xlu0 %v930, 64
        %v994 = vpop.permute.xlu0 %993
        %995 = vrot.lane.b32.xlu0 %v932, 64
        %v996 = vpop.permute.xlu0 %995
        %997 = vrot.lane.b32.xlu0 %v934, 64
        %v998 = vpop.permute.xlu0 %997
        %999 = vrot.lane.b32.xlu0 %v936, 64
        %v1000 = vpop.permute.xlu0 %999
        %1001 = vrot.lane.b32.xlu0 %v938, 64
        %v1002 = vpop.permute.xlu0 %1001
        %1003 = vrot.lane.b32.xlu0 %v940, 64
        %v1004 = vpop.permute.xlu0 %1003
        %1005 = vrot.lane.b32.xlu0 %v942, 64
        %v1006 = vpop.permute.xlu0 %1005
        %1007 = vrot.lane.b32.xlu0 %v944, 64
        %v1008 = vpop.permute.xlu0 %1007
        %1009 = vrot.lane.b32.xlu0 %v946, 64
        %v1010 = vpop.permute.xlu0 %1009
        %1011 = vrot.lane.b32.xlu0 %v948, 64
        %v1012 = vpop.permute.xlu0 %1011
        %1013 = vrot.lane.b32.xlu0 %v950, 64
        %v1014 = vpop.permute.xlu0 %1013
        %1015 = vrot.lane.b32.xlu0 %v952, 64
        %v1016 = vpop.permute.xlu0 %1015
        %1017 = vrot.lane.b32.xlu0 %v954, 64
        %v1018 = vpop.permute.xlu0 %1017
        %1019 = vrot.lane.b32.xlu0 %v956, 64
        %v1020 = vpop.permute.xlu0 %1019
        %1021 = vrot.lane.b32.xlu0 %v958, 64
        %v1022 = vpop.permute.xlu0 %1021
        %1023 = vrot.lane.b32.xlu0 %v960, 64
        %v1024 = vpop.permute.xlu0 %1023
        %1025 = vrot.lane.b32.xlu0 %v962, 64
        %v1026 = vpop.permute.xlu0 %1025
        %1027 = vrot.lane.b32.xlu0 %v964, 64
        %v1028 = vpop.permute.xlu0 %1027
        %1029 = vrot.lane.b32.xlu0 %v966, 64
        %v1030 = vpop.permute.xlu0 %1029
        %1031 = vrot.lane.b32.xlu0 %v968, 64
        %v1032 = vpop.permute.xlu0 %1031
        %1033 = vrot.lane.b32.xlu0 %v970, 64
        %v1034 = vpop.permute.xlu0 %1033
        %vm1067 = vcmask 1042432
        %v1068 = vrot.slane %v353, 5
        %v1069 = vrot.slane %v354, 5
        %v1070 = vsel %vm1067, %v1068, %v1069
        %v1071 = vrot.slane %v355, 5
        %v1072 = vsel %vm1067, %v1069, %v1071
        %v1073 = vrot.slane %v356, 5
        %v1074 = vsel %vm1067, %v1071, %v1073
        %v1075 = vrot.slane %v357, 5
        %v1076 = vsel %vm1067, %v1073, %v1075
        %v1077 = vrot.slane %v358, 5
        %v1078 = vsel %vm1067, %v1075, %v1077
        %v1079 = vrot.slane %v359, 5
        %v1080 = vsel %vm1067, %v1077, %v1079
        %v1081 = vrot.slane %v360, 5
        %v1082 = vsel %vm1067, %v1079, %v1081
        %v1083 = vrot.slane %v361, 5
        %v1084 = vsel %vm1067, %v1081, %v1083
        %v1085 = vrot.slane %v362, 5
        %v1086 = vsel %vm1067, %v1083, %v1085
        %v1087 = vrot.slane %v363, 5
        %v1088 = vsel %vm1067, %v1085, %v1087
        %v1089 = vrot.slane %v364, 5
        %v1090 = vsel %vm1067, %v1087, %v1089
        %v1091 = vrot.slane %v365, 5
        %v1092 = vsel %vm1067, %v1089, %v1091
        %v1093 = vrot.slane %v366, 5
        %v1094 = vsel %vm1067, %v1091, %v1093
        %v1095 = vrot.slane %v367, 5
        %v1096 = vsel %vm1067, %v1093, %v1095
        %v1097 = vrot.slane %v368, 5
        %v1098 = vsel %vm1067, %v1095, %v1097
        %v1099 = vrot.slane %v369, 5
        %v1100 = vsel %vm1067, %v1097, %v1099
        %v1101 = vrot.slane %v370, 5
        %v1102 = vsel %vm1067, %v1099, %v1101
        %v1103 = vrot.slane %v371, 5
        %v1104 = vsel %vm1067, %v1101, %v1103
        %v1105 = vrot.slane %v372, 5
        %v1106 = vsel %vm1067, %v1103, %v1105
        %v1107 = vrot.slane %v373, 5
        %v1108 = vsel %vm1067, %v1105, %v1107
        %v1109 = vrot.slane %v374, 5
        %v1110 = vsel %vm1067, %v1107, %v1109
        %v1111 = vrot.slane %v375, 5
        %v1112 = vsel %vm1067, %v1109, %v1111
        %v1113 = vrot.slane %v376, 5
        %v1114 = vsel %vm1067, %v1111, %v1113
        %v1115 = vrot.slane %v377, 5
        %v1116 = vsel %vm1067, %v1113, %v1115
        %v1117 = vrot.slane %v378, 5
        %v1118 = vsel %vm1067, %v1115, %v1117
        %v1119 = vrot.slane %v379, 5
        %v1120 = vsel %vm1067, %v1117, %v1119
        %v1121 = vrot.slane %v380, 5
        %v1122 = vsel %vm1067, %v1119, %v1121
        %v1123 = vrot.slane %v381, 5
        %v1124 = vsel %vm1067, %v1121, %v1123
        %v1125 = vrot.slane %v382, 5
        %v1126 = vsel %vm1067, %v1123, %v1125
        %v1127 = vrot.slane %v383, 5
        %v1128 = vsel %vm1067, %v1125, %v1127
        %v1129 = vrot.slane %v384, 5
        %v1130 = vsel %vm1067, %v1127, %v1129
        %v1131 = vrot.slane %v385, 5
        %v1132 = vsel %vm1067, %v1129, %v1131
        %1133 = vrot.lane.b32.xlu0 %v1070, 80
        %v1134 = vpop.permute.xlu0 %1133
        %1135 = vrot.lane.b32.xlu0 %v1072, 80
        %v1136 = vpop.permute.xlu0 %1135
        %1137 = vrot.lane.b32.xlu0 %v1074, 80
        %v1138 = vpop.permute.xlu0 %1137
        %1139 = vrot.lane.b32.xlu0 %v1076, 80
        %v1140 = vpop.permute.xlu0 %1139
        %1141 = vrot.lane.b32.xlu0 %v1078, 80
        %v1142 = vpop.permute.xlu0 %1141
        %1143 = vrot.lane.b32.xlu0 %v1080, 80
        %v1144 = vpop.permute.xlu0 %1143
        %1145 = vrot.lane.b32.xlu0 %v1082, 80
        %v1146 = vpop.permute.xlu0 %1145
        %1147 = vrot.lane.b32.xlu0 %v1084, 80
        %v1148 = vpop.permute.xlu0 %1147
        %1149 = vrot.lane.b32.xlu0 %v1086, 80
        %v1150 = vpop.permute.xlu0 %1149
        %1151 = vrot.lane.b32.xlu0 %v1088, 80
        %v1152 = vpop.permute.xlu0 %1151
        %1153 = vrot.lane.b32.xlu0 %v1090, 80
        %v1154 = vpop.permute.xlu0 %1153
        %1155 = vrot.lane.b32.xlu0 %v1092, 80
        %v1156 = vpop.permute.xlu0 %1155
        %1157 = vrot.lane.b32.xlu0 %v1094, 80
        %v1158 = vpop.permute.xlu0 %1157
        %1159 = vrot.lane.b32.xlu0 %v1096, 80
        %v1160 = vpop.permute.xlu0 %1159
        %1161 = vrot.lane.b32.xlu0 %v1098, 80
        %v1162 = vpop.permute.xlu0 %1161
        %1163 = vrot.lane.b32.xlu0 %v1100, 80
        %v1164 = vpop.permute.xlu0 %1163
        %1165 = vrot.lane.b32.xlu0 %v1102, 80
        %v1166 = vpop.permute.xlu0 %1165
        %1167 = vrot.lane.b32.xlu0 %v1104, 80
        %v1168 = vpop.permute.xlu0 %1167
        %1169 = vrot.lane.b32.xlu0 %v1106, 80
        %v1170 = vpop.permute.xlu0 %1169
        %1171 = vrot.lane.b32.xlu0 %v1108, 80
        %v1172 = vpop.permute.xlu0 %1171
        %1173 = vrot.lane.b32.xlu0 %v1110, 80
        %v1174 = vpop.permute.xlu0 %1173
        %1175 = vrot.lane.b32.xlu0 %v1112, 80
        %v1176 = vpop.permute.xlu0 %1175
        %1177 = vrot.lane.b32.xlu0 %v1114, 80
        %v1178 = vpop.permute.xlu0 %1177
        %1179 = vrot.lane.b32.xlu0 %v1116, 80
        %v1180 = vpop.permute.xlu0 %1179
        %1181 = vrot.lane.b32.xlu0 %v1118, 80
        %v1182 = vpop.permute.xlu0 %1181
        %1183 = vrot.lane.b32.xlu0 %v1120, 80
        %v1184 = vpop.permute.xlu0 %1183
        %1185 = vrot.lane.b32.xlu0 %v1122, 80
        %v1186 = vpop.permute.xlu0 %1185
        %1187 = vrot.lane.b32.xlu0 %v1124, 80
        %v1188 = vpop.permute.xlu0 %1187
        %1189 = vrot.lane.b32.xlu0 %v1126, 80
        %v1190 = vpop.permute.xlu0 %1189
        %1191 = vrot.lane.b32.xlu0 %v1128, 80
        %v1192 = vpop.permute.xlu0 %1191
        %1193 = vrot.lane.b32.xlu0 %v1130, 80
        %v1194 = vpop.permute.xlu0 %1193
        %1195 = vrot.lane.b32.xlu0 %v1132, 80
        %v1196 = vpop.permute.xlu0 %1195
        %vm1229 = vcmask 1041408
        %v1230 = vrot.slane %v353, 6
        %v1231 = vrot.slane %v354, 6
        %v1232 = vsel %vm1229, %v1230, %v1231
        %v1233 = vrot.slane %v355, 6
        %v1234 = vsel %vm1229, %v1231, %v1233
        %v1235 = vrot.slane %v356, 6
        %v1236 = vsel %vm1229, %v1233, %v1235
        %v1237 = vrot.slane %v357, 6
        %v1238 = vsel %vm1229, %v1235, %v1237
        %v1239 = vrot.slane %v358, 6
        %v1240 = vsel %vm1229, %v1237, %v1239
        %v1241 = vrot.slane %v359, 6
        %v1242 = vsel %vm1229, %v1239, %v1241
        %v1243 = vrot.slane %v360, 6
        %v1244 = vsel %vm1229, %v1241, %v1243
        %v1245 = vrot.slane %v361, 6
        %v1246 = vsel %vm1229, %v1243, %v1245
        %v1247 = vrot.slane %v362, 6
        %v1248 = vsel %vm1229, %v1245, %v1247
        %v1249 = vrot.slane %v363, 6
        %v1250 = vsel %vm1229, %v1247, %v1249
        %v1251 = vrot.slane %v364, 6
        %v1252 = vsel %vm1229, %v1249, %v1251
        %v1253 = vrot.slane %v365, 6
        %v1254 = vsel %vm1229, %v1251, %v1253
        %v1255 = vrot.slane %v366, 6
        %v1256 = vsel %vm1229, %v1253, %v1255
        %v1257 = vrot.slane %v367, 6
        %v1258 = vsel %vm1229, %v1255, %v1257
        %v1259 = vrot.slane %v368, 6
        %v1260 = vsel %vm1229, %v1257, %v1259
        %v1261 = vrot.slane %v369, 6
        %v1262 = vsel %vm1229, %v1259, %v1261
        %v1263 = vrot.slane %v370, 6
        %v1264 = vsel %vm1229, %v1261, %v1263
        %v1265 = vrot.slane %v371, 6
        %v1266 = vsel %vm1229, %v1263, %v1265
        %v1267 = vrot.slane %v372, 6
        %v1268 = vsel %vm1229, %v1265, %v1267
        %v1269 = vrot.slane %v373, 6
        %v1270 = vsel %vm1229, %v1267, %v1269
        %v1271 = vrot.slane %v374, 6
        %v1272 = vsel %vm1229, %v1269, %v1271
        %v1273 = vrot.slane %v375, 6
        %v1274 = vsel %vm1229, %v1271, %v1273
        %v1275 = vrot.slane %v376, 6
        %v1276 = vsel %vm1229, %v1273, %v1275
        %v1277 = vrot.slane %v377, 6
        %v1278 = vsel %vm1229, %v1275, %v1277
        %v1279 = vrot.slane %v378, 6
        %v1280 = vsel %vm1229, %v1277, %v1279
        %v1281 = vrot.slane %v379, 6
        %v1282 = vsel %vm1229, %v1279, %v1281
        %v1283 = vrot.slane %v380, 6
        %v1284 = vsel %vm1229, %v1281, %v1283
        %v1285 = vrot.slane %v381, 6
        %v1286 = vsel %vm1229, %v1283, %v1285
        %v1287 = vrot.slane %v382, 6
        %v1288 = vsel %vm1229, %v1285, %v1287
        %v1289 = vrot.slane %v383, 6
        %v1290 = vsel %vm1229, %v1287, %v1289
        %v1291 = vrot.slane %v384, 6
        %v1292 = vsel %vm1229, %v1289, %v1291
        %v1293 = vrot.slane %v385, 6
        %v1294 = vsel %vm1229, %v1291, %v1293
        %1295 = vrot.lane.b32.xlu0 %v1232, 96
        %v1296 = vpop.permute.xlu0 %1295
        %1297 = vrot.lane.b32.xlu0 %v1234, 96
        %v1298 = vpop.permute.xlu0 %1297
        %1299 = vrot.lane.b32.xlu0 %v1236, 96
        %v1300 = vpop.permute.xlu0 %1299
        %1301 = vrot.lane.b32.xlu0 %v1238, 96
        %v1302 = vpop.permute.xlu0 %1301
        %1303 = vrot.lane.b32.xlu0 %v1240, 96
        %v1304 = vpop.permute.xlu0 %1303
        %1305 = vrot.lane.b32.xlu0 %v1242, 96
        %v1306 = vpop.permute.xlu0 %1305
        %1307 = vrot.lane.b32.xlu0 %v1244, 96
        %v1308 = vpop.permute.xlu0 %1307
        %1309 = vrot.lane.b32.xlu0 %v1246, 96
        %v1310 = vpop.permute.xlu0 %1309
        %1311 = vrot.lane.b32.xlu0 %v1248, 96
        %v1312 = vpop.permute.xlu0 %1311
        %1313 = vrot.lane.b32.xlu0 %v1250, 96
        %v1314 = vpop.permute.xlu0 %1313
        %1315 = vrot.lane.b32.xlu0 %v1252, 96
        %v1316 = vpop.permute.xlu0 %1315
        %1317 = vrot.lane.b32.xlu0 %v1254, 96
        %v1318 = vpop.permute.xlu0 %1317
        %1319 = vrot.lane.b32.xlu0 %v1256, 96
        %v1320 = vpop.permute.xlu0 %1319
        %1321 = vrot.lane.b32.xlu0 %v1258, 96
        %v1322 = vpop.permute.xlu0 %1321
        %1323 = vrot.lane.b32.xlu0 %v1260, 96
        %v1324 = vpop.permute.xlu0 %1323
        %1325 = vrot.lane.b32.xlu0 %v1262, 96
        %v1326 = vpop.permute.xlu0 %1325
        %1327 = vrot.lane.b32.xlu0 %v1264, 96
        %v1328 = vpop.permute.xlu0 %1327
        %1329 = vrot.lane.b32.xlu0 %v1266, 96
        %v1330 = vpop.permute.xlu0 %1329
        %1331 = vrot.lane.b32.xlu0 %v1268, 96
        %v1332 = vpop.permute.xlu0 %1331
        %1333 = vrot.lane.b32.xlu0 %v1270, 96
        %v1334 = vpop.permute.xlu0 %1333
        %1335 = vrot.lane.b32.xlu0 %v1272, 96
        %v1336 = vpop.permute.xlu0 %1335
        %1337 = vrot.lane.b32.xlu0 %v1274, 96
        %v1338 = vpop.permute.xlu0 %1337
        %1339 = vrot.lane.b32.xlu0 %v1276, 96
        %v1340 = vpop.permute.xlu0 %1339
        %1341 = vrot.lane.b32.xlu0 %v1278, 96
        %v1342 = vpop.permute.xlu0 %1341
        %1343 = vrot.lane.b32.xlu0 %v1280, 96
        %v1344 = vpop.permute.xlu0 %1343
        %1345 = vrot.lane.b32.xlu0 %v1282, 96
        %v1346 = vpop.permute.xlu0 %1345
        %1347 = vrot.lane.b32.xlu0 %v1284, 96
        %v1348 = vpop.permute.xlu0 %1347
        %1349 = vrot.lane.b32.xlu0 %v1286, 96
        %v1350 = vpop.permute.xlu0 %1349
        %1351 = vrot.lane.b32.xlu0 %v1288, 96
        %v1352 = vpop.permute.xlu0 %1351
        %1353 = vrot.lane.b32.xlu0 %v1290, 96
        %v1354 = vpop.permute.xlu0 %1353
        %1355 = vrot.lane.b32.xlu0 %v1292, 96
        %v1356 = vpop.permute.xlu0 %1355
        %1357 = vrot.lane.b32.xlu0 %v1294, 96
        %v1358 = vpop.permute.xlu0 %1357
        %vm1391 = vcmask 1040384
        %v1392 = vrot.slane %v353, 7
        %v1393 = vrot.slane %v354, 7
        %v1394 = vsel %vm1391, %v1392, %v1393
        %v1395 = vrot.slane %v355, 7
        %v1396 = vsel %vm1391, %v1393, %v1395
        %v1397 = vrot.slane %v356, 7
        %v1398 = vsel %vm1391, %v1395, %v1397
        %v1399 = vrot.slane %v357, 7
        %v1400 = vsel %vm1391, %v1397, %v1399
        %v1401 = vrot.slane %v358, 7
        %v1402 = vsel %vm1391, %v1399, %v1401
        %v1403 = vrot.slane %v359, 7
        %v1404 = vsel %vm1391, %v1401, %v1403
        %v1405 = vrot.slane %v360, 7
        %v1406 = vsel %vm1391, %v1403, %v1405
        %v1407 = vrot.slane %v361, 7
        %v1408 = vsel %vm1391, %v1405, %v1407
        %v1409 = vrot.slane %v362, 7
        %v1410 = vsel %vm1391, %v1407, %v1409
        %v1411 = vrot.slane %v363, 7
        %v1412 = vsel %vm1391, %v1409, %v1411
        %v1413 = vrot.slane %v364, 7
        %v1414 = vsel %vm1391, %v1411, %v1413
        %v1415 = vrot.slane %v365, 7
        %v1416 = vsel %vm1391, %v1413, %v1415
        %v1417 = vrot.slane %v366, 7
        %v1418 = vsel %vm1391, %v1415, %v1417
        %v1419 = vrot.slane %v367, 7
        %v1420 = vsel %vm1391, %v1417, %v1419
        %v1421 = vrot.slane %v368, 7
        %v1422 = vsel %vm1391, %v1419, %v1421
        %v1423 = vrot.slane %v369, 7
        %v1424 = vsel %vm1391, %v1421, %v1423
        %v1425 = vrot.slane %v370, 7
        %v1426 = vsel %vm1391, %v1423, %v1425
        %v1427 = vrot.slane %v371, 7
        %v1428 = vsel %vm1391, %v1425, %v1427
        %v1429 = vrot.slane %v372, 7
        %v1430 = vsel %vm1391, %v1427, %v1429
        %v1431 = vrot.slane %v373, 7
        %v1432 = vsel %vm1391, %v1429, %v1431
        %v1433 = vrot.slane %v374, 7
        %v1434 = vsel %vm1391, %v1431, %v1433
        %v1435 = vrot.slane %v375, 7
        %v1436 = vsel %vm1391, %v1433, %v1435
        %v1437 = vrot.slane %v376, 7
        %v1438 = vsel %vm1391, %v1435, %v1437
        %v1439 = vrot.slane %v377, 7
        %v1440 = vsel %vm1391, %v1437, %v1439
        %v1441 = vrot.slane %v378, 7
        %v1442 = vsel %vm1391, %v1439, %v1441
        %v1443 = vrot.slane %v379, 7
        %v1444 = vsel %vm1391, %v1441, %v1443
        %v1445 = vrot.slane %v380, 7
        %v1446 = vsel %vm1391, %v1443, %v1445
        %v1447 = vrot.slane %v381, 7
        %v1448 = vsel %vm1391, %v1445, %v1447
        %v1449 = vrot.slane %v382, 7
        %v1450 = vsel %vm1391, %v1447, %v1449
        %v1451 = vrot.slane %v383, 7
        %v1452 = vsel %vm1391, %v1449, %v1451
        %v1453 = vrot.slane %v384, 7
        %v1454 = vsel %vm1391, %v1451, %v1453
        %v1455 = vrot.slane %v385, 7
        %v1456 = vsel %vm1391, %v1453, %v1455
        %1457 = vrot.lane.b32.xlu0 %v1394, 112
        %v1458 = vpop.permute.xlu0 %1457
        %1459 = vrot.lane.b32.xlu0 %v1396, 112
        %v1460 = vpop.permute.xlu0 %1459
        %1461 = vrot.lane.b32.xlu0 %v1398, 112
        %v1462 = vpop.permute.xlu0 %1461
        %1463 = vrot.lane.b32.xlu0 %v1400, 112
        %v1464 = vpop.permute.xlu0 %1463
        %1465 = vrot.lane.b32.xlu0 %v1402, 112
        %v1466 = vpop.permute.xlu0 %1465
        %1467 = vrot.lane.b32.xlu0 %v1404, 112
        %v1468 = vpop.permute.xlu0 %1467
        %1469 = vrot.lane.b32.xlu0 %v1406, 112
        %v1470 = vpop.permute.xlu0 %1469
        %1471 = vrot.lane.b32.xlu0 %v1408, 112
        %v1472 = vpop.permute.xlu0 %1471
        %1473 = vrot.lane.b32.xlu0 %v1410, 112
        %v1474 = vpop.permute.xlu0 %1473
        %1475 = vrot.lane.b32.xlu0 %v1412, 112
        %v1476 = vpop.permute.xlu0 %1475
        %1477 = vrot.lane.b32.xlu0 %v1414, 112
        %v1478 = vpop.permute.xlu0 %1477
        %1479 = vrot.lane.b32.xlu0 %v1416, 112
        %v1480 = vpop.permute.xlu0 %1479
        %1481 = vrot.lane.b32.xlu0 %v1418, 112
        %v1482 = vpop.permute.xlu0 %1481
        %1483 = vrot.lane.b32.xlu0 %v1420, 112
        %v1484 = vpop.permute.xlu0 %1483
        %1485 = vrot.lane.b32.xlu0 %v1422, 112
        %v1486 = vpop.permute.xlu0 %1485
        %1487 = vrot.lane.b32.xlu0 %v1424, 112
        %v1488 = vpop.permute.xlu0 %1487
        %1489 = vrot.lane.b32.xlu0 %v1426, 112
        %v1490 = vpop.permute.xlu0 %1489
        %1491 = vrot.lane.b32.xlu0 %v1428, 112
        %v1492 = vpop.permute.xlu0 %1491
        %1493 = vrot.lane.b32.xlu0 %v1430, 112
        %v1494 = vpop.permute.xlu0 %1493
        %1495 = vrot.lane.b32.xlu0 %v1432, 112
        %v1496 = vpop.permute.xlu0 %1495
        %1497 = vrot.lane.b32.xlu0 %v1434, 112
        %v1498 = vpop.permute.xlu0 %1497
        %1499 = vrot.lane.b32.xlu0 %v1436, 112
        %v1500 = vpop.permute.xlu0 %1499
        %1501 = vrot.lane.b32.xlu0 %v1438, 112
        %v1502 = vpop.permute.xlu0 %1501
        %1503 = vrot.lane.b32.xlu0 %v1440, 112
        %v1504 = vpop.permute.xlu0 %1503
        %1505 = vrot.lane.b32.xlu0 %v1442, 112
        %v1506 = vpop.permute.xlu0 %1505
        %1507 = vrot.lane.b32.xlu0 %v1444, 112
        %v1508 = vpop.permute.xlu0 %1507
        %1509 = vrot.lane.b32.xlu0 %v1446, 112
        %v1510 = vpop.permute.xlu0 %1509
        %1511 = vrot.lane.b32.xlu0 %v1448, 112
        %v1512 = vpop.permute.xlu0 %1511
        %1513 = vrot.lane.b32.xlu0 %v1450, 112
        %v1514 = vpop.permute.xlu0 %1513
        %1515 = vrot.lane.b32.xlu0 %v1452, 112
        %v1516 = vpop.permute.xlu0 %1515
        %1517 = vrot.lane.b32.xlu0 %v1454, 112
        %v1518 = vpop.permute.xlu0 %1517
        %1519 = vrot.lane.b32.xlu0 %v1456, 112
        %v1520 = vpop.permute.xlu0 %1519
        %vm1553 = vcmask 130048
        %v1554 = vsel %vm1553, %v353, %v486
        %v1555 = vsel %vm1553, %v354, %v488
        %v1556 = vsel %vm1553, %v355, %v490
        %v1557 = vsel %vm1553, %v356, %v492
        %v1558 = vsel %vm1553, %v357, %v494
        %v1559 = vsel %vm1553, %v358, %v496
        %v1560 = vsel %vm1553, %v359, %v498
        %v1561 = vsel %vm1553, %v360, %v500
        %v1562 = vsel %vm1553, %v361, %v502
        %v1563 = vsel %vm1553, %v362, %v504
        %v1564 = vsel %vm1553, %v363, %v506
        %v1565 = vsel %vm1553, %v364, %v508
        %v1566 = vsel %vm1553, %v365, %v510
        %v1567 = vsel %vm1553, %v366, %v512
        %v1568 = vsel %vm1553, %v367, %v514
        %v1569 = vsel %vm1553, %v368, %v516
        %v1570 = vsel %vm1553, %v369, %v518
        %v1571 = vsel %vm1553, %v370, %v520
        %v1572 = vsel %vm1553, %v371, %v522
        %v1573 = vsel %vm1553, %v372, %v524
        %v1574 = vsel %vm1553, %v373, %v526
        %v1575 = vsel %vm1553, %v374, %v528
        %v1576 = vsel %vm1553, %v375, %v530
        %v1577 = vsel %vm1553, %v376, %v532
        %v1578 = vsel %vm1553, %v377, %v534
        %v1579 = vsel %vm1553, %v378, %v536
        %v1580 = vsel %vm1553, %v379, %v538
        %v1581 = vsel %vm1553, %v380, %v540
        %v1582 = vsel %vm1553, %v381, %v542
        %v1583 = vsel %vm1553, %v382, %v544
        %v1584 = vsel %vm1553, %v383, %v546
        %v1585 = vsel %vm1553, %v384, %v548
        %vm1586 = vcmask 261120
        %v1587 = vsel %vm1586, %v1554, %v648
        %v1588 = vsel %vm1586, %v1555, %v650
        %v1589 = vsel %vm1586, %v1556, %v652
        %v1590 = vsel %vm1586, %v1557, %v654
        %v1591 = vsel %vm1586, %v1558, %v656
        %v1592 = vsel %vm1586, %v1559, %v658
        %v1593 = vsel %vm1586, %v1560, %v660
        %v1594 = vsel %vm1586, %v1561, %v662
        %v1595 = vsel %vm1586, %v1562, %v664
        %v1596 = vsel %vm1586, %v1563, %v666
        %v1597 = vsel %vm1586, %v1564, %v668
        %v1598 = vsel %vm1586, %v1565, %v670
        %v1599 = vsel %vm1586, %v1566, %v672
        %v1600 = vsel %vm1586, %v1567, %v674
        %v1601 = vsel %vm1586, %v1568, %v676
        %v1602 = vsel %vm1586, %v1569, %v678
        %v1603 = vsel %vm1586, %v1570, %v680
        %v1604 = vsel %vm1586, %v1571, %v682
        %v1605 = vsel %vm1586, %v1572, %v684
        %v1606 = vsel %vm1586, %v1573, %v686
        %v1607 = vsel %vm1586, %v1574, %v688
        %v1608 = vsel %vm1586, %v1575, %v690
        %v1609 = vsel %vm1586, %v1576, %v692
        %v1610 = vsel %vm1586, %v1577, %v694
        %v1611 = vsel %vm1586, %v1578, %v696
        %v1612 = vsel %vm1586, %v1579, %v698
        %v1613 = vsel %vm1586, %v1580, %v700
        %v1614 = vsel %vm1586, %v1581, %v702
        %v1615 = vsel %vm1586, %v1582, %v704
        %v1616 = vsel %vm1586, %v1583, %v706
        %v1617 = vsel %vm1586, %v1584, %v708
        %v1618 = vsel %vm1586, %v1585, %v710
        %vm1619 = vcmask 392192
        %v1620 = vsel %vm1619, %v1587, %v810
        %v1621 = vsel %vm1619, %v1588, %v812
        %v1622 = vsel %vm1619, %v1589, %v814
        %v1623 = vsel %vm1619, %v1590, %v816
        %v1624 = vsel %vm1619, %v1591, %v818
        %v1625 = vsel %vm1619, %v1592, %v820
        %v1626 = vsel %vm1619, %v1593, %v822
        %v1627 = vsel %vm1619, %v1594, %v824
        %v1628 = vsel %vm1619, %v1595, %v826
        %v1629 = vsel %vm1619, %v1596, %v828
        %v1630 = vsel %vm1619, %v1597, %v830
        %v1631 = vsel %vm1619, %v1598, %v832
        %v1632 = vsel %vm1619, %v1599, %v834
        %v1633 = vsel %vm1619, %v1600, %v836
        %v1634 = vsel %vm1619, %v1601, %v838
        %v1635 = vsel %vm1619, %v1602, %v840
        %v1636 = vsel %vm1619, %v1603, %v842
        %v1637 = vsel %vm1619, %v1604, %v844
        %v1638 = vsel %vm1619, %v1605, %v846
        %v1639 = vsel %vm1619, %v1606, %v848
        %v1640 = vsel %vm1619, %v1607, %v850
        %v1641 = vsel %vm1619, %v1608, %v852
        %v1642 = vsel %vm1619, %v1609, %v854
        %v1643 = vsel %vm1619, %v1610, %v856
        %v1644 = vsel %vm1619, %v1611, %v858
        %v1645 = vsel %vm1619, %v1612, %v860
        %v1646 = vsel %vm1619, %v1613, %v862
        %v1647 = vsel %vm1619, %v1614, %v864
        %v1648 = vsel %vm1619, %v1615, %v866
        %v1649 = vsel %vm1619, %v1616, %v868
        %v1650 = vsel %vm1619, %v1617, %v870
        %v1651 = vsel %vm1619, %v1618, %v872
        %vm1652 = vcmask 523264
        %v1653 = vsel %vm1652, %v1620, %v972
        %v1654 = vsel %vm1652, %v1621, %v974
        %v1655 = vsel %vm1652, %v1622, %v976
        %v1656 = vsel %vm1652, %v1623, %v978
        %v1657 = vsel %vm1652, %v1624, %v980
        %v1658 = vsel %vm1652, %v1625, %v982
        %v1659 = vsel %vm1652, %v1626, %v984
        %v1660 = vsel %vm1652, %v1627, %v986
        %v1661 = vsel %vm1652, %v1628, %v988
        %v1662 = vsel %vm1652, %v1629, %v990
        %v1663 = vsel %vm1652, %v1630, %v992
        %v1664 = vsel %vm1652, %v1631, %v994
        %v1665 = vsel %vm1652, %v1632, %v996
        %v1666 = vsel %vm1652, %v1633, %v998
        %v1667 = vsel %vm1652, %v1634, %v1000
        %v1668 = vsel %vm1652, %v1635, %v1002
        %v1669 = vsel %vm1652, %v1636, %v1004
        %v1670 = vsel %vm1652, %v1637, %v1006
        %v1671 = vsel %vm1652, %v1638, %v1008
        %v1672 = vsel %vm1652, %v1639, %v1010
        %v1673 = vsel %vm1652, %v1640, %v1012
        %v1674 = vsel %vm1652, %v1641, %v1014
        %v1675 = vsel %vm1652, %v1642, %v1016
        %v1676 = vsel %vm1652, %v1643, %v1018
        %v1677 = vsel %vm1652, %v1644, %v1020
        %v1678 = vsel %vm1652, %v1645, %v1022
        %v1679 = vsel %vm1652, %v1646, %v1024
        %v1680 = vsel %vm1652, %v1647, %v1026
        %v1681 = vsel %vm1652, %v1648, %v1028
        %v1682 = vsel %vm1652, %v1649, %v1030
        %v1683 = vsel %vm1652, %v1650, %v1032
        %v1684 = vsel %vm1652, %v1651, %v1034
        %vm1685 = vcmask 654336
        %v1686 = vsel %vm1685, %v1653, %v1134
        %v1687 = vsel %vm1685, %v1654, %v1136
        %v1688 = vsel %vm1685, %v1655, %v1138
        %v1689 = vsel %vm1685, %v1656, %v1140
        %v1690 = vsel %vm1685, %v1657, %v1142
        %v1691 = vsel %vm1685, %v1658, %v1144
        %v1692 = vsel %vm1685, %v1659, %v1146
        %v1693 = vsel %vm1685, %v1660, %v1148
        %v1694 = vsel %vm1685, %v1661, %v1150
        %v1695 = vsel %vm1685, %v1662, %v1152
        %v1696 = vsel %vm1685, %v1663, %v1154
        %v1697 = vsel %vm1685, %v1664, %v1156
        %v1698 = vsel %vm1685, %v1665, %v1158
        %v1699 = vsel %vm1685, %v1666, %v1160
        %v1700 = vsel %vm1685, %v1667, %v1162
        %v1701 = vsel %vm1685, %v1668, %v1164
        %v1702 = vsel %vm1685, %v1669, %v1166
        %v1703 = vsel %vm1685, %v1670, %v1168
        %v1704 = vsel %vm1685, %v1671, %v1170
        %v1705 = vsel %vm1685, %v1672, %v1172
        %v1706 = vsel %vm1685, %v1673, %v1174
        %v1707 = vsel %vm1685, %v1674, %v1176
        %v1708 = vsel %vm1685, %v1675, %v1178
        %v1709 = vsel %vm1685, %v1676, %v1180
        %v1710 = vsel %vm1685, %v1677, %v1182
        %v1711 = vsel %vm1685, %v1678, %v1184
        %v1712 = vsel %vm1685, %v1679, %v1186
        %v1713 = vsel %vm1685, %v1680, %v1188
        %v1714 = vsel %vm1685, %v1681, %v1190
        %v1715 = vsel %vm1685, %v1682, %v1192
        %v1716 = vsel %vm1685, %v1683, %v1194
        %v1717 = vsel %vm1685, %v1684, %v1196
        %vm1718 = vcmask 785408
        %v1719 = vsel %vm1718, %v1686, %v1296
        %v1720 = vsel %vm1718, %v1687, %v1298
        %v1721 = vsel %vm1718, %v1688, %v1300
        %v1722 = vsel %vm1718, %v1689, %v1302
        %v1723 = vsel %vm1718, %v1690, %v1304
        %v1724 = vsel %vm1718, %v1691, %v1306
        %v1725 = vsel %vm1718, %v1692, %v1308
        %v1726 = vsel %vm1718, %v1693, %v1310
        %v1727 = vsel %vm1718, %v1694, %v1312
        %v1728 = vsel %vm1718, %v1695, %v1314
        %v1729 = vsel %vm1718, %v1696, %v1316
        %v1730 = vsel %vm1718, %v1697, %v1318
        %v1731 = vsel %vm1718, %v1698, %v1320
        %v1732 = vsel %vm1718, %v1699, %v1322
        %v1733 = vsel %vm1718, %v1700, %v1324
        %v1734 = vsel %vm1718, %v1701, %v1326
        %v1735 = vsel %vm1718, %v1702, %v1328
        %v1736 = vsel %vm1718, %v1703, %v1330
        %v1737 = vsel %vm1718, %v1704, %v1332
        %v1738 = vsel %vm1718, %v1705, %v1334
        %v1739 = vsel %vm1718, %v1706, %v1336
        %v1740 = vsel %vm1718, %v1707, %v1338
        %v1741 = vsel %vm1718, %v1708, %v1340
        %v1742 = vsel %vm1718, %v1709, %v1342
        %v1743 = vsel %vm1718, %v1710, %v1344
        %v1744 = vsel %vm1718, %v1711, %v1346
        %v1745 = vsel %vm1718, %v1712, %v1348
        %v1746 = vsel %vm1718, %v1713, %v1350
        %v1747 = vsel %vm1718, %v1714, %v1352
        %v1748 = vsel %vm1718, %v1715, %v1354
        %v1749 = vsel %vm1718, %v1716, %v1356
        %v1750 = vsel %vm1718, %v1717, %v1358
        %vm1751 = vcmask 916480
        %v1752 = vsel %vm1751, %v1719, %v1458
        %v1753 = vsel %vm1751, %v1720, %v1460
        %v1754 = vsel %vm1751, %v1721, %v1462
        %v1755 = vsel %vm1751, %v1722, %v1464
        %v1756 = vsel %vm1751, %v1723, %v1466
        %v1757 = vsel %vm1751, %v1724, %v1468
        %v1758 = vsel %vm1751, %v1725, %v1470
        %v1759 = vsel %vm1751, %v1726, %v1472
        %v1760 = vsel %vm1751, %v1727, %v1474
        %v1761 = vsel %vm1751, %v1728, %v1476
        %v1762 = vsel %vm1751, %v1729, %v1478
        %v1763 = vsel %vm1751, %v1730, %v1480
        %v1764 = vsel %vm1751, %v1731, %v1482
        %v1765 = vsel %vm1751, %v1732, %v1484
        %v1766 = vsel %vm1751, %v1733, %v1486
        %v1767 = vsel %vm1751, %v1734, %v1488
        %v1768 = vsel %vm1751, %v1735, %v1490
        %v1769 = vsel %vm1751, %v1736, %v1492
        %v1770 = vsel %vm1751, %v1737, %v1494
        %v1771 = vsel %vm1751, %v1738, %v1496
        %v1772 = vsel %vm1751, %v1739, %v1498
        %v1773 = vsel %vm1751, %v1740, %v1500
        %v1774 = vsel %vm1751, %v1741, %v1502
        %v1775 = vsel %vm1751, %v1742, %v1504
        %v1776 = vsel %vm1751, %v1743, %v1506
        %v1777 = vsel %vm1751, %v1744, %v1508
        %v1778 = vsel %vm1751, %v1745, %v1510
        %v1779 = vsel %vm1751, %v1746, %v1512
        %v1780 = vsel %vm1751, %v1747, %v1514
        %v1781 = vsel %vm1751, %v1748, %v1516
        %v1782 = vsel %vm1751, %v1749, %v1518
        %v1783 = vsel %vm1751, %v1750, %v1520
        %v1784 = vpack.c.bf16 %v1753, %v1752
        %v1785 = vpack.c.bf16 %v1755, %v1754
        %v1786 = vpack.c.bf16 %v1757, %v1756
        %v1787 = vpack.c.bf16 %v1759, %v1758
        %v1788 = vpack.c.bf16 %v1761, %v1760
        %v1789 = vpack.c.bf16 %v1763, %v1762
        %v1790 = vpack.c.bf16 %v1765, %v1764
        %v1791 = vpack.c.bf16 %v1767, %v1766
        %v1792 = vpack.c.bf16 %v1769, %v1768
        %v1793 = vpack.c.bf16 %v1771, %v1770
        %v1794 = vpack.c.bf16 %v1773, %v1772
        %v1795 = vpack.c.bf16 %v1775, %v1774
        %v1796 = vpack.c.bf16 %v1777, %v1776
        %v1797 = vpack.c.bf16 %v1779, %v1778
        %v1798 = vpack.c.bf16 %v1781, %v1780
        %v1799 = vpack.c.bf16 %v1783, %v1782
        %v1800 = vld [vmem:[%s2] sm:$0xf]
        %v1801 = vld [vmem:[%s2 + $0x4] sm:$0xf]
        %v1802 = vld [vmem:[%s2 + $0x8] sm:$0xf]
        %v1803 = vld [vmem:[%s2 + $0xc] sm:$0xf]
        %v1804 = vld [vmem:[%s2 + $0x10] sm:$0xf]
        %v1805 = vld [vmem:[%s2 + $0x14] sm:$0xf]
        %v1806 = vld [vmem:[%s2 + $0x18] sm:$0xf]
        %v1807 = vld [vmem:[%s2 + $0x1c] sm:$0xf]
        %v1808 = vld [vmem:[%s2 + $0x20] sm:$0xf]
        %v1809 = vld [vmem:[%s2 + $0x24] sm:$0xf]
        %v1810 = vld [vmem:[%s2 + $0x28] sm:$0xf]
        %v1811 = vld [vmem:[%s2 + $0x2c] sm:$0xf]
        %v1812 = vld [vmem:[%s2 + $0x30] sm:$0xf]
        %v1813 = vld [vmem:[%s2 + $0x34] sm:$0xf]
        %v1814 = vld [vmem:[%s2 + $0x38] sm:$0xf]
        %v1815 = vld [vmem:[%s2 + $0x3c] sm:$0xf]
        %v1816 = vld [vmem:[%s3] sm:$0x1]
        %v1818 = vlaneseq
        %v1819 = vshrl.u32 %v1818, 7
        %v1820 = vsub.s32 0, %v1819
        %v1821 = vrot.slane %v1816, %v1820
        %v1839 = vunpack.c.l.b16 %v1800
        %v1840 = vunpack.c.l.b16 %v1801
        %v1841 = vunpack.c.l.b16 %v1802
        %v1842 = vunpack.c.l.b16 %v1803
        %v1843 = vunpack.c.l.b16 %v1804
        %v1844 = vunpack.c.l.b16 %v1805
        %v1845 = vunpack.c.l.b16 %v1806
        %v1846 = vunpack.c.l.b16 %v1807
        %v1847 = vunpack.c.l.b16 %v1808
        %v1848 = vunpack.c.l.b16 %v1809
        %v1849 = vunpack.c.l.b16 %v1810
        %v1850 = vunpack.c.l.b16 %v1811
        %v1851 = vunpack.c.l.b16 %v1812
        %v1852 = vunpack.c.l.b16 %v1813
        %v1853 = vunpack.c.l.b16 %v1814
        %v1854 = vunpack.c.l.b16 %v1815
        %v1855 = vpack.c.b16 %v1840, %v1839
        %v1856 = vpack.c.b16 %v1842, %v1841
        %v1857 = vpack.c.b16 %v1844, %v1843
        %v1858 = vpack.c.b16 %v1846, %v1845
        %v1859 = vpack.c.b16 %v1848, %v1847
        %v1860 = vpack.c.b16 %v1850, %v1849
        %v1861 = vpack.c.b16 %v1852, %v1851
        %v1862 = vpack.c.b16 %v1854, %v1853
        %1871 = vmatprep.subr.bf16.mxu0 0
        %1872 = vmatpush1.bf16.msra.mxu0 %v1862
        %1873 = vmatprep.subr.bf16.mxu0 0
        %1874 = vmatpush1.bf16.msra.mxu0 %v1861
        %1875 = vmatprep.subr.bf16.mxu0 0
        %1876 = vmatpush1.bf16.msra.mxu0 %v1860
        %1877 = vmatprep.subr.bf16.mxu0 0
        %1878 = vmatpush1.bf16.msra.mxu0 %v1859
        %1879 = vmatprep.subr.bf16.mxu0 0
        %1880 = vmatpush1.bf16.msra.mxu0 %v1858
        %1881 = vmatprep.subr.bf16.mxu0 0
        %1882 = vmatpush1.bf16.msra.mxu0 %v1857
        %1883 = vmatprep.subr.bf16.mxu0 0
        %1884 = vmatpush1.bf16.msra.mxu0 %v1856
        %1885 = vmatprep.subr.bf16.mxu0 0
        %1886 = vmatpush1.bf16.msra.mxu0 %v1855
        %1887 = vmatprep.subr.bf16.mxu0 0
        %1888 = vmatpush2.bf16.msra.mxu0 0
        %1889 = vmatprep.subr.bf16.mxu0 0
        %1890 = vmatpush2.bf16.msra.mxu0 0
        %1891 = vmatprep.subr.bf16.mxu0 0
        %1892 = vmatpush2.bf16.msra.mxu0 0
        %1893 = vmatprep.subr.bf16.mxu0 0
        %1894 = vmatpush2.bf16.msra.mxu0 0
        %1895 = vmatprep.subr.bf16.mxu0 0
        %1896 = vmatpush2.bf16.msra.mxu0 0
        %1897 = vmatprep.subr.bf16.mxu0 0
        %1898 = vmatpush2.bf16.msra.mxu0 0
        %1899 = vmatprep.subr.bf16.mxu0 0
        %1900 = vmatpush2.bf16.msra.mxu0 0
        %1901 = vmatprep.subr.bf16.mxu0 0
        %1902 = vmatpush2.bf16.msra.mxu0 0
        %1903 = vmatprep.mubr.bf16.mxu0 0
        %1904 = vmatmul.mubr.bf16.gmra.mxu0 %v1784
        %v1905 = vpop.f32.mrf.mxu0
        %v1906 = vadd.f32 %v1821, %v1905
        %v1907 = vpop.f32.mrf.mxu0
        %v1908 = vpop.f32.mrf.mxu0
        %v1909 = vadd.f32 %v1821, %v1908
        %v1910 = vpop.f32.mrf.mxu0
        %1911 = vmatprep.mubr.bf16.mxu0 0
        %1912 = vmatmul.mubr.bf16.gmra.mxu0 %v1785
        %v1913 = vpop.f32.mrf.mxu0
        %v1914 = vadd.f32 %v1821, %v1913
        %v1915 = vpop.f32.mrf.mxu0
        %v1916 = vpop.f32.mrf.mxu0
        %v1917 = vadd.f32 %v1821, %v1916
        %v1918 = vpop.f32.mrf.mxu0
        %1919 = vmatprep.mubr.bf16.mxu0 0
        %1920 = vmatmul.mubr.bf16.gmra.mxu0 %v1786
        %v1921 = vpop.f32.mrf.mxu0
        %v1922 = vadd.f32 %v1821, %v1921
        %v1923 = vpop.f32.mrf.mxu0
        %v1924 = vpop.f32.mrf.mxu0
        %v1925 = vadd.f32 %v1821, %v1924
        %v1926 = vpop.f32.mrf.mxu0
        %1927 = vmatprep.mubr.bf16.mxu0 0
        %1928 = vmatmul.mubr.bf16.gmra.mxu0 %v1787
        %v1929 = vpop.f32.mrf.mxu0
        %v1930 = vadd.f32 %v1821, %v1929
        %v1931 = vpop.f32.mrf.mxu0
        %v1932 = vpop.f32.mrf.mxu0
        %v1933 = vadd.f32 %v1821, %v1932
        %v1934 = vpop.f32.mrf.mxu0
        %1935 = vmatprep.mubr.bf16.mxu0 0
        %1936 = vmatmul.mubr.bf16.gmra.mxu0 %v1788
        %v1937 = vpop.f32.mrf.mxu0
        %v1938 = vadd.f32 %v1821, %v1937
        %v1939 = vpop.f32.mrf.mxu0
        %v1940 = vpop.f32.mrf.mxu0
        %v1941 = vadd.f32 %v1821, %v1940
        %v1942 = vpop.f32.mrf.mxu0
        %1943 = vmatprep.mubr.bf16.mxu0 0
        %1944 = vmatmul.mubr.bf16.gmra.mxu0 %v1789
        %v1945 = vpop.f32.mrf.mxu0
        %v1946 = vadd.f32 %v1821, %v1945
        %v1947 = vpop.f32.mrf.mxu0
        %v1948 = vpop.f32.mrf.mxu0
        %v1949 = vadd.f32 %v1821, %v1948
        %v1950 = vpop.f32.mrf.mxu0
        %1951 = vmatprep.mubr.bf16.mxu0 0
        %1952 = vmatmul.mubr.bf16.gmra.mxu0 %v1790
        %v1953 = vpop.f32.mrf.mxu0
        %v1954 = vadd.f32 %v1821, %v1953
        %v1955 = vpop.f32.mrf.mxu0
        %v1956 = vpop.f32.mrf.mxu0
        %v1957 = vadd.f32 %v1821, %v1956
        %v1958 = vpop.f32.mrf.mxu0
        %1959 = vmatprep.mubr.bf16.mxu0 0
        %1960 = vmatmul.mubr.bf16.gmra.mxu0 %v1791
        %v1961 = vpop.f32.mrf.mxu0
        %v1962 = vadd.f32 %v1821, %v1961
        %v1963 = vpop.f32.mrf.mxu0
        %v1964 = vpop.f32.mrf.mxu0
        %v1965 = vadd.f32 %v1821, %v1964
        %v1966 = vpop.f32.mrf.mxu0
        %1967 = vmatprep.mubr.bf16.mxu0 0
        %1968 = vmatmul.mubr.bf16.gmra.mxu0 %v1792
        %v1969 = vpop.f32.mrf.mxu0
        %v1970 = vadd.f32 %v1821, %v1969
        %v1971 = vpop.f32.mrf.mxu0
        %v1972 = vpop.f32.mrf.mxu0
        %v1973 = vadd.f32 %v1821, %v1972
        %v1974 = vpop.f32.mrf.mxu0
        %1975 = vmatprep.mubr.bf16.mxu0 0
        %1976 = vmatmul.mubr.bf16.gmra.mxu0 %v1793
        %v1977 = vpop.f32.mrf.mxu0
        %v1978 = vadd.f32 %v1821, %v1977
        %v1979 = vpop.f32.mrf.mxu0
        %v1980 = vpop.f32.mrf.mxu0
        %v1981 = vadd.f32 %v1821, %v1980
        %v1982 = vpop.f32.mrf.mxu0
        %1983 = vmatprep.mubr.bf16.mxu0 0
        %1984 = vmatmul.mubr.bf16.gmra.mxu0 %v1794
        %v1985 = vpop.f32.mrf.mxu0
        %v1986 = vadd.f32 %v1821, %v1985
        %v1987 = vpop.f32.mrf.mxu0
        %v1988 = vpop.f32.mrf.mxu0
        %v1989 = vadd.f32 %v1821, %v1988
        %v1990 = vpop.f32.mrf.mxu0
        %1991 = vmatprep.mubr.bf16.mxu0 0
        %1992 = vmatmul.mubr.bf16.gmra.mxu0 %v1795
        %v1993 = vpop.f32.mrf.mxu0
        %v1994 = vadd.f32 %v1821, %v1993
        %v1995 = vpop.f32.mrf.mxu0
        %v1996 = vpop.f32.mrf.mxu0
        %v1997 = vadd.f32 %v1821, %v1996
        %v1998 = vpop.f32.mrf.mxu0
        %1999 = vmatprep.mubr.bf16.mxu0 0
        %2000 = vmatmul.mubr.bf16.gmra.mxu0 %v1796
        %v2001 = vpop.f32.mrf.mxu0
        %v2002 = vadd.f32 %v1821, %v2001
        %v2003 = vpop.f32.mrf.mxu0
        %v2004 = vpop.f32.mrf.mxu0
        %v2005 = vadd.f32 %v1821, %v2004
        %v2006 = vpop.f32.mrf.mxu0
        %2007 = vmatprep.mubr.bf16.mxu0 0
        %2008 = vmatmul.mubr.bf16.gmra.mxu0 %v1797
        %v2009 = vpop.f32.mrf.mxu0
        %v2010 = vadd.f32 %v1821, %v2009
        %v2011 = vpop.f32.mrf.mxu0
        %v2012 = vpop.f32.mrf.mxu0
        %v2013 = vadd.f32 %v1821, %v2012
        %v2014 = vpop.f32.mrf.mxu0
        %2015 = vmatprep.mubr.bf16.mxu0 0
        %2016 = vmatmul.mubr.bf16.gmra.mxu0 %v1798
        %v2017 = vpop.f32.mrf.mxu0
        %v2018 = vadd.f32 %v1821, %v2017
        %v2019 = vpop.f32.mrf.mxu0
        %v2020 = vpop.f32.mrf.mxu0
        %v2021 = vadd.f32 %v1821, %v2020
        %v2022 = vpop.f32.mrf.mxu0
        %2023 = vmatprep.mubr.bf16.mxu0 0
        %2024 = vmatmul.mubr.bf16.gmra.mxu0 %v1799
        %v2025 = vpop.f32.mrf.mxu0
        %v2026 = vadd.f32 %v1821, %v2025
        %v2027 = vpop.f32.mrf.mxu0
        %v2028 = vpop.f32.mrf.mxu0
        %v2029 = vadd.f32 %v1821, %v2028
        %v2030 = vpop.f32.mrf.mxu0
        %2031 = vdwg.mxu0
        %s2032 = sld [smem:[#allocation2]]
        %vm2033 = vcmp.ge.f32.partialorder %v1906, 0.0
        %vm2034 = vcmp.ge.f32.partialorder %v1909, 0.0
        %vm2035 = vcmp.ge.f32.partialorder %v1914, 0.0
        %vm2036 = vcmp.ge.f32.partialorder %v1917, 0.0
        %vm2037 = vcmp.ge.f32.partialorder %v1922, 0.0
        %vm2038 = vcmp.ge.f32.partialorder %v1925, 0.0
        %vm2039 = vcmp.ge.f32.partialorder %v1930, 0.0
        %vm2040 = vcmp.ge.f32.partialorder %v1933, 0.0
        %vm2041 = vcmp.ge.f32.partialorder %v1938, 0.0
        %vm2042 = vcmp.ge.f32.partialorder %v1941, 0.0
        %vm2043 = vcmp.ge.f32.partialorder %v1946, 0.0
        %vm2044 = vcmp.ge.f32.partialorder %v1949, 0.0
        %vm2045 = vcmp.ge.f32.partialorder %v1954, 0.0
        %vm2046 = vcmp.ge.f32.partialorder %v1957, 0.0
        %vm2047 = vcmp.ge.f32.partialorder %v1962, 0.0
        %vm2048 = vcmp.ge.f32.partialorder %v1965, 0.0
        %vm2049 = vcmp.ge.f32.partialorder %v1970, 0.0
        %vm2050 = vcmp.ge.f32.partialorder %v1973, 0.0
        %vm2051 = vcmp.ge.f32.partialorder %v1978, 0.0
        %vm2052 = vcmp.ge.f32.partialorder %v1981, 0.0
        %vm2053 = vcmp.ge.f32.partialorder %v1986, 0.0
        %vm2054 = vcmp.ge.f32.partialorder %v1989, 0.0
        %vm2055 = vcmp.ge.f32.partialorder %v1994, 0.0
        %vm2056 = vcmp.ge.f32.partialorder %v1997, 0.0
        %vm2057 = vcmp.ge.f32.partialorder %v2002, 0.0
        %vm2058 = vcmp.ge.f32.partialorder %v2005, 0.0
        %vm2059 = vcmp.ge.f32.partialorder %v2010, 0.0
        %vm2060 = vcmp.ge.f32.partialorder %v2013, 0.0
        %vm2061 = vcmp.ge.f32.partialorder %v2018, 0.0
        %vm2062 = vcmp.ge.f32.partialorder %v2021, 0.0
        %vm2063 = vcmp.ge.f32.partialorder %v2026, 0.0
        %vm2064 = vcmp.ge.f32.partialorder %v2029, 0.0
        %v2065 = vstv %s2032
        %v2066 = vmul.f32 %v2065, %v1906
        %v2067 = vmul.f32 %v2065, %v1909
        %v2068 = vmul.f32 %v2065, %v1914
        %v2069 = vmul.f32 %v2065, %v1917
        %v2070 = vmul.f32 %v2065, %v1922
        %v2071 = vmul.f32 %v2065, %v1925
        %v2072 = vmul.f32 %v2065, %v1930
        %v2073 = vmul.f32 %v2065, %v1933
        %v2074 = vmul.f32 %v2065, %v1938
        %v2075 = vmul.f32 %v2065, %v1941
        %v2076 = vmul.f32 %v2065, %v1946
        %v2077 = vmul.f32 %v2065, %v1949
        %v2078 = vmul.f32 %v2065, %v1954
        %v2079 = vmul.f32 %v2065, %v1957
        %v2080 = vmul.f32 %v2065, %v1962
        %v2081 = vmul.f32 %v2065, %v1965
        %v2082 = vmul.f32 %v2065, %v1970
        %v2083 = vmul.f32 %v2065, %v1973
        %v2084 = vmul.f32 %v2065, %v1978
        %v2085 = vmul.f32 %v2065, %v1981
        %v2086 = vmul.f32 %v2065, %v1986
        %v2087 = vmul.f32 %v2065, %v1989
        %v2088 = vmul.f32 %v2065, %v1994
        %v2089 = vmul.f32 %v2065, %v1997
        %v2090 = vmul.f32 %v2065, %v2002
        %v2091 = vmul.f32 %v2065, %v2005
        %v2092 = vmul.f32 %v2065, %v2010
        %v2093 = vmul.f32 %v2065, %v2013
        %v2094 = vmul.f32 %v2065, %v2018
        %v2095 = vmul.f32 %v2065, %v2021
        %v2096 = vmul.f32 %v2065, %v2026
        %v2097 = vmul.f32 %v2065, %v2029
        %v2098 = vsel %vm2033, %v1906, %v2066
        %v2099 = vsel %vm2034, %v1909, %v2067
        %v2100 = vsel %vm2035, %v1914, %v2068
        %v2101 = vsel %vm2036, %v1917, %v2069
        %v2102 = vsel %vm2037, %v1922, %v2070
        %v2103 = vsel %vm2038, %v1925, %v2071
        %v2104 = vsel %vm2039, %v1930, %v2072
        %v2105 = vsel %vm2040, %v1933, %v2073
        %v2106 = vsel %vm2041, %v1938, %v2074
        %v2107 = vsel %vm2042, %v1941, %v2075
        %v2108 = vsel %vm2043, %v1946, %v2076
        %v2109 = vsel %vm2044, %v1949, %v2077
        %v2110 = vsel %vm2045, %v1954, %v2078
        %v2111 = vsel %vm2046, %v1957, %v2079
        %v2112 = vsel %vm2047, %v1962, %v2080
        %v2113 = vsel %vm2048, %v1965, %v2081
        %v2114 = vsel %vm2049, %v1970, %v2082
        %v2115 = vsel %vm2050, %v1973, %v2083
        %v2116 = vsel %vm2051, %v1978, %v2084
        %v2117 = vsel %vm2052, %v1981, %v2085
        %v2118 = vsel %vm2053, %v1986, %v2086
        %v2119 = vsel %vm2054, %v1989, %v2087
        %v2120 = vsel %vm2055, %v1994, %v2088
        %v2121 = vsel %vm2056, %v1997, %v2089
        %v2122 = vsel %vm2057, %v2002, %v2090
        %v2123 = vsel %vm2058, %v2005, %v2091
        %v2124 = vsel %vm2059, %v2010, %v2092
        %v2125 = vsel %vm2060, %v2013, %v2093
        %v2126 = vsel %vm2061, %v2018, %v2094
        %v2127 = vsel %vm2062, %v2021, %v2095
        %v2128 = vsel %vm2063, %v2026, %v2096
        %v2129 = vsel %vm2064, %v2029, %v2097
        %v2130 = vpack.c.bf16 %v2099, %v2098
        %v2131 = vpack.c.bf16 %v2101, %v2100
        %v2132 = vpack.c.bf16 %v2103, %v2102
        %v2133 = vpack.c.bf16 %v2105, %v2104
        %v2134 = vpack.c.bf16 %v2107, %v2106
        %v2135 = vpack.c.bf16 %v2109, %v2108
        %v2136 = vpack.c.bf16 %v2111, %v2110
        %v2137 = vpack.c.bf16 %v2113, %v2112
        %v2138 = vpack.c.bf16 %v2115, %v2114
        %v2139 = vpack.c.bf16 %v2117, %v2116
        %v2140 = vpack.c.bf16 %v2119, %v2118
        %v2141 = vpack.c.bf16 %v2121, %v2120
        %v2142 = vpack.c.bf16 %v2123, %v2122
        %v2143 = vpack.c.bf16 %v2125, %v2124
        %v2144 = vpack.c.bf16 %v2127, %v2126
        %v2145 = vpack.c.bf16 %v2129, %v2128
        %v2146 = vld [vmem:[%s5] sm:$0xf]
        %v2147 = vld [vmem:[%s5 + $0x4] sm:$0xf]
        %v2148 = vld [vmem:[%s5 + $0x8] sm:$0xf]
        %v2149 = vld [vmem:[%s5 + $0xc] sm:$0xf]
        %v2150 = vld [vmem:[%s5 + $0x10] sm:$0xf]
        %v2151 = vld [vmem:[%s5 + $0x14] sm:$0xf]
        %v2152 = vld [vmem:[%s5 + $0x18] sm:$0xf]
        %v2153 = vld [vmem:[%s5 + $0x1c] sm:$0xf]
        %v2154 = vld [vmem:[%s5 + $0x20] sm:$0xf]
        %v2155 = vld [vmem:[%s5 + $0x24] sm:$0xf]
        %v2156 = vld [vmem:[%s5 + $0x28] sm:$0xf]
        %v2157 = vld [vmem:[%s5 + $0x2c] sm:$0xf]
        %v2158 = vld [vmem:[%s5 + $0x30] sm:$0xf]
        %v2159 = vld [vmem:[%s5 + $0x34] sm:$0xf]
        %v2160 = vld [vmem:[%s5 + $0x38] sm:$0xf]
        %v2161 = vld [vmem:[%s5 + $0x3c] sm:$0xf]
        %v2178 = vunpack.c.l.b16 %v2146
        %v2179 = vunpack.c.l.b16 %v2147
        %v2180 = vunpack.c.l.b16 %v2148
        %v2181 = vunpack.c.l.b16 %v2149
        %v2182 = vunpack.c.l.b16 %v2150
        %v2183 = vunpack.c.l.b16 %v2151
        %v2184 = vunpack.c.l.b16 %v2152
        %v2185 = vunpack.c.l.b16 %v2153
        %v2186 = vunpack.c.l.b16 %v2154
        %v2187 = vunpack.c.l.b16 %v2155
        %v2188 = vunpack.c.l.b16 %v2156
        %v2189 = vunpack.c.l.b16 %v2157
        %v2190 = vunpack.c.l.b16 %v2158
        %v2191 = vunpack.c.l.b16 %v2159
        %v2192 = vunpack.c.l.b16 %v2160
        %v2193 = vunpack.c.l.b16 %v2161
        %v2194 = vpack.c.b16 %v2179, %v2178
        %v2195 = vpack.c.b16 %v2181, %v2180
        %v2196 = vpack.c.b16 %v2183, %v2182
        %v2197 = vpack.c.b16 %v2185, %v2184
        %v2198 = vpack.c.b16 %v2187, %v2186
        %v2199 = vpack.c.b16 %v2189, %v2188
        %v2200 = vpack.c.b16 %v2191, %v2190
        %v2201 = vpack.c.b16 %v2193, %v2192
        %2210 = vmatprep.subr.bf16.mxu0 0
        %2211 = vmatpush1.bf16.msra.mxu0 %v2201
        %2212 = vmatprep.subr.bf16.mxu0 0
        %2213 = vmatpush1.bf16.msra.mxu0 %v2200
        %2214 = vmatprep.subr.bf16.mxu0 0
        %2215 = vmatpush1.bf16.msra.mxu0 %v2199
        %2216 = vmatprep.subr.bf16.mxu0 0
        %2217 = vmatpush1.bf16.msra.mxu0 %v2198
        %2218 = vmatprep.subr.bf16.mxu0 0
        %2219 = vmatpush1.bf16.msra.mxu0 %v2197
        %2220 = vmatprep.subr.bf16.mxu0 0
        %2221 = vmatpush1.bf16.msra.mxu0 %v2196
        %2222 = vmatprep.subr.bf16.mxu0 0
        %2223 = vmatpush1.bf16.msra.mxu0 %v2195
        %2224 = vmatprep.subr.bf16.mxu0 0
        %2225 = vmatpush1.bf16.msra.mxu0 %v2194
        %2226 = vmatprep.subr.bf16.mxu0 0
        %2227 = vmatpush2.bf16.msra.mxu0 0
        %2228 = vmatprep.subr.bf16.mxu0 0
        %2229 = vmatpush2.bf16.msra.mxu0 0
        %2230 = vmatprep.subr.bf16.mxu0 0
        %2231 = vmatpush2.bf16.msra.mxu0 0
        %2232 = vmatprep.subr.bf16.mxu0 0
        %2233 = vmatpush2.bf16.msra.mxu0 0
        %2234 = vmatprep.subr.bf16.mxu0 0
        %2235 = vmatpush2.bf16.msra.mxu0 0
        %2236 = vmatprep.subr.bf16.mxu0 0
        %2237 = vmatpush2.bf16.msra.mxu0 0
        %2238 = vmatprep.subr.bf16.mxu0 0
        %2239 = vmatpush2.bf16.msra.mxu0 0
        %2240 = vmatprep.subr.bf16.mxu0 0
        %2241 = vmatpush2.bf16.msra.mxu0 0
        %2242 = vmatprep.mubr.bf16.mxu0 0
        %2243 = vmatmul.mubr.bf16.gmra.mxu0 %v2130
        %v2244 = vpop.f32.mrf.mxu0
        %v2245 = vadd.f32 0.0, %v2244
        %v2246 = vpop.f32.mrf.mxu0
        %v2247 = vpop.f32.mrf.mxu0
        %v2248 = vadd.f32 0.0, %v2247
        %v2249 = vpop.f32.mrf.mxu0
        %2250 = vmatprep.mubr.bf16.mxu0 0
        %2251 = vmatmul.mubr.bf16.gmra.mxu0 %v2131
        %v2252 = vpop.f32.mrf.mxu0
        %v2253 = vadd.f32 0.0, %v2252
        %v2254 = vpop.f32.mrf.mxu0
        %v2255 = vpop.f32.mrf.mxu0
        %v2256 = vadd.f32 0.0, %v2255
        %v2257 = vpop.f32.mrf.mxu0
        %2258 = vmatprep.mubr.bf16.mxu0 0
        %2259 = vmatmul.mubr.bf16.gmra.mxu0 %v2132
        %v2260 = vpop.f32.mrf.mxu0
        %v2261 = vadd.f32 0.0, %v2260
        %v2262 = vpop.f32.mrf.mxu0
        %v2263 = vpop.f32.mrf.mxu0
        %v2264 = vadd.f32 0.0, %v2263
        %v2265 = vpop.f32.mrf.mxu0
        %2266 = vmatprep.mubr.bf16.mxu0 0
        %2267 = vmatmul.mubr.bf16.gmra.mxu0 %v2133
        %v2268 = vpop.f32.mrf.mxu0
        %v2269 = vadd.f32 0.0, %v2268
        %v2270 = vpop.f32.mrf.mxu0
        %v2271 = vpop.f32.mrf.mxu0
        %v2272 = vadd.f32 0.0, %v2271
        %v2273 = vpop.f32.mrf.mxu0
        %2274 = vmatprep.mubr.bf16.mxu0 0
        %2275 = vmatmul.mubr.bf16.gmra.mxu0 %v2134
        %v2276 = vpop.f32.mrf.mxu0
        %v2277 = vadd.f32 0.0, %v2276
        %v2278 = vpop.f32.mrf.mxu0
        %v2279 = vpop.f32.mrf.mxu0
        %v2280 = vadd.f32 0.0, %v2279
        %v2281 = vpop.f32.mrf.mxu0
        %2282 = vmatprep.mubr.bf16.mxu0 0
        %2283 = vmatmul.mubr.bf16.gmra.mxu0 %v2135
        %v2284 = vpop.f32.mrf.mxu0
        %v2285 = vadd.f32 0.0, %v2284
        %v2286 = vpop.f32.mrf.mxu0
        %v2287 = vpop.f32.mrf.mxu0
        %v2288 = vadd.f32 0.0, %v2287
        %v2289 = vpop.f32.mrf.mxu0
        %2290 = vmatprep.mubr.bf16.mxu0 0
        %2291 = vmatmul.mubr.bf16.gmra.mxu0 %v2136
        %v2292 = vpop.f32.mrf.mxu0
        %v2293 = vadd.f32 0.0, %v2292
        %v2294 = vpop.f32.mrf.mxu0
        %v2295 = vpop.f32.mrf.mxu0
        %v2296 = vadd.f32 0.0, %v2295
        %v2297 = vpop.f32.mrf.mxu0
        %2298 = vmatprep.mubr.bf16.mxu0 0
        %2299 = vmatmul.mubr.bf16.gmra.mxu0 %v2137
        %v2300 = vpop.f32.mrf.mxu0
        %v2301 = vadd.f32 0.0, %v2300
        %v2302 = vpop.f32.mrf.mxu0
        %v2303 = vpop.f32.mrf.mxu0
        %v2304 = vadd.f32 0.0, %v2303
        %v2305 = vpop.f32.mrf.mxu0
        %2306 = vmatprep.mubr.bf16.mxu0 0
        %2307 = vmatmul.mubr.bf16.gmra.mxu0 %v2138
        %v2308 = vpop.f32.mrf.mxu0
        %v2309 = vadd.f32 0.0, %v2308
        %v2310 = vpop.f32.mrf.mxu0
        %v2311 = vpop.f32.mrf.mxu0
        %v2312 = vadd.f32 0.0, %v2311
        %v2313 = vpop.f32.mrf.mxu0
        %2314 = vmatprep.mubr.bf16.mxu0 0
        %2315 = vmatmul.mubr.bf16.gmra.mxu0 %v2139
        %v2316 = vpop.f32.mrf.mxu0
        %v2317 = vadd.f32 0.0, %v2316
        %v2318 = vpop.f32.mrf.mxu0
        %v2319 = vpop.f32.mrf.mxu0
        %v2320 = vadd.f32 0.0, %v2319
        %v2321 = vpop.f32.mrf.mxu0
        %2322 = vmatprep.mubr.bf16.mxu0 0
        %2323 = vmatmul.mubr.bf16.gmra.mxu0 %v2140
        %v2324 = vpop.f32.mrf.mxu0
        %v2325 = vadd.f32 0.0, %v2324
        %v2326 = vpop.f32.mrf.mxu0
        %v2327 = vpop.f32.mrf.mxu0
        %v2328 = vadd.f32 0.0, %v2327
        %v2329 = vpop.f32.mrf.mxu0
        %2330 = vmatprep.mubr.bf16.mxu0 0
        %2331 = vmatmul.mubr.bf16.gmra.mxu0 %v2141
        %v2332 = vpop.f32.mrf.mxu0
        %v2333 = vadd.f32 0.0, %v2332
        %v2334 = vpop.f32.mrf.mxu0
        %v2335 = vpop.f32.mrf.mxu0
        %v2336 = vadd.f32 0.0, %v2335
        %v2337 = vpop.f32.mrf.mxu0
        %2338 = vmatprep.mubr.bf16.mxu0 0
        %2339 = vmatmul.mubr.bf16.gmra.mxu0 %v2142
        %v2340 = vpop.f32.mrf.mxu0
        %v2341 = vadd.f32 0.0, %v2340
        %v2342 = vpop.f32.mrf.mxu0
        %v2343 = vpop.f32.mrf.mxu0
        %v2344 = vadd.f32 0.0, %v2343
        %v2345 = vpop.f32.mrf.mxu0
        %2346 = vmatprep.mubr.bf16.mxu0 0
        %2347 = vmatmul.mubr.bf16.gmra.mxu0 %v2143
        %v2348 = vpop.f32.mrf.mxu0
        %v2349 = vadd.f32 0.0, %v2348
        %v2350 = vpop.f32.mrf.mxu0
        %v2351 = vpop.f32.mrf.mxu0
        %v2352 = vadd.f32 0.0, %v2351
        %v2353 = vpop.f32.mrf.mxu0
        %2354 = vmatprep.mubr.bf16.mxu0 0
        %2355 = vmatmul.mubr.bf16.gmra.mxu0 %v2144
        %v2356 = vpop.f32.mrf.mxu0
        %v2357 = vadd.f32 0.0, %v2356
        %v2358 = vpop.f32.mrf.mxu0
        %v2359 = vpop.f32.mrf.mxu0
        %v2360 = vadd.f32 0.0, %v2359
        %v2361 = vpop.f32.mrf.mxu0
        %2362 = vmatprep.mubr.bf16.mxu0 0
        %2363 = vmatmul.mubr.bf16.gmra.mxu0 %v2145
        %v2364 = vpop.f32.mrf.mxu0
        %v2365 = vadd.f32 0.0, %v2364
        %v2366 = vpop.f32.mrf.mxu0
        %v2367 = vpop.f32.mrf.mxu0
        %v2368 = vadd.f32 0.0, %v2367
        %v2369 = vpop.f32.mrf.mxu0
        %2370 = vdwg.mxu0
        %v2371 = vsub.f32 0.0, %v2245
        %v2372 = vsub.f32 0.0, %v2248
        %v2373 = vsub.f32 0.0, %v2253
        %v2374 = vsub.f32 0.0, %v2256
        %v2375 = vsub.f32 0.0, %v2261
        %v2376 = vsub.f32 0.0, %v2264
        %v2377 = vsub.f32 0.0, %v2269
        %v2378 = vsub.f32 0.0, %v2272
        %v2379 = vsub.f32 0.0, %v2277
        %v2380 = vsub.f32 0.0, %v2280
        %v2381 = vsub.f32 0.0, %v2285
        %v2382 = vsub.f32 0.0, %v2288
        %v2383 = vsub.f32 0.0, %v2293
        %v2384 = vsub.f32 0.0, %v2296
        %v2385 = vsub.f32 0.0, %v2301
        %v2386 = vsub.f32 0.0, %v2304
        %v2387 = vsub.f32 0.0, %v2309
        %v2388 = vsub.f32 0.0, %v2312
        %v2389 = vsub.f32 0.0, %v2317
        %v2390 = vsub.f32 0.0, %v2320
        %v2391 = vsub.f32 0.0, %v2325
        %v2392 = vsub.f32 0.0, %v2328
        %v2393 = vsub.f32 0.0, %v2333
        %v2394 = vsub.f32 0.0, %v2336
        %v2395 = vsub.f32 0.0, %v2341
        %v2396 = vsub.f32 0.0, %v2344
        %v2397 = vsub.f32 0.0, %v2349
        %v2398 = vsub.f32 0.0, %v2352
        %v2399 = vsub.f32 0.0, %v2357
        %v2400 = vsub.f32 0.0, %v2360
        %v2401 = vsub.f32 0.0, %v2365
        %v2402 = vsub.f32 0.0, %v2368
        %v2403 = vmul.f32 %v2371, 1.442695
        %v2404 = vpow.pop %v2403
        %v2405 = vmul.f32 %v2372, 1.442695
        %v2406 = vpow.pop %v2405
        %v2407 = vmul.f32 %v2373, 1.442695
        %v2408 = vpow.pop %v2407
        %v2409 = vmul.f32 %v2374, 1.442695
        %v2410 = vpow.pop %v2409
        %v2411 = vmul.f32 %v2375, 1.442695
        %v2412 = vpow.pop %v2411
        %v2413 = vmul.f32 %v2376, 1.442695
        %v2414 = vpow.pop %v2413
        %v2415 = vmul.f32 %v2377, 1.442695
        %v2416 = vpow.pop %v2415
        %v2417 = vmul.f32 %v2378, 1.442695
        %v2418 = vpow.pop %v2417
        %v2419 = vmul.f32 %v2379, 1.442695
        %v2420 = vpow.pop %v2419
        %v2421 = vmul.f32 %v2380, 1.442695
        %v2422 = vpow.pop %v2421
        %v2423 = vmul.f32 %v2381, 1.442695
        %v2424 = vpow.pop %v2423
        %v2425 = vmul.f32 %v2382, 1.442695
        %v2426 = vpow.pop %v2425
        %v2427 = vmul.f32 %v2383, 1.442695
        %v2428 = vpow.pop %v2427
        %v2429 = vmul.f32 %v2384, 1.442695
        %v2430 = vpow.pop %v2429
        %v2431 = vmul.f32 %v2385, 1.442695
        %v2432 = vpow.pop %v2431
        %v2433 = vmul.f32 %v2386, 1.442695
        %v2434 = vpow.pop %v2433
        %v2435 = vmul.f32 %v2387, 1.442695
        %v2436 = vpow.pop %v2435
        %v2437 = vmul.f32 %v2388, 1.442695
        %v2438 = vpow.pop %v2437
        %v2439 = vmul.f32 %v2389, 1.442695
        %v2440 = vpow.pop %v2439
        %v2441 = vmul.f32 %v2390, 1.442695
        %v2442 = vpow.pop %v2441
        %v2443 = vmul.f32 %v2391, 1.442695
        %v2444 = vpow.pop %v2443
        %v2445 = vmul.f32 %v2392, 1.442695
        %v2446 = vpow.pop %v2445
        %v2447 = vmul.f32 %v2393, 1.442695
        %v2448 = vpow.pop %v2447
        %v2449 = vmul.f32 %v2394, 1.442695
        %v2450 = vpow.pop %v2449
        %v2451 = vmul.f32 %v2395, 1.442695
        %v2452 = vpow.pop %v2451
        %v2453 = vmul.f32 %v2396, 1.442695
        %v2454 = vpow.pop %v2453
        %v2455 = vmul.f32 %v2397, 1.442695
        %v2456 = vpow.pop %v2455
        %v2457 = vmul.f32 %v2398, 1.442695
        %v2458 = vpow.pop %v2457
        %v2459 = vmul.f32 %v2399, 1.442695
        %v2460 = vpow.pop %v2459
        %v2461 = vmul.f32 %v2400, 1.442695
        %v2462 = vpow.pop %v2461
        %v2463 = vmul.f32 %v2401, 1.442695
        %v2464 = vpow.pop %v2463
        %v2465 = vmul.f32 %v2402, 1.442695
        %v2466 = vpow.pop %v2465
        %v2467 = vadd.f32 %v2404, 1.0
        %v2468 = vadd.f32 %v2406, 1.0
        %v2469 = vadd.f32 %v2408, 1.0
        %v2470 = vadd.f32 %v2410, 1.0
        %v2471 = vadd.f32 %v2412, 1.0
        %v2472 = vadd.f32 %v2414, 1.0
        %v2473 = vadd.f32 %v2416, 1.0
        %v2474 = vadd.f32 %v2418, 1.0
        %v2475 = vadd.f32 %v2420, 1.0
        %v2476 = vadd.f32 %v2422, 1.0
        %v2477 = vadd.f32 %v2424, 1.0
        %v2478 = vadd.f32 %v2426, 1.0
        %v2479 = vadd.f32 %v2428, 1.0
        %v2480 = vadd.f32 %v2430, 1.0
        %v2481 = vadd.f32 %v2432, 1.0
        %v2482 = vadd.f32 %v2434, 1.0
        %v2483 = vadd.f32 %v2436, 1.0
        %v2484 = vadd.f32 %v2438, 1.0
        %v2485 = vadd.f32 %v2440, 1.0
        %v2486 = vadd.f32 %v2442, 1.0
        %v2487 = vadd.f32 %v2444, 1.0
        %v2488 = vadd.f32 %v2446, 1.0
        %v2489 = vadd.f32 %v2448, 1.0
        %v2490 = vadd.f32 %v2450, 1.0
        %v2491 = vadd.f32 %v2452, 1.0
        %v2492 = vadd.f32 %v2454, 1.0
        %v2493 = vadd.f32 %v2456, 1.0
        %v2494 = vadd.f32 %v2458, 1.0
        %v2495 = vadd.f32 %v2460, 1.0
        %v2496 = vadd.f32 %v2462, 1.0
        %v2497 = vadd.f32 %v2464, 1.0
        %v2498 = vadd.f32 %v2466, 1.0
        %v2499 = vrcp.pop %v2467
        %v2500 = vrcp.pop %v2468
        %v2501 = vrcp.pop %v2469
        %v2502 = vrcp.pop %v2470
        %v2503 = vrcp.pop %v2471
        %v2504 = vrcp.pop %v2472
        %v2505 = vrcp.pop %v2473
        %v2506 = vrcp.pop %v2474
        %v2507 = vrcp.pop %v2475
        %v2508 = vrcp.pop %v2476
        %v2509 = vrcp.pop %v2477
        %v2510 = vrcp.pop %v2478
        %v2511 = vrcp.pop %v2479
        %v2512 = vrcp.pop %v2480
        %v2513 = vrcp.pop %v2481
        %v2514 = vrcp.pop %v2482
        %v2515 = vrcp.pop %v2483
        %v2516 = vrcp.pop %v2484
        %v2517 = vrcp.pop %v2485
        %v2518 = vrcp.pop %v2486
        %v2519 = vrcp.pop %v2487
        %v2520 = vrcp.pop %v2488
        %v2521 = vrcp.pop %v2489
        %v2522 = vrcp.pop %v2490
        %v2523 = vrcp.pop %v2491
        %v2524 = vrcp.pop %v2492
        %v2525 = vrcp.pop %v2493
        %v2526 = vrcp.pop %v2494
        %v2527 = vrcp.pop %v2495
        %v2528 = vrcp.pop %v2496
        %v2529 = vrcp.pop %v2497
        %v2530 = vrcp.pop %v2498
        %v2531 = vmul.f32 %v2499, %v2098
        %v2532 = vmul.f32 %v2500, %v2099
        %v2533 = vmul.f32 %v2501, %v2100
        %v2534 = vmul.f32 %v2502, %v2101
        %v2535 = vmul.f32 %v2503, %v2102
        %v2536 = vmul.f32 %v2504, %v2103
        %v2537 = vmul.f32 %v2505, %v2104
        %v2538 = vmul.f32 %v2506, %v2105
        %v2539 = vmul.f32 %v2507, %v2106
        %v2540 = vmul.f32 %v2508, %v2107
        %v2541 = vmul.f32 %v2509, %v2108
        %v2542 = vmul.f32 %v2510, %v2109
        %v2543 = vmul.f32 %v2511, %v2110
        %v2544 = vmul.f32 %v2512, %v2111
        %v2545 = vmul.f32 %v2513, %v2112
        %v2546 = vmul.f32 %v2514, %v2113
        %v2547 = vmul.f32 %v2515, %v2114
        %v2548 = vmul.f32 %v2516, %v2115
        %v2549 = vmul.f32 %v2517, %v2116
        %v2550 = vmul.f32 %v2518, %v2117
        %v2551 = vmul.f32 %v2519, %v2118
        %v2552 = vmul.f32 %v2520, %v2119
        %v2553 = vmul.f32 %v2521, %v2120
        %v2554 = vmul.f32 %v2522, %v2121
        %v2555 = vmul.f32 %v2523, %v2122
        %v2556 = vmul.f32 %v2524, %v2123
        %v2557 = vmul.f32 %v2525, %v2124
        %v2558 = vmul.f32 %v2526, %v2125
        %v2559 = vmul.f32 %v2527, %v2126
        %v2560 = vmul.f32 %v2528, %v2127
        %v2561 = vmul.f32 %v2529, %v2128
        %v2562 = vmul.f32 %v2530, %v2129
        %v2563 = vpack.c.bf16 %v2532, %v2531
        %v2564 = vpack.c.bf16 %v2534, %v2533
        %v2565 = vpack.c.bf16 %v2536, %v2535
        %v2566 = vpack.c.bf16 %v2538, %v2537
        %v2567 = vpack.c.bf16 %v2540, %v2539
        %v2568 = vpack.c.bf16 %v2542, %v2541
        %v2569 = vpack.c.bf16 %v2544, %v2543
        %v2570 = vpack.c.bf16 %v2546, %v2545
        %v2571 = vpack.c.bf16 %v2548, %v2547
        %v2572 = vpack.c.bf16 %v2550, %v2549
        %v2573 = vpack.c.bf16 %v2552, %v2551
        %v2574 = vpack.c.bf16 %v2554, %v2553
        %v2575 = vpack.c.bf16 %v2556, %v2555
        %v2576 = vpack.c.bf16 %v2558, %v2557
        %v2577 = vpack.c.bf16 %v2560, %v2559
        %v2578 = vpack.c.bf16 %v2562, %v2561
        %v2579 = vld [vmem:[%s6] sm:$0xf]
        %v2580 = vld [vmem:[%s6 + $0x4] sm:$0xf]
        %v2581 = vld [vmem:[%s6 + $0x8] sm:$0xf]
        %v2582 = vld [vmem:[%s6 + $0xc] sm:$0xf]
        %v2583 = vld [vmem:[%s6 + $0x10] sm:$0xf]
        %v2584 = vld [vmem:[%s6 + $0x14] sm:$0xf]
        %v2585 = vld [vmem:[%s6 + $0x18] sm:$0xf]
        %v2586 = vld [vmem:[%s6 + $0x1c] sm:$0xf]
        %v2587 = vld [vmem:[%s6 + $0x20] sm:$0xf]
        %v2588 = vld [vmem:[%s6 + $0x24] sm:$0xf]
        %v2589 = vld [vmem:[%s6 + $0x28] sm:$0xf]
        %v2590 = vld [vmem:[%s6 + $0x2c] sm:$0xf]
        %v2591 = vld [vmem:[%s6 + $0x30] sm:$0xf]
        %v2592 = vld [vmem:[%s6 + $0x34] sm:$0xf]
        %v2593 = vld [vmem:[%s6 + $0x38] sm:$0xf]
        %v2594 = vld [vmem:[%s6 + $0x3c] sm:$0xf]
        %v2611 = vunpack.c.l.b16 %v2579
        %v2612 = vunpack.c.l.b16 %v2580
        %v2613 = vunpack.c.l.b16 %v2581
        %v2614 = vunpack.c.l.b16 %v2582
        %v2615 = vunpack.c.l.b16 %v2583
        %v2616 = vunpack.c.l.b16 %v2584
        %v2617 = vunpack.c.l.b16 %v2585
        %v2618 = vunpack.c.l.b16 %v2586
        %v2619 = vunpack.c.l.b16 %v2587
        %v2620 = vunpack.c.l.b16 %v2588
        %v2621 = vunpack.c.l.b16 %v2589
        %v2622 = vunpack.c.l.b16 %v2590
        %v2623 = vunpack.c.l.b16 %v2591
        %v2624 = vunpack.c.l.b16 %v2592
        %v2625 = vunpack.c.l.b16 %v2593
        %v2626 = vunpack.c.l.b16 %v2594
        %v2627 = vpack.c.b16 %v2612, %v2611
        %v2628 = vpack.c.b16 %v2614, %v2613
        %v2629 = vpack.c.b16 %v2616, %v2615
        %v2630 = vpack.c.b16 %v2618, %v2617
        %v2631 = vpack.c.b16 %v2620, %v2619
        %v2632 = vpack.c.b16 %v2622, %v2621
        %v2633 = vpack.c.b16 %v2624, %v2623
        %v2634 = vpack.c.b16 %v2626, %v2625
        %2643 = vmatprep.subr.bf16.mxu0 0
        %2644 = vmatpush1.bf16.msra.mxu0 %v2634
        %2645 = vmatprep.subr.bf16.mxu0 0
        %2646 = vmatpush1.bf16.msra.mxu0 %v2633
        %2647 = vmatprep.subr.bf16.mxu0 0
        %2648 = vmatpush1.bf16.msra.mxu0 %v2632
        %2649 = vmatprep.subr.bf16.mxu0 0
        %2650 = vmatpush1.bf16.msra.mxu0 %v2631
        %2651 = vmatprep.subr.bf16.mxu0 0
        %2652 = vmatpush1.bf16.msra.mxu0 %v2630
        %2653 = vmatprep.subr.bf16.mxu0 0
        %2654 = vmatpush1.bf16.msra.mxu0 %v2629
        %2655 = vmatprep.subr.bf16.mxu0 0
        %2656 = vmatpush1.bf16.msra.mxu0 %v2628
        %2657 = vmatprep.subr.bf16.mxu0 0
        %2658 = vmatpush1.bf16.msra.mxu0 %v2627
        %2659 = vmatprep.subr.bf16.mxu0 0
        %2660 = vmatpush2.bf16.msra.mxu0 0
        %2661 = vmatprep.subr.bf16.mxu0 0
        %2662 = vmatpush2.bf16.msra.mxu0 0
        %2663 = vmatprep.subr.bf16.mxu0 0
        %2664 = vmatpush2.bf16.msra.mxu0 0
        %2665 = vmatprep.subr.bf16.mxu0 0
        %2666 = vmatpush2.bf16.msra.mxu0 0
        %2667 = vmatprep.subr.bf16.mxu0 0
        %2668 = vmatpush2.bf16.msra.mxu0 0
        %2669 = vmatprep.subr.bf16.mxu0 0
        %2670 = vmatpush2.bf16.msra.mxu0 0
        %2671 = vmatprep.subr.bf16.mxu0 0
        %2672 = vmatpush2.bf16.msra.mxu0 0
        %2673 = vmatprep.subr.bf16.mxu0 0
        %2674 = vmatpush2.bf16.msra.mxu0 0
        %2675 = vmatprep.mubr.bf16.mxu0 0
        %2676 = vmatmul.mubr.bf16.gmra.mxu0 %v2563
        %v2677 = vpop.f32.mrf.mxu0
        %v2678 = vadd.f32 0.0, %v2677
        %v2679 = vpop.f32.mrf.mxu0
        %v2680 = vpop.f32.mrf.mxu0
        %v2681 = vadd.f32 0.0, %v2680
        %v2682 = vpop.f32.mrf.mxu0
        %2683 = vmatprep.mubr.bf16.mxu0 0
        %2684 = vmatmul.mubr.bf16.gmra.mxu0 %v2564
        %v2685 = vpop.f32.mrf.mxu0
        %v2686 = vadd.f32 0.0, %v2685
        %v2687 = vpop.f32.mrf.mxu0
        %v2688 = vpop.f32.mrf.mxu0
        %v2689 = vadd.f32 0.0, %v2688
        %v2690 = vpop.f32.mrf.mxu0
        %2691 = vmatprep.mubr.bf16.mxu0 0
        %2692 = vmatmul.mubr.bf16.gmra.mxu0 %v2565
        %v2693 = vpop.f32.mrf.mxu0
        %v2694 = vadd.f32 0.0, %v2693
        %v2695 = vpop.f32.mrf.mxu0
        %v2696 = vpop.f32.mrf.mxu0
        %v2697 = vadd.f32 0.0, %v2696
        %v2698 = vpop.f32.mrf.mxu0
        %2699 = vmatprep.mubr.bf16.mxu0 0
        %2700 = vmatmul.mubr.bf16.gmra.mxu0 %v2566
        %v2701 = vpop.f32.mrf.mxu0
        %v2702 = vadd.f32 0.0, %v2701
        %v2703 = vpop.f32.mrf.mxu0
        %v2704 = vpop.f32.mrf.mxu0
        %v2705 = vadd.f32 0.0, %v2704
        %v2706 = vpop.f32.mrf.mxu0
        %2707 = vmatprep.mubr.bf16.mxu0 0
        %2708 = vmatmul.mubr.bf16.gmra.mxu0 %v2567
        %v2709 = vpop.f32.mrf.mxu0
        %v2710 = vadd.f32 0.0, %v2709
        %v2711 = vpop.f32.mrf.mxu0
        %v2712 = vpop.f32.mrf.mxu0
        %v2713 = vadd.f32 0.0, %v2712
        %v2714 = vpop.f32.mrf.mxu0
        %2715 = vmatprep.mubr.bf16.mxu0 0
        %2716 = vmatmul.mubr.bf16.gmra.mxu0 %v2568
        %v2717 = vpop.f32.mrf.mxu0
        %v2718 = vadd.f32 0.0, %v2717
        %v2719 = vpop.f32.mrf.mxu0
        %v2720 = vpop.f32.mrf.mxu0
        %v2721 = vadd.f32 0.0, %v2720
        %v2722 = vpop.f32.mrf.mxu0
        %2723 = vmatprep.mubr.bf16.mxu0 0
        %2724 = vmatmul.mubr.bf16.gmra.mxu0 %v2569
        %v2725 = vpop.f32.mrf.mxu0
        %v2726 = vadd.f32 0.0, %v2725
        %v2727 = vpop.f32.mrf.mxu0
        %v2728 = vpop.f32.mrf.mxu0
        %v2729 = vadd.f32 0.0, %v2728
        %v2730 = vpop.f32.mrf.mxu0
        %2731 = vmatprep.mubr.bf16.mxu0 0
        %2732 = vmatmul.mubr.bf16.gmra.mxu0 %v2570
        %v2733 = vpop.f32.mrf.mxu0
        %v2734 = vadd.f32 0.0, %v2733
        %v2735 = vpop.f32.mrf.mxu0
        %v2736 = vpop.f32.mrf.mxu0
        %v2737 = vadd.f32 0.0, %v2736
        %v2738 = vpop.f32.mrf.mxu0
        %2739 = vmatprep.mubr.bf16.mxu0 0
        %2740 = vmatmul.mubr.bf16.gmra.mxu0 %v2571
        %v2741 = vpop.f32.mrf.mxu0
        %v2742 = vadd.f32 0.0, %v2741
        %v2743 = vpop.f32.mrf.mxu0
        %v2744 = vpop.f32.mrf.mxu0
        %v2745 = vadd.f32 0.0, %v2744
        %v2746 = vpop.f32.mrf.mxu0
        %2747 = vmatprep.mubr.bf16.mxu0 0
        %2748 = vmatmul.mubr.bf16.gmra.mxu0 %v2572
        %v2749 = vpop.f32.mrf.mxu0
        %v2750 = vadd.f32 0.0, %v2749
        %v2751 = vpop.f32.mrf.mxu0
        %v2752 = vpop.f32.mrf.mxu0
        %v2753 = vadd.f32 0.0, %v2752
        %v2754 = vpop.f32.mrf.mxu0
        %2755 = vmatprep.mubr.bf16.mxu0 0
        %2756 = vmatmul.mubr.bf16.gmra.mxu0 %v2573
        %v2757 = vpop.f32.mrf.mxu0
        %v2758 = vadd.f32 0.0, %v2757
        %v2759 = vpop.f32.mrf.mxu0
        %v2760 = vpop.f32.mrf.mxu0
        %v2761 = vadd.f32 0.0, %v2760
        %v2762 = vpop.f32.mrf.mxu0
        %2763 = vmatprep.mubr.bf16.mxu0 0
        %2764 = vmatmul.mubr.bf16.gmra.mxu0 %v2574
        %v2765 = vpop.f32.mrf.mxu0
        %v2766 = vadd.f32 0.0, %v2765
        %v2767 = vpop.f32.mrf.mxu0
        %v2768 = vpop.f32.mrf.mxu0
        %v2769 = vadd.f32 0.0, %v2768
        %v2770 = vpop.f32.mrf.mxu0
        %2771 = vmatprep.mubr.bf16.mxu0 0
        %2772 = vmatmul.mubr.bf16.gmra.mxu0 %v2575
        %v2773 = vpop.f32.mrf.mxu0
        %v2774 = vadd.f32 0.0, %v2773
        %v2775 = vpop.f32.mrf.mxu0
        %v2776 = vpop.f32.mrf.mxu0
        %v2777 = vadd.f32 0.0, %v2776
        %v2778 = vpop.f32.mrf.mxu0
        %2779 = vmatprep.mubr.bf16.mxu0 0
        %2780 = vmatmul.mubr.bf16.gmra.mxu0 %v2576
        %v2781 = vpop.f32.mrf.mxu0
        %v2782 = vadd.f32 0.0, %v2781
        %v2783 = vpop.f32.mrf.mxu0
        %v2784 = vpop.f32.mrf.mxu0
        %v2785 = vadd.f32 0.0, %v2784
        %v2786 = vpop.f32.mrf.mxu0
        %2787 = vmatprep.mubr.bf16.mxu0 0
        %2788 = vmatmul.mubr.bf16.gmra.mxu0 %v2577
        %v2789 = vpop.f32.mrf.mxu0
        %v2790 = vadd.f32 0.0, %v2789
        %v2791 = vpop.f32.mrf.mxu0
        %v2792 = vpop.f32.mrf.mxu0
        %v2793 = vadd.f32 0.0, %v2792
        %v2794 = vpop.f32.mrf.mxu0
        %2795 = vmatprep.mubr.bf16.mxu0 0
        %2796 = vmatmul.mubr.bf16.gmra.mxu0 %v2578
        %v2797 = vpop.f32.mrf.mxu0
        %v2798 = vadd.f32 0.0, %v2797
        %v2799 = vpop.f32.mrf.mxu0
        %v2800 = vpop.f32.mrf.mxu0
        %v2801 = vadd.f32 0.0, %v2800
        %v2802 = vpop.f32.mrf.mxu0
        %2803 = vdwg.mxu0
        %2804 = vst [vmem:[%s328] sm:$0xff] %v2678
        %2805 = vst [vmem:[%s328 + $0x8] sm:$0xff] %v2681
        %2806 = vst [vmem:[%s328 + $0x10] sm:$0xff] %v2686
        %2807 = vst [vmem:[%s328 + $0x18] sm:$0xff] %v2689
        %2808 = vst [vmem:[%s328 + $0x20] sm:$0xff] %v2694
        %2809 = vst [vmem:[%s328 + $0x28] sm:$0xff] %v2697
        %2810 = vst [vmem:[%s328 + $0x30] sm:$0xff] %v2702
        %2811 = vst [vmem:[%s328 + $0x38] sm:$0xff] %v2705
        %2812 = vst [vmem:[%s328 + $0x40] sm:$0xff] %v2710
        %2813 = vst [vmem:[%s328 + $0x48] sm:$0xff] %v2713
        %2814 = vst [vmem:[%s328 + $0x50] sm:$0xff] %v2718
        %2815 = vst [vmem:[%s328 + $0x58] sm:$0xff] %v2721
        %2816 = vst [vmem:[%s328 + $0x60] sm:$0xff] %v2726
        %2817 = vst [vmem:[%s328 + $0x68] sm:$0xff] %v2729
        %2818 = vst [vmem:[%s328 + $0x70] sm:$0xff] %v2734
        %2819 = vst [vmem:[%s328 + $0x78] sm:$0xff] %v2737
        %2820 = vst [vmem:[%s328 + $0x80] sm:$0xff] %v2742
        %2821 = vst [vmem:[%s328 + $0x88] sm:$0xff] %v2745
        %2822 = vst [vmem:[%s328 + $0x90] sm:$0xff] %v2750
        %2823 = vst [vmem:[%s328 + $0x98] sm:$0xff] %v2753
        %2824 = vst [vmem:[%s328 + $0xa0] sm:$0xff] %v2758
        %2825 = vst [vmem:[%s328 + $0xa8] sm:$0xff] %v2761
        %2826 = vst [vmem:[%s328 + $0xb0] sm:$0xff] %v2766
        %2827 = vst [vmem:[%s328 + $0xb8] sm:$0xff] %v2769
        %2828 = vst [vmem:[%s328 + $0xc0] sm:$0xff] %v2774
        %2829 = vst [vmem:[%s328 + $0xc8] sm:$0xff] %v2777
        %2830 = vst [vmem:[%s328 + $0xd0] sm:$0xff] %v2782
        %2831 = vst [vmem:[%s328 + $0xd8] sm:$0xff] %v2785
        %2832 = vst [vmem:[%s328 + $0xe0] sm:$0xff] %v2790
        %2833 = vst [vmem:[%s328 + $0xe8] sm:$0xff] %v2793
        %2834 = vst [vmem:[%s328 + $0xf0] sm:$0xff] %v2798
        %2835 = vst [vmem:[%s328 + $0xf8] sm:$0xff] %v2801
        %s2836 = sand.u32 %s207, 1
        %s2837 = scalar_lea.sflag [#allocation4], %s2836
        %s2838 = sand.u32 %s207, 1
        %s2839 = smul.addr %s2838, 256
        %s2840 = scalar_lea.vmem [#allocation3], %s2839
        // Predicated region
        $region49: #{tpu_custom_call.1} parent=47 // pred_check
          %p2841 = pneg %p217
        $region50: #{tpu_custom_call.1} parent=47 // pred_check_branch
          %2843 = sbr.rel (%p2841) target = $region52
        $region51: #{tpu_custom_call.1} parent=47 // pred_region
          %s2844 = smul.u32 32, %s27
          %s2846 = ssub.s32 4096, 4096
          %2847 = vsyncadd %s2837, %s2846
          %s2848 = smul.addr %s26, 32
          %s2849 = sadd.s32 %s2844, %s2848
          %s2850 = smul.addr %s2849, 128
          %s2851 = scalar_lea.hbm %s7, %s2850
          %s2852 = sshll.u32 %s2840, 4
          %s2853 = int_to_ptr.vmem [resolvable:$true] %s2852
          %2858 = dma.vmem_to_hbm [thread:$0]  %s2853, 4096, %s2851, %s2837, 128, 128, 8
        $region52: #{tpu_custom_call.1} parent=47 // pred_fallthru
          _
      $region48: #{tpu_custom_call.1} parent=5 // pred_fallthru
        _
      %p2859 = scmp.le.s32.totalorder 2, %s17
      // Predicated region
      $region53: #{tpu_custom_call.1} parent=5 // pred_check
        %p2860 = pneg %p2859
      $region54: #{tpu_custom_call.1} parent=5 // pred_check_branch
        %2862 = sbr.rel (%p2860) target = $region56
      $region55: #{tpu_custom_call.1} parent=5 // pred_region
        %s2863 = ssub.s32 %s17, 2
        // Predicated region
        $region57: #{tpu_custom_call.1} parent=55 // pred_check
          %p2864 = pneg %p223
        $region58: #{tpu_custom_call.1} parent=55 // pred_check_branch
          %2866 = sbr.rel (%p2864) target = $region60
        $region59: #{tpu_custom_call.1} parent=55 // pred_region
          %s2867 = sand.u32 %s208, 1
          %s2868 = scalar_lea.sflag [#allocation4], %s2867
          %s2869 = sand.u32 %s208, 1
          %s2870 = smul.addr %s2869, 256
          %s2871 = scalar_lea.vmem [#allocation3], %s2870
          %2872 = dma.done %s2868, 4096
        $region60: #{tpu_custom_call.1} parent=55 // pred_fallthru
          _
      $region56: #{tpu_custom_call.1} parent=5 // pred_fallthru
        _
    $region6: #{tpu_custom_call.1} parent=1 // loop_footer
      %s21 = sadd.s32 1, %s17
    $region7: #{tpu_custom_call.1} parent=1 // loop_footer_branch
      %16 = sbr.rel target = $region3
    $region8: #{tpu_custom_call.1} parent=1 // loop_exit
      _
    %2873 = vsyncpa [#allocation4], 1
    %s2874 = scalar_lea.sflag [#allocation4], 1
    %2875 = vsyncpa %s2874, 1

// kernel: tpu_custom_call.1
$region0: #{tpu_custom_call.1}
  #allocation0 [shape = 'u32[]', space=smem, size = 0x4, offset = 0x4, fixed_abs, tag = 'smem constant byte address 0x4 - core index']
  #allocation1 [shape = 'u32[144,128]{1,0:T(1,128)}', space=vmem, size = 0x12000, scoped, tag = 'internal scratch']
  #allocation2 [shape = 'f32[1,1]{1,0:T(1,128)S(6)}', space=smem, size = 0x200, scoped, tag = 'scoped memory for tpu_custom_call.1']
  %s0 = inlined_call_operand.hbm [shape: f32[256,128], index: 0, kind: input, shape index: {}]
  %s1 = inlined_call_operand.hbm [shape: bf16[128,128], index: 1, kind: input, shape index: {}]
  %s2 = inlined_call_operand.vmem [shape: f32[1,128], index: 2, kind: input, shape index: {}]
  %s3 = inlined_call_operand.<no memory space> [shape: f32[1,1], index: 3, kind: input, shape index: {}]
  %s4 = inlined_call_operand.hbm [shape: bf16[128,128], index: 4, kind: input, shape index: {}]
  %s5 = inlined_call_operand.hbm [shape: bf16[128,128], index: 5, kind: input, shape index: {}]
  %s6 = inlined_call_operand.hbm [shape: f32[256,128], index: 6, kind: output, shape index: {}]
  %s7 = sld [smem:[#allocation0]]
  $region50: #{tpu_custom_call.1} parent=0
    _
  %s9 = ssub.s32 1, %s7
  %s10 = scalar_select 0, %s9, %s7
  %11 = sst [smem:[#allocation2]] %s3
  $region1: #{tpu_custom_call.1} parent=0
    #allocation3 [shape = 'u8[131072]{0}', space=vmem, size = 0x20000, scoped, tag = 'input window, operand 0, single buffered']
    #allocation4 [shape = 's32[1]{0}', space=sflag, size = 0x4, scoped, tag = 'scoped memory for tpu_custom_call.1']
    #allocation5 [shape = 's32[1]{0}', space=sflag, size = 0x4, scoped, tag = 'scoped memory for tpu_custom_call.1']
    #allocation6 [shape = 'u8[32768]{0}', space=vmem, size = 0x8000, scoped, tag = 'input window, operand 1, single buffered']
    #allocation7 [shape = 's32[1]{0}', space=sflag, size = 0x4, scoped, tag = 'scoped memory for tpu_custom_call.1']
    #allocation8 [shape = 'u8[32768]{0}', space=vmem, size = 0x8000, scoped, tag = 'input window, operand 4, single buffered']
    #allocation9 [shape = 'u8[32768]{0}', space=vmem, size = 0x8000, scoped, tag = 'input window, operand 5, single buffered']
    #allocation10 [shape = 's32[1]{0}', space=sflag, size = 0x4, scoped, tag = 'scoped memory for tpu_custom_call.1']
    #allocation11 [shape = 'u8[131072]{0}', space=vmem, size = 0x20000, scoped, tag = 'output window, operand 0, single buffered']
    %12 = vsyncpa [#allocation4], 0
    %13 = vsyncpa [#allocation7], 0
    %14 = vsyncpa [#allocation10], 0
    %15 = vsyncpa [#allocation5], 0
    // Predicated region
    $region2: #{tpu_custom_call.1} parent=1 // pred_check
      _
    $region3: #{tpu_custom_call.1} parent=1 // pred_check_branch
      %17 = sbr.rel (0) target = $region5
    $region4: #{tpu_custom_call.1} parent=1 // pred_region
      %s19 = ssub.s32 4096, 4096
      %20 = vsyncadd [#allocation4], %s19
      %s21 = sshll.u32 [#allocation3], 4
      %s22 = int_to_ptr.vmem [resolvable:$true] %s21
      %27 = dma.hbm_to_vmem [thread:$0]  %s0, 4096, %s22, [#allocation4], 128, 128, 8
    $region5: #{tpu_custom_call.1} parent=1 // pred_fallthru
      _
    // Predicated region
    $region6: #{tpu_custom_call.1} parent=1 // pred_check
      _
    $region7: #{tpu_custom_call.1} parent=1 // pred_check_branch
      %29 = sbr.rel (0) target = $region9
    $region8: #{tpu_custom_call.1} parent=1 // pred_region
      %s31 = ssub.s32 1024, 1024
      %32 = vsyncadd [#allocation7], %s31
      %s33 = sshll.u32 [#allocation6], 4
      %s34 = int_to_ptr.vmem [resolvable:$true] %s33
      %39 = dma.hbm_to_vmem [thread:$0]  %s1, 1024, %s34, [#allocation7], 64, 64, 4
    $region9: #{tpu_custom_call.1} parent=1 // pred_fallthru
      _
    // Predicated region
    $region10: #{tpu_custom_call.1} parent=1 // pred_check
      _
    $region11: #{tpu_custom_call.1} parent=1 // pred_check_branch
      %41 = sbr.rel (0) target = $region13
    $region12: #{tpu_custom_call.1} parent=1 // pred_region
      _
    $region13: #{tpu_custom_call.1} parent=1 // pred_fallthru
      _
    // Predicated region
    $region14: #{tpu_custom_call.1} parent=1 // pred_check
      _
    $region15: #{tpu_custom_call.1} parent=1 // pred_check_branch
      %43 = sbr.rel (0) target = $region17
    $region16: #{tpu_custom_call.1} parent=1 // pred_region
      _
    $region17: #{tpu_custom_call.1} parent=1 // pred_fallthru
      _
    // Predicated region
    $region18: #{tpu_custom_call.1} parent=1 // pred_check
      _
    $region19: #{tpu_custom_call.1} parent=1 // pred_check_branch
      %45 = sbr.rel (0) target = $region21
    $region20: #{tpu_custom_call.1} parent=1 // pred_region
      %s47 = ssub.s32 1024, 1024
      %48 = vsyncadd [#allocation7], %s47
      %s49 = sshll.u32 [#allocation8], 4
      %s50 = int_to_ptr.vmem [resolvable:$true] %s49
      %55 = dma.hbm_to_vmem [thread:$0]  %s4, 1024, %s50, [#allocation7], 64, 64, 4
    $region21: #{tpu_custom_call.1} parent=1 // pred_fallthru
      _
    // Predicated region
    $region22: #{tpu_custom_call.1} parent=1 // pred_check
      _
    $region23: #{tpu_custom_call.1} parent=1 // pred_check_branch
      %57 = sbr.rel (0) target = $region25
    $region24: #{tpu_custom_call.1} parent=1 // pred_region
      %s59 = ssub.s32 1024, 1024
      %60 = vsyncadd [#allocation10], %s59
      %s61 = sshll.u32 [#allocation9], 4
      %s62 = int_to_ptr.vmem [resolvable:$true] %s61
      %67 = dma.hbm_to_vmem [thread:$0]  %s5, 1024, %s62, [#allocation10], 64, 64, 4
    $region25: #{tpu_custom_call.1} parent=1 // pred_fallthru
      _
    // Predicated region
    $region26: #{tpu_custom_call.1} parent=1 // pred_check
      _
    $region27: #{tpu_custom_call.1} parent=1 // pred_check_branch
      %69 = sbr.rel (0) target = $region29
    $region28: #{tpu_custom_call.1} parent=1 // pred_region
      %70 = dma.done [#allocation4], 4096
    $region29: #{tpu_custom_call.1} parent=1 // pred_fallthru
      _
    // Predicated region
    $region30: #{tpu_custom_call.1} parent=1 // pred_check
      _
    $region31: #{tpu_custom_call.1} parent=1 // pred_check_branch
      %72 = sbr.rel (0) target = $region33
    $region32: #{tpu_custom_call.1} parent=1 // pred_region
      %73 = dma.done [#allocation7], 1024
    $region33: #{tpu_custom_call.1} parent=1 // pred_fallthru
      _
    // Predicated region
    $region34: #{tpu_custom_call.1} parent=1 // pred_check
      _
    $region35: #{tpu_custom_call.1} parent=1 // pred_check_branch
      %75 = sbr.rel (0) target = $region37
    $region36: #{tpu_custom_call.1} parent=1 // pred_region
      %76 = dma.done [#allocation7], 1024
    $region37: #{tpu_custom_call.1} parent=1 // pred_fallthru
      _
    // Predicated region
    $region38: #{tpu_custom_call.1} parent=1 // pred_check
      _
    $region39: #{tpu_custom_call.1} parent=1 // pred_check_branch
      %78 = sbr.rel (0) target = $region41
    $region40: #{tpu_custom_call.1} parent=1 // pred_region
      %79 = dma.done [#allocation10], 1024
    $region41: #{tpu_custom_call.1} parent=1 // pred_fallthru
      _
    %v81 = vld [vmem:[#allocation3] sm:$0xff]
    %v82 = vld [vmem:[#allocation3 + $0x8] sm:$0xff]
    %v83 = vld [vmem:[#allocation3 + $0x10] sm:$0xff]
    %v84 = vld [vmem:[#allocation3 + $0x18] sm:$0xff]
    %v85 = vld [vmem:[#allocation3 + $0x20] sm:$0xff]
    %v86 = vld [vmem:[#allocation3 + $0x28] sm:$0xff]
    %v87 = vld [vmem:[#allocation3 + $0x30] sm:$0xff]
    %v88 = vld [vmem:[#allocation3 + $0x38] sm:$0xff]
    %v89 = vld [vmem:[#allocation3 + $0x40] sm:$0xff]
    %v90 = vld [vmem:[#allocation3 + $0x48] sm:$0xff]
    %v91 = vld [vmem:[#allocation3 + $0x50] sm:$0xff]
    %v92 = vld [vmem:[#allocation3 + $0x58] sm:$0xff]
    %v93 = vld [vmem:[#allocation3 + $0x60] sm:$0xff]
    %v94 = vld [vmem:[#allocation3 + $0x68] sm:$0xff]
    %v95 = vld [vmem:[#allocation3 + $0x70] sm:$0xff]
    %v96 = vld [vmem:[#allocation3 + $0x78] sm:$0xff]
    %v97 = vld [vmem:[#allocation3 + $0x80] sm:$0xff]
    %v98 = vld [vmem:[#allocation3 + $0x88] sm:$0xff]
    %v99 = vld [vmem:[#allocation3 + $0x90] sm:$0xff]
    %v100 = vld [vmem:[#allocation3 + $0x98] sm:$0xff]
    %v101 = vld [vmem:[#allocation3 + $0xa0] sm:$0xff]
    %v102 = vld [vmem:[#allocation3 + $0xa8] sm:$0xff]
    %v103 = vld [vmem:[#allocation3 + $0xb0] sm:$0xff]
    %v104 = vld [vmem:[#allocation3 + $0xb8] sm:$0xff]
    %v105 = vld [vmem:[#allocation3 + $0xc0] sm:$0xff]
    %v106 = vld [vmem:[#allocation3 + $0xc8] sm:$0xff]
    %v107 = vld [vmem:[#allocation3 + $0xd0] sm:$0xff]
    %v108 = vld [vmem:[#allocation3 + $0xd8] sm:$0xff]
    %v109 = vld [vmem:[#allocation3 + $0xe0] sm:$0xff]
    %v110 = vld [vmem:[#allocation3 + $0xe8] sm:$0xff]
    %v111 = vld [vmem:[#allocation3 + $0xf0] sm:$0xff]
    %v112 = vld [vmem:[#allocation3 + $0xf8] sm:$0xff]
    %v113 = vpack.c.bf16 %v82, %v81
    %v114 = vpack.c.bf16 %v84, %v83
    %v115 = vpack.c.bf16 %v86, %v85
    %v116 = vpack.c.bf16 %v88, %v87
    %v117 = vpack.c.bf16 %v90, %v89
    %v118 = vpack.c.bf16 %v92, %v91
    %v119 = vpack.c.bf16 %v94, %v93
    %v120 = vpack.c.bf16 %v96, %v95
    %v121 = vpack.c.bf16 %v98, %v97
    %v122 = vpack.c.bf16 %v100, %v99
    %v123 = vpack.c.bf16 %v102, %v101
    %v124 = vpack.c.bf16 %v104, %v103
    %v125 = vpack.c.bf16 %v106, %v105
    %v126 = vpack.c.bf16 %v108, %v107
    %v127 = vpack.c.bf16 %v110, %v109
    %v128 = vpack.c.bf16 %v112, %v111
    %v129 = vld [vmem:[#allocation6] sm:$0xf]
    %v130 = vld [vmem:[#allocation6 + $0x4] sm:$0xf]
    %v131 = vld [vmem:[#allocation6 + $0x8] sm:$0xf]
    %v132 = vld [vmem:[#allocation6 + $0xc] sm:$0xf]
    %v133 = vld [vmem:[#allocation6 + $0x10] sm:$0xf]
    %v134 = vld [vmem:[#allocation6 + $0x14] sm:$0xf]
    %v135 = vld [vmem:[#allocation6 + $0x18] sm:$0xf]
    %v136 = vld [vmem:[#allocation6 + $0x1c] sm:$0xf]
    %v137 = vld [vmem:[#allocation6 + $0x20] sm:$0xf]
    %v138 = vld [vmem:[#allocation6 + $0x24] sm:$0xf]
    %v139 = vld [vmem:[#allocation6 + $0x28] sm:$0xf]
    %v140 = vld [vmem:[#allocation6 + $0x2c] sm:$0xf]
    %v141 = vld [vmem:[#allocation6 + $0x30] sm:$0xf]
    %v142 = vld [vmem:[#allocation6 + $0x34] sm:$0xf]
    %v143 = vld [vmem:[#allocation6 + $0x38] sm:$0xf]
    %v144 = vld [vmem:[#allocation6 + $0x3c] sm:$0xf]
    %v145 = vld [vmem:[%s2] sm:$0x1]
    %v147 = vlaneseq
    %v148 = vshrl.u32 %v147, 7
    %v149 = vsub.s32 0, %v148
    %v150 = vrot.slane %v145, %v149
    %v168 = vunpack.c.l.b16 %v129
    %v169 = vunpack.c.l.b16 %v130
    %v170 = vunpack.c.l.b16 %v131
    %v171 = vunpack.c.l.b16 %v132
    %v172 = vunpack.c.l.b16 %v133
    %v173 = vunpack.c.l.b16 %v134
    %v174 = vunpack.c.l.b16 %v135
    %v175 = vunpack.c.l.b16 %v136
    %v176 = vunpack.c.l.b16 %v137
    %v177 = vunpack.c.l.b16 %v138
    %v178 = vunpack.c.l.b16 %v139
    %v179 = vunpack.c.l.b16 %v140
    %v180 = vunpack.c.l.b16 %v141
    %v181 = vunpack.c.l.b16 %v142
    %v182 = vunpack.c.l.b16 %v143
    %v183 = vunpack.c.l.b16 %v144
    %v184 = vpack.c.b16 %v169, %v168
    %v185 = vpack.c.b16 %v171, %v170
    %v186 = vpack.c.b16 %v173, %v172
    %v187 = vpack.c.b16 %v175, %v174
    %v188 = vpack.c.b16 %v177, %v176
    %v189 = vpack.c.b16 %v179, %v178
    %v190 = vpack.c.b16 %v181, %v180
    %v191 = vpack.c.b16 %v183, %v182
    %200 = vmatprep.subr.bf16.mxu0 0
    %201 = vmatpush1.bf16.msra.mxu0 %v191
    %202 = vmatprep.subr.bf16.mxu0 0
    %203 = vmatpush1.bf16.msra.mxu0 %v190
    %204 = vmatprep.subr.bf16.mxu0 0
    %205 = vmatpush1.bf16.msra.mxu0 %v189
    %206 = vmatprep.subr.bf16.mxu0 0
    %207 = vmatpush1.bf16.msra.mxu0 %v188
    %208 = vmatprep.subr.bf16.mxu0 0
    %209 = vmatpush1.bf16.msra.mxu0 %v187
    %210 = vmatprep.subr.bf16.mxu0 0
    %211 = vmatpush1.bf16.msra.mxu0 %v186
    %212 = vmatprep.subr.bf16.mxu0 0
    %213 = vmatpush1.bf16.msra.mxu0 %v185
    %214 = vmatprep.subr.bf16.mxu0 0
    %215 = vmatpush1.bf16.msra.mxu0 %v184
    %216 = vmatprep.subr.bf16.mxu0 0
    %217 = vmatpush2.bf16.msra.mxu0 0
    %218 = vmatprep.subr.bf16.mxu0 0
    %219 = vmatpush2.bf16.msra.mxu0 0
    %220 = vmatprep.subr.bf16.mxu0 0
    %221 = vmatpush2.bf16.msra.mxu0 0
    %222 = vmatprep.subr.bf16.mxu0 0
    %223 = vmatpush2.bf16.msra.mxu0 0
    %224 = vmatprep.subr.bf16.mxu0 0
    %225 = vmatpush2.bf16.msra.mxu0 0
    %226 = vmatprep.subr.bf16.mxu0 0
    %227 = vmatpush2.bf16.msra.mxu0 0
    %228 = vmatprep.subr.bf16.mxu0 0
    %229 = vmatpush2.bf16.msra.mxu0 0
    %230 = vmatprep.subr.bf16.mxu0 0
    %231 = vmatpush2.bf16.msra.mxu0 0
    %232 = vmatprep.mubr.bf16.mxu0 0
    %233 = vmatmul.mubr.bf16.gmra.mxu0 %v113
    %v234 = vpop.f32.mrf.mxu0
    %v235 = vadd.f32 %v150, %v234
    %v236 = vpop.f32.mrf.mxu0
    %v237 = vpop.f32.mrf.mxu0
    %v238 = vadd.f32 %v150, %v237
    %v239 = vpop.f32.mrf.mxu0
    %240 = vmatprep.mubr.bf16.mxu0 0
    %241 = vmatmul.mubr.bf16.gmra.mxu0 %v114
    %v242 = vpop.f32.mrf.mxu0
    %v243 = vadd.f32 %v150, %v242
    %v244 = vpop.f32.mrf.mxu0
    %v245 = vpop.f32.mrf.mxu0
    %v246 = vadd.f32 %v150, %v245
    %v247 = vpop.f32.mrf.mxu0
    %248 = vmatprep.mubr.bf16.mxu0 0
    %249 = vmatmul.mubr.bf16.gmra.mxu0 %v115
    %v250 = vpop.f32.mrf.mxu0
    %v251 = vadd.f32 %v150, %v250
    %v252 = vpop.f32.mrf.mxu0
    %v253 = vpop.f32.mrf.mxu0
    %v254 = vadd.f32 %v150, %v253
    %v255 = vpop.f32.mrf.mxu0
    %256 = vmatprep.mubr.bf16.mxu0 0
    %257 = vmatmul.mubr.bf16.gmra.mxu0 %v116
    %v258 = vpop.f32.mrf.mxu0
    %v259 = vadd.f32 %v150, %v258
    %v260 = vpop.f32.mrf.mxu0
    %v261 = vpop.f32.mrf.mxu0
    %v262 = vadd.f32 %v150, %v261
    %v263 = vpop.f32.mrf.mxu0
    %264 = vmatprep.mubr.bf16.mxu0 0
    %265 = vmatmul.mubr.bf16.gmra.mxu0 %v117
    %v266 = vpop.f32.mrf.mxu0
    %v267 = vadd.f32 %v150, %v266
    %v268 = vpop.f32.mrf.mxu0
    %v269 = vpop.f32.mrf.mxu0
    %v270 = vadd.f32 %v150, %v269
    %v271 = vpop.f32.mrf.mxu0
    %272 = vmatprep.mubr.bf16.mxu0 0
    %273 = vmatmul.mubr.bf16.gmra.mxu0 %v118
    %v274 = vpop.f32.mrf.mxu0
    %v275 = vadd.f32 %v150, %v274
    %v276 = vpop.f32.mrf.mxu0
    %v277 = vpop.f32.mrf.mxu0
    %v278 = vadd.f32 %v150, %v277
    %v279 = vpop.f32.mrf.mxu0
    %280 = vmatprep.mubr.bf16.mxu0 0
    %281 = vmatmul.mubr.bf16.gmra.mxu0 %v119
    %v282 = vpop.f32.mrf.mxu0
    %v283 = vadd.f32 %v150, %v282
    %v284 = vpop.f32.mrf.mxu0
    %v285 = vpop.f32.mrf.mxu0
    %v286 = vadd.f32 %v150, %v285
    %v287 = vpop.f32.mrf.mxu0
    %288 = vmatprep.mubr.bf16.mxu0 0
    %289 = vmatmul.mubr.bf16.gmra.mxu0 %v120
    %v290 = vpop.f32.mrf.mxu0
    %v291 = vadd.f32 %v150, %v290
    %v292 = vpop.f32.mrf.mxu0
    %v293 = vpop.f32.mrf.mxu0
    %v294 = vadd.f32 %v150, %v293
    %v295 = vpop.f32.mrf.mxu0
    %296 = vmatprep.mubr.bf16.mxu0 0
    %297 = vmatmul.mubr.bf16.gmra.mxu0 %v121
    %v298 = vpop.f32.mrf.mxu0
    %v299 = vadd.f32 %v150, %v298
    %v300 = vpop.f32.mrf.mxu0
    %v301 = vpop.f32.mrf.mxu0
    %v302 = vadd.f32 %v150, %v301
    %v303 = vpop.f32.mrf.mxu0
    %304 = vmatprep.mubr.bf16.mxu0 0
    %305 = vmatmul.mubr.bf16.gmra.mxu0 %v122
    %v306 = vpop.f32.mrf.mxu0
    %v307 = vadd.f32 %v150, %v306
    %v308 = vpop.f32.mrf.mxu0
    %v309 = vpop.f32.mrf.mxu0
    %v310 = vadd.f32 %v150, %v309
    %v311 = vpop.f32.mrf.mxu0
    %312 = vmatprep.mubr.bf16.mxu0 0
    %313 = vmatmul.mubr.bf16.gmra.mxu0 %v123
    %v314 = vpop.f32.mrf.mxu0
    %v315 = vadd.f32 %v150, %v314
    %v316 = vpop.f32.mrf.mxu0
    %v317 = vpop.f32.mrf.mxu0
    %v318 = vadd.f32 %v150, %v317
    %v319 = vpop.f32.mrf.mxu0
    %320 = vmatprep.mubr.bf16.mxu0 0
    %321 = vmatmul.mubr.bf16.gmra.mxu0 %v124
    %v322 = vpop.f32.mrf.mxu0
    %v323 = vadd.f32 %v150, %v322
    %v324 = vpop.f32.mrf.mxu0
    %v325 = vpop.f32.mrf.mxu0
    %v326 = vadd.f32 %v150, %v325
    %v327 = vpop.f32.mrf.mxu0
    %328 = vmatprep.mubr.bf16.mxu0 0
    %329 = vmatmul.mubr.bf16.gmra.mxu0 %v125
    %v330 = vpop.f32.mrf.mxu0
    %v331 = vadd.f32 %v150, %v330
    %v332 = vpop.f32.mrf.mxu0
    %v333 = vpop.f32.mrf.mxu0
    %v334 = vadd.f32 %v150, %v333
    %v335 = vpop.f32.mrf.mxu0
    %336 = vmatprep.mubr.bf16.mxu0 0
    %337 = vmatmul.mubr.bf16.gmra.mxu0 %v126
    %v338 = vpop.f32.mrf.mxu0
    %v339 = vadd.f32 %v150, %v338
    %v340 = vpop.f32.mrf.mxu0
    %v341 = vpop.f32.mrf.mxu0
    %v342 = vadd.f32 %v150, %v341
    %v343 = vpop.f32.mrf.mxu0
    %344 = vmatprep.mubr.bf16.mxu0 0
    %345 = vmatmul.mubr.bf16.gmra.mxu0 %v127
    %v346 = vpop.f32.mrf.mxu0
    %v347 = vadd.f32 %v150, %v346
    %v348 = vpop.f32.mrf.mxu0
    %v349 = vpop.f32.mrf.mxu0
    %v350 = vadd.f32 %v150, %v349
    %v351 = vpop.f32.mrf.mxu0
    %352 = vmatprep.mubr.bf16.mxu0 0
    %353 = vmatmul.mubr.bf16.gmra.mxu0 %v128
    %v354 = vpop.f32.mrf.mxu0
    %v355 = vadd.f32 %v150, %v354
    %v356 = vpop.f32.mrf.mxu0
    %v357 = vpop.f32.mrf.mxu0
    %v358 = vadd.f32 %v150, %v357
    %v359 = vpop.f32.mrf.mxu0
    %360 = vdwg.mxu0
    %s361 = sld [smem:[#allocation2]]
    %vm362 = vcmp.ge.f32.partialorder %v235, 0.0
    %vm363 = vcmp.ge.f32.partialorder %v238, 0.0
    %vm364 = vcmp.ge.f32.partialorder %v243, 0.0
    %vm365 = vcmp.ge.f32.partialorder %v246, 0.0
    %vm366 = vcmp.ge.f32.partialorder %v251, 0.0
    %vm367 = vcmp.ge.f32.partialorder %v254, 0.0
    %vm368 = vcmp.ge.f32.partialorder %v259, 0.0
    %vm369 = vcmp.ge.f32.partialorder %v262, 0.0
    %vm370 = vcmp.ge.f32.partialorder %v267, 0.0
    %vm371 = vcmp.ge.f32.partialorder %v270, 0.0
    %vm372 = vcmp.ge.f32.partialorder %v275, 0.0
    %vm373 = vcmp.ge.f32.partialorder %v278, 0.0
    %vm374 = vcmp.ge.f32.partialorder %v283, 0.0
    %vm375 = vcmp.ge.f32.partialorder %v286, 0.0
    %vm376 = vcmp.ge.f32.partialorder %v291, 0.0
    %vm377 = vcmp.ge.f32.partialorder %v294, 0.0
    %vm378 = vcmp.ge.f32.partialorder %v299, 0.0
    %vm379 = vcmp.ge.f32.partialorder %v302, 0.0
    %vm380 = vcmp.ge.f32.partialorder %v307, 0.0
    %vm381 = vcmp.ge.f32.partialorder %v310, 0.0
    %vm382 = vcmp.ge.f32.partialorder %v315, 0.0
    %vm383 = vcmp.ge.f32.partialorder %v318, 0.0
    %vm384 = vcmp.ge.f32.partialorder %v323, 0.0
    %vm385 = vcmp.ge.f32.partialorder %v326, 0.0
    %vm386 = vcmp.ge.f32.partialorder %v331, 0.0
    %vm387 = vcmp.ge.f32.partialorder %v334, 0.0
    %vm388 = vcmp.ge.f32.partialorder %v339, 0.0
    %vm389 = vcmp.ge.f32.partialorder %v342, 0.0
    %vm390 = vcmp.ge.f32.partialorder %v347, 0.0
    %vm391 = vcmp.ge.f32.partialorder %v350, 0.0
    %vm392 = vcmp.ge.f32.partialorder %v355, 0.0
    %vm393 = vcmp.ge.f32.partialorder %v358, 0.0
    %v394 = vstv %s361
    %v395 = vmul.f32 %v394, %v235
    %v396 = vmul.f32 %v394, %v238
    %v397 = vmul.f32 %v394, %v243
    %v398 = vmul.f32 %v394, %v246
    %v399 = vmul.f32 %v394, %v251
    %v400 = vmul.f32 %v394, %v254
    %v401 = vmul.f32 %v394, %v259
    %v402 = vmul.f32 %v394, %v262
    %v403 = vmul.f32 %v394, %v267
    %v404 = vmul.f32 %v394, %v270
    %v405 = vmul.f32 %v394, %v275
    %v406 = vmul.f32 %v394, %v278
    %v407 = vmul.f32 %v394, %v283
    %v408 = vmul.f32 %v394, %v286
    %v409 = vmul.f32 %v394, %v291
    %v410 = vmul.f32 %v394, %v294
    %v411 = vmul.f32 %v394, %v299
    %v412 = vmul.f32 %v394, %v302
    %v413 = vmul.f32 %v394, %v307
    %v414 = vmul.f32 %v394, %v310
    %v415 = vmul.f32 %v394, %v315
    %v416 = vmul.f32 %v394, %v318
    %v417 = vmul.f32 %v394, %v323
    %v418 = vmul.f32 %v394, %v326
    %v419 = vmul.f32 %v394, %v331
    %v420 = vmul.f32 %v394, %v334
    %v421 = vmul.f32 %v394, %v339
    %v422 = vmul.f32 %v394, %v342
    %v423 = vmul.f32 %v394, %v347
    %v424 = vmul.f32 %v394, %v350
    %v425 = vmul.f32 %v394, %v355
    %v426 = vmul.f32 %v394, %v358
    %v427 = vsel %vm362, %v235, %v395
    %v428 = vsel %vm363, %v238, %v396
    %v429 = vsel %vm364, %v243, %v397
    %v430 = vsel %vm365, %v246, %v398
    %v431 = vsel %vm366, %v251, %v399
    %v432 = vsel %vm367, %v254, %v400
    %v433 = vsel %vm368, %v259, %v401
    %v434 = vsel %vm369, %v262, %v402
    %v435 = vsel %vm370, %v267, %v403
    %v436 = vsel %vm371, %v270, %v404
    %v437 = vsel %vm372, %v275, %v405
    %v438 = vsel %vm373, %v278, %v406
    %v439 = vsel %vm374, %v283, %v407
    %v440 = vsel %vm375, %v286, %v408
    %v441 = vsel %vm376, %v291, %v409
    %v442 = vsel %vm377, %v294, %v410
    %v443 = vsel %vm378, %v299, %v411
    %v444 = vsel %vm379, %v302, %v412
    %v445 = vsel %vm380, %v307, %v413
    %v446 = vsel %vm381, %v310, %v414
    %v447 = vsel %vm382, %v315, %v415
    %v448 = vsel %vm383, %v318, %v416
    %v449 = vsel %vm384, %v323, %v417
    %v450 = vsel %vm385, %v326, %v418
    %v451 = vsel %vm386, %v331, %v419
    %v452 = vsel %vm387, %v334, %v420
    %v453 = vsel %vm388, %v339, %v421
    %v454 = vsel %vm389, %v342, %v422
    %v455 = vsel %vm390, %v347, %v423
    %v456 = vsel %vm391, %v350, %v424
    %v457 = vsel %vm392, %v355, %v425
    %v458 = vsel %vm393, %v358, %v426
    %v459 = vpack.c.bf16 %v428, %v427
    %v460 = vpack.c.bf16 %v430, %v429
    %v461 = vpack.c.bf16 %v432, %v431
    %v462 = vpack.c.bf16 %v434, %v433
    %v463 = vpack.c.bf16 %v436, %v435
    %v464 = vpack.c.bf16 %v438, %v437
    %v465 = vpack.c.bf16 %v440, %v439
    %v466 = vpack.c.bf16 %v442, %v441
    %v467 = vpack.c.bf16 %v444, %v443
    %v468 = vpack.c.bf16 %v446, %v445
    %v469 = vpack.c.bf16 %v448, %v447
    %v470 = vpack.c.bf16 %v450, %v449
    %v471 = vpack.c.bf16 %v452, %v451
    %v472 = vpack.c.bf16 %v454, %v453
    %v473 = vpack.c.bf16 %v456, %v455
    %v474 = vpack.c.bf16 %v458, %v457
    %v475 = vld [vmem:[#allocation8] sm:$0xf]
    %v476 = vld [vmem:[#allocation8 + $0x4] sm:$0xf]
    %v477 = vld [vmem:[#allocation8 + $0x8] sm:$0xf]
    %v478 = vld [vmem:[#allocation8 + $0xc] sm:$0xf]
    %v479 = vld [vmem:[#allocation8 + $0x10] sm:$0xf]
    %v480 = vld [vmem:[#allocation8 + $0x14] sm:$0xf]
    %v481 = vld [vmem:[#allocation8 + $0x18] sm:$0xf]
    %v482 = vld [vmem:[#allocation8 + $0x1c] sm:$0xf]
    %v483 = vld [vmem:[#allocation8 + $0x20] sm:$0xf]
    %v484 = vld [vmem:[#allocation8 + $0x24] sm:$0xf]
    %v485 = vld [vmem:[#allocation8 + $0x28] sm:$0xf]
    %v486 = vld [vmem:[#allocation8 + $0x2c] sm:$0xf]
    %v487 = vld [vmem:[#allocation8 + $0x30] sm:$0xf]
    %v488 = vld [vmem:[#allocation8 + $0x34] sm:$0xf]
    %v489 = vld [vmem:[#allocation8 + $0x38] sm:$0xf]
    %v490 = vld [vmem:[#allocation8 + $0x3c] sm:$0xf]
    %v507 = vunpack.c.l.b16 %v475
    %v508 = vunpack.c.l.b16 %v476
    %v509 = vunpack.c.l.b16 %v477
    %v510 = vunpack.c.l.b16 %v478
    %v511 = vunpack.c.l.b16 %v479
    %v512 = vunpack.c.l.b16 %v480
    %v513 = vunpack.c.l.b16 %v481
    %v514 = vunpack.c.l.b16 %v482
    %v515 = vunpack.c.l.b16 %v483
    %v516 = vunpack.c.l.b16 %v484
    %v517 = vunpack.c.l.b16 %v485
    %v518 = vunpack.c.l.b16 %v486
    %v519 = vunpack.c.l.b16 %v487
    %v520 = vunpack.c.l.b16 %v488
    %v521 = vunpack.c.l.b16 %v489
    %v522 = vunpack.c.l.b16 %v490
    %v523 = vpack.c.b16 %v508, %v507
    %v524 = vpack.c.b16 %v510, %v509
    %v525 = vpack.c.b16 %v512, %v511
    %v526 = vpack.c.b16 %v514, %v513
    %v527 = vpack.c.b16 %v516, %v515
    %v528 = vpack.c.b16 %v518, %v517
    %v529 = vpack.c.b16 %v520, %v519
    %v530 = vpack.c.b16 %v522, %v521
    %539 = vmatprep.subr.bf16.mxu0 0
    %540 = vmatpush1.bf16.msra.mxu0 %v530
    %541 = vmatprep.subr.bf16.mxu0 0
    %542 = vmatpush1.bf16.msra.mxu0 %v529
    %543 = vmatprep.subr.bf16.mxu0 0
    %544 = vmatpush1.bf16.msra.mxu0 %v528
    %545 = vmatprep.subr.bf16.mxu0 0
    %546 = vmatpush1.bf16.msra.mxu0 %v527
    %547 = vmatprep.subr.bf16.mxu0 0
    %548 = vmatpush1.bf16.msra.mxu0 %v526
    %549 = vmatprep.subr.bf16.mxu0 0
    %550 = vmatpush1.bf16.msra.mxu0 %v525
    %551 = vmatprep.subr.bf16.mxu0 0
    %552 = vmatpush1.bf16.msra.mxu0 %v524
    %553 = vmatprep.subr.bf16.mxu0 0
    %554 = vmatpush1.bf16.msra.mxu0 %v523
    %555 = vmatprep.subr.bf16.mxu0 0
    %556 = vmatpush2.bf16.msra.mxu0 0
    %557 = vmatprep.subr.bf16.mxu0 0
    %558 = vmatpush2.bf16.msra.mxu0 0
    %559 = vmatprep.subr.bf16.mxu0 0
    %560 = vmatpush2.bf16.msra.mxu0 0
    %561 = vmatprep.subr.bf16.mxu0 0
    %562 = vmatpush2.bf16.msra.mxu0 0
    %563 = vmatprep.subr.bf16.mxu0 0
    %564 = vmatpush2.bf16.msra.mxu0 0
    %565 = vmatprep.subr.bf16.mxu0 0
    %566 = vmatpush2.bf16.msra.mxu0 0
    %567 = vmatprep.subr.bf16.mxu0 0
    %568 = vmatpush2.bf16.msra.mxu0 0
    %569 = vmatprep.subr.bf16.mxu0 0
    %570 = vmatpush2.bf16.msra.mxu0 0
    %571 = vmatprep.mubr.bf16.mxu0 0
    %572 = vmatmul.mubr.bf16.gmra.mxu0 %v459
    %v573 = vpop.f32.mrf.mxu0
    %v574 = vadd.f32 0.0, %v573
    %v575 = vpop.f32.mrf.mxu0
    %v576 = vpop.f32.mrf.mxu0
    %v577 = vadd.f32 0.0, %v576
    %v578 = vpop.f32.mrf.mxu0
    %579 = vmatprep.mubr.bf16.mxu0 0
    %580 = vmatmul.mubr.bf16.gmra.mxu0 %v460
    %v581 = vpop.f32.mrf.mxu0
    %v582 = vadd.f32 0.0, %v581
    %v583 = vpop.f32.mrf.mxu0
    %v584 = vpop.f32.mrf.mxu0
    %v585 = vadd.f32 0.0, %v584
    %v586 = vpop.f32.mrf.mxu0
    %587 = vmatprep.mubr.bf16.mxu0 0
    %588 = vmatmul.mubr.bf16.gmra.mxu0 %v461
    %v589 = vpop.f32.mrf.mxu0
    %v590 = vadd.f32 0.0, %v589
    %v591 = vpop.f32.mrf.mxu0
    %v592 = vpop.f32.mrf.mxu0
    %v593 = vadd.f32 0.0, %v592
    %v594 = vpop.f32.mrf.mxu0
    %595 = vmatprep.mubr.bf16.mxu0 0
    %596 = vmatmul.mubr.bf16.gmra.mxu0 %v462
    %v597 = vpop.f32.mrf.mxu0
    %v598 = vadd.f32 0.0, %v597
    %v599 = vpop.f32.mrf.mxu0
    %v600 = vpop.f32.mrf.mxu0
    %v601 = vadd.f32 0.0, %v600
    %v602 = vpop.f32.mrf.mxu0
    %603 = vmatprep.mubr.bf16.mxu0 0
    %604 = vmatmul.mubr.bf16.gmra.mxu0 %v463
    %v605 = vpop.f32.mrf.mxu0
    %v606 = vadd.f32 0.0, %v605
    %v607 = vpop.f32.mrf.mxu0
    %v608 = vpop.f32.mrf.mxu0
    %v609 = vadd.f32 0.0, %v608
    %v610 = vpop.f32.mrf.mxu0
    %611 = vmatprep.mubr.bf16.mxu0 0
    %612 = vmatmul.mubr.bf16.gmra.mxu0 %v464
    %v613 = vpop.f32.mrf.mxu0
    %v614 = vadd.f32 0.0, %v613
    %v615 = vpop.f32.mrf.mxu0
    %v616 = vpop.f32.mrf.mxu0
    %v617 = vadd.f32 0.0, %v616
    %v618 = vpop.f32.mrf.mxu0
    %619 = vmatprep.mubr.bf16.mxu0 0
    %620 = vmatmul.mubr.bf16.gmra.mxu0 %v465
    %v621 = vpop.f32.mrf.mxu0
    %v622 = vadd.f32 0.0, %v621
    %v623 = vpop.f32.mrf.mxu0
    %v624 = vpop.f32.mrf.mxu0
    %v625 = vadd.f32 0.0, %v624
    %v626 = vpop.f32.mrf.mxu0
    %627 = vmatprep.mubr.bf16.mxu0 0
    %628 = vmatmul.mubr.bf16.gmra.mxu0 %v466
    %v629 = vpop.f32.mrf.mxu0
    %v630 = vadd.f32 0.0, %v629
    %v631 = vpop.f32.mrf.mxu0
    %v632 = vpop.f32.mrf.mxu0
    %v633 = vadd.f32 0.0, %v632
    %v634 = vpop.f32.mrf.mxu0
    %635 = vmatprep.mubr.bf16.mxu0 0
    %636 = vmatmul.mubr.bf16.gmra.mxu0 %v467
    %v637 = vpop.f32.mrf.mxu0
    %v638 = vadd.f32 0.0, %v637
    %v639 = vpop.f32.mrf.mxu0
    %v640 = vpop.f32.mrf.mxu0
    %v641 = vadd.f32 0.0, %v640
    %v642 = vpop.f32.mrf.mxu0
    %643 = vmatprep.mubr.bf16.mxu0 0
    %644 = vmatmul.mubr.bf16.gmra.mxu0 %v468
    %v645 = vpop.f32.mrf.mxu0
    %v646 = vadd.f32 0.0, %v645
    %v647 = vpop.f32.mrf.mxu0
    %v648 = vpop.f32.mrf.mxu0
    %v649 = vadd.f32 0.0, %v648
    %v650 = vpop.f32.mrf.mxu0
    %651 = vmatprep.mubr.bf16.mxu0 0
    %652 = vmatmul.mubr.bf16.gmra.mxu0 %v469
    %v653 = vpop.f32.mrf.mxu0
    %v654 = vadd.f32 0.0, %v653
    %v655 = vpop.f32.mrf.mxu0
    %v656 = vpop.f32.mrf.mxu0
    %v657 = vadd.f32 0.0, %v656
    %v658 = vpop.f32.mrf.mxu0
    %659 = vmatprep.mubr.bf16.mxu0 0
    %660 = vmatmul.mubr.bf16.gmra.mxu0 %v470
    %v661 = vpop.f32.mrf.mxu0
    %v662 = vadd.f32 0.0, %v661
    %v663 = vpop.f32.mrf.mxu0
    %v664 = vpop.f32.mrf.mxu0
    %v665 = vadd.f32 0.0, %v664
    %v666 = vpop.f32.mrf.mxu0
    %667 = vmatprep.mubr.bf16.mxu0 0
    %668 = vmatmul.mubr.bf16.gmra.mxu0 %v471
    %v669 = vpop.f32.mrf.mxu0
    %v670 = vadd.f32 0.0, %v669
    %v671 = vpop.f32.mrf.mxu0
    %v672 = vpop.f32.mrf.mxu0
    %v673 = vadd.f32 0.0, %v672
    %v674 = vpop.f32.mrf.mxu0
    %675 = vmatprep.mubr.bf16.mxu0 0
    %676 = vmatmul.mubr.bf16.gmra.mxu0 %v472
    %v677 = vpop.f32.mrf.mxu0
    %v678 = vadd.f32 0.0, %v677
    %v679 = vpop.f32.mrf.mxu0
    %v680 = vpop.f32.mrf.mxu0
    %v681 = vadd.f32 0.0, %v680
    %v682 = vpop.f32.mrf.mxu0
    %683 = vmatprep.mubr.bf16.mxu0 0
    %684 = vmatmul.mubr.bf16.gmra.mxu0 %v473
    %v685 = vpop.f32.mrf.mxu0
    %v686 = vadd.f32 0.0, %v685
    %v687 = vpop.f32.mrf.mxu0
    %v688 = vpop.f32.mrf.mxu0
    %v689 = vadd.f32 0.0, %v688
    %v690 = vpop.f32.mrf.mxu0
    %691 = vmatprep.mubr.bf16.mxu0 0
    %692 = vmatmul.mubr.bf16.gmra.mxu0 %v474
    %v693 = vpop.f32.mrf.mxu0
    %v694 = vadd.f32 0.0, %v693
    %v695 = vpop.f32.mrf.mxu0
    %v696 = vpop.f32.mrf.mxu0
    %v697 = vadd.f32 0.0, %v696
    %v698 = vpop.f32.mrf.mxu0
    %699 = vdwg.mxu0
    %v700 = vsub.f32 0.0, %v574
    %v701 = vsub.f32 0.0, %v577
    %v702 = vsub.f32 0.0, %v582
    %v703 = vsub.f32 0.0, %v585
    %v704 = vsub.f32 0.0, %v590
    %v705 = vsub.f32 0.0, %v593
    %v706 = vsub.f32 0.0, %v598
    %v707 = vsub.f32 0.0, %v601
    %v708 = vsub.f32 0.0, %v606
    %v709 = vsub.f32 0.0, %v609
    %v710 = vsub.f32 0.0, %v614
    %v711 = vsub.f32 0.0, %v617
    %v712 = vsub.f32 0.0, %v622
    %v713 = vsub.f32 0.0, %v625
    %v714 = vsub.f32 0.0, %v630
    %v715 = vsub.f32 0.0, %v633
    %v716 = vsub.f32 0.0, %v638
    %v717 = vsub.f32 0.0, %v641
    %v718 = vsub.f32 0.0, %v646
    %v719 = vsub.f32 0.0, %v649
    %v720 = vsub.f32 0.0, %v654
    %v721 = vsub.f32 0.0, %v657
    %v722 = vsub.f32 0.0, %v662
    %v723 = vsub.f32 0.0, %v665
    %v724 = vsub.f32 0.0, %v670
    %v725 = vsub.f32 0.0, %v673
    %v726 = vsub.f32 0.0, %v678
    %v727 = vsub.f32 0.0, %v681
    %v728 = vsub.f32 0.0, %v686
    %v729 = vsub.f32 0.0, %v689
    %v730 = vsub.f32 0.0, %v694
    %v731 = vsub.f32 0.0, %v697
    %v732 = vmul.f32 %v700, 1.442695
    %v733 = vpow.pop %v732
    %v734 = vmul.f32 %v701, 1.442695
    %v735 = vpow.pop %v734
    %v736 = vmul.f32 %v702, 1.442695
    %v737 = vpow.pop %v736
    %v738 = vmul.f32 %v703, 1.442695
    %v739 = vpow.pop %v738
    %v740 = vmul.f32 %v704, 1.442695
    %v741 = vpow.pop %v740
    %v742 = vmul.f32 %v705, 1.442695
    %v743 = vpow.pop %v742
    %v744 = vmul.f32 %v706, 1.442695
    %v745 = vpow.pop %v744
    %v746 = vmul.f32 %v707, 1.442695
    %v747 = vpow.pop %v746
    %v748 = vmul.f32 %v708, 1.442695
    %v749 = vpow.pop %v748
    %v750 = vmul.f32 %v709, 1.442695
    %v751 = vpow.pop %v750
    %v752 = vmul.f32 %v710, 1.442695
    %v753 = vpow.pop %v752
    %v754 = vmul.f32 %v711, 1.442695
    %v755 = vpow.pop %v754
    %v756 = vmul.f32 %v712, 1.442695
    %v757 = vpow.pop %v756
    %v758 = vmul.f32 %v713, 1.442695
    %v759 = vpow.pop %v758
    %v760 = vmul.f32 %v714, 1.442695
    %v761 = vpow.pop %v760
    %v762 = vmul.f32 %v715, 1.442695
    %v763 = vpow.pop %v762
    %v764 = vmul.f32 %v716, 1.442695
    %v765 = vpow.pop %v764
    %v766 = vmul.f32 %v717, 1.442695
    %v767 = vpow.pop %v766
    %v768 = vmul.f32 %v718, 1.442695
    %v769 = vpow.pop %v768
    %v770 = vmul.f32 %v719, 1.442695
    %v771 = vpow.pop %v770
    %v772 = vmul.f32 %v720, 1.442695
    %v773 = vpow.pop %v772
    %v774 = vmul.f32 %v721, 1.442695
    %v775 = vpow.pop %v774
    %v776 = vmul.f32 %v722, 1.442695
    %v777 = vpow.pop %v776
    %v778 = vmul.f32 %v723, 1.442695
    %v779 = vpow.pop %v778
    %v780 = vmul.f32 %v724, 1.442695
    %v781 = vpow.pop %v780
    %v782 = vmul.f32 %v725, 1.442695
    %v783 = vpow.pop %v782
    %v784 = vmul.f32 %v726, 1.442695
    %v785 = vpow.pop %v784
    %v786 = vmul.f32 %v727, 1.442695
    %v787 = vpow.pop %v786
    %v788 = vmul.f32 %v728, 1.442695
    %v789 = vpow.pop %v788
    %v790 = vmul.f32 %v729, 1.442695
    %v791 = vpow.pop %v790
    %v792 = vmul.f32 %v730, 1.442695
    %v793 = vpow.pop %v792
    %v794 = vmul.f32 %v731, 1.442695
    %v795 = vpow.pop %v794
    %v796 = vadd.f32 %v733, 1.0
    %v797 = vadd.f32 %v735, 1.0
    %v798 = vadd.f32 %v737, 1.0
    %v799 = vadd.f32 %v739, 1.0
    %v800 = vadd.f32 %v741, 1.0
    %v801 = vadd.f32 %v743, 1.0
    %v802 = vadd.f32 %v745, 1.0
    %v803 = vadd.f32 %v747, 1.0
    %v804 = vadd.f32 %v749, 1.0
    %v805 = vadd.f32 %v751, 1.0
    %v806 = vadd.f32 %v753, 1.0
    %v807 = vadd.f32 %v755, 1.0
    %v808 = vadd.f32 %v757, 1.0
    %v809 = vadd.f32 %v759, 1.0
    %v810 = vadd.f32 %v761, 1.0
    %v811 = vadd.f32 %v763, 1.0
    %v812 = vadd.f32 %v765, 1.0
    %v813 = vadd.f32 %v767, 1.0
    %v814 = vadd.f32 %v769, 1.0
    %v815 = vadd.f32 %v771, 1.0
    %v816 = vadd.f32 %v773, 1.0
    %v817 = vadd.f32 %v775, 1.0
    %v818 = vadd.f32 %v777, 1.0
    %v819 = vadd.f32 %v779, 1.0
    %v820 = vadd.f32 %v781, 1.0
    %v821 = vadd.f32 %v783, 1.0
    %v822 = vadd.f32 %v785, 1.0
    %v823 = vadd.f32 %v787, 1.0
    %v824 = vadd.f32 %v789, 1.0
    %v825 = vadd.f32 %v791, 1.0
    %v826 = vadd.f32 %v793, 1.0
    %v827 = vadd.f32 %v795, 1.0
    %v828 = vrcp.pop %v796
    %v829 = vrcp.pop %v797
    %v830 = vrcp.pop %v798
    %v831 = vrcp.pop %v799
    %v832 = vrcp.pop %v800
    %v833 = vrcp.pop %v801
    %v834 = vrcp.pop %v802
    %v835 = vrcp.pop %v803
    %v836 = vrcp.pop %v804
    %v837 = vrcp.pop %v805
    %v838 = vrcp.pop %v806
    %v839 = vrcp.pop %v807
    %v840 = vrcp.pop %v808
    %v841 = vrcp.pop %v809
    %v842 = vrcp.pop %v810
    %v843 = vrcp.pop %v811
    %v844 = vrcp.pop %v812
    %v845 = vrcp.pop %v813
    %v846 = vrcp.pop %v814
    %v847 = vrcp.pop %v815
    %v848 = vrcp.pop %v816
    %v849 = vrcp.pop %v817
    %v850 = vrcp.pop %v818
    %v851 = vrcp.pop %v819
    %v852 = vrcp.pop %v820
    %v853 = vrcp.pop %v821
    %v854 = vrcp.pop %v822
    %v855 = vrcp.pop %v823
    %v856 = vrcp.pop %v824
    %v857 = vrcp.pop %v825
    %v858 = vrcp.pop %v826
    %v859 = vrcp.pop %v827
    %v860 = vmul.f32 %v828, %v427
    %v861 = vmul.f32 %v829, %v428
    %v862 = vmul.f32 %v830, %v429
    %v863 = vmul.f32 %v831, %v430
    %v864 = vmul.f32 %v832, %v431
    %v865 = vmul.f32 %v833, %v432
    %v866 = vmul.f32 %v834, %v433
    %v867 = vmul.f32 %v835, %v434
    %v868 = vmul.f32 %v836, %v435
    %v869 = vmul.f32 %v837, %v436
    %v870 = vmul.f32 %v838, %v437
    %v871 = vmul.f32 %v839, %v438
    %v872 = vmul.f32 %v840, %v439
    %v873 = vmul.f32 %v841, %v440
    %v874 = vmul.f32 %v842, %v441
    %v875 = vmul.f32 %v843, %v442
    %v876 = vmul.f32 %v844, %v443
    %v877 = vmul.f32 %v845, %v444
    %v878 = vmul.f32 %v846, %v445
    %v879 = vmul.f32 %v847, %v446
    %v880 = vmul.f32 %v848, %v447
    %v881 = vmul.f32 %v849, %v448
    %v882 = vmul.f32 %v850, %v449
    %v883 = vmul.f32 %v851, %v450
    %v884 = vmul.f32 %v852, %v451
    %v885 = vmul.f32 %v853, %v452
    %v886 = vmul.f32 %v854, %v453
    %v887 = vmul.f32 %v855, %v454
    %v888 = vmul.f32 %v856, %v455
    %v889 = vmul.f32 %v857, %v456
    %v890 = vmul.f32 %v858, %v457
    %v891 = vmul.f32 %v859, %v458
    %v892 = vpack.c.bf16 %v861, %v860
    %v893 = vpack.c.bf16 %v863, %v862
    %v894 = vpack.c.bf16 %v865, %v864
    %v895 = vpack.c.bf16 %v867, %v866
    %v896 = vpack.c.bf16 %v869, %v868
    %v897 = vpack.c.bf16 %v871, %v870
    %v898 = vpack.c.bf16 %v873, %v872
    %v899 = vpack.c.bf16 %v875, %v874
    %v900 = vpack.c.bf16 %v877, %v876
    %v901 = vpack.c.bf16 %v879, %v878
    %v902 = vpack.c.bf16 %v881, %v880
    %v903 = vpack.c.bf16 %v883, %v882
    %v904 = vpack.c.bf16 %v885, %v884
    %v905 = vpack.c.bf16 %v887, %v886
    %v906 = vpack.c.bf16 %v889, %v888
    %v907 = vpack.c.bf16 %v891, %v890
    %v908 = vld [vmem:[#allocation9] sm:$0xf]
    %v909 = vld [vmem:[#allocation9 + $0x4] sm:$0xf]
    %v910 = vld [vmem:[#allocation9 + $0x8] sm:$0xf]
    %v911 = vld [vmem:[#allocation9 + $0xc] sm:$0xf]
    %v912 = vld [vmem:[#allocation9 + $0x10] sm:$0xf]
    %v913 = vld [vmem:[#allocation9 + $0x14] sm:$0xf]
    %v914 = vld [vmem:[#allocation9 + $0x18] sm:$0xf]
    %v915 = vld [vmem:[#allocation9 + $0x1c] sm:$0xf]
    %v916 = vld [vmem:[#allocation9 + $0x20] sm:$0xf]
    %v917 = vld [vmem:[#allocation9 + $0x24] sm:$0xf]
    %v918 = vld [vmem:[#allocation9 + $0x28] sm:$0xf]
    %v919 = vld [vmem:[#allocation9 + $0x2c] sm:$0xf]
    %v920 = vld [vmem:[#allocation9 + $0x30] sm:$0xf]
    %v921 = vld [vmem:[#allocation9 + $0x34] sm:$0xf]
    %v922 = vld [vmem:[#allocation9 + $0x38] sm:$0xf]
    %v923 = vld [vmem:[#allocation9 + $0x3c] sm:$0xf]
    %v940 = vunpack.c.l.b16 %v908
    %v941 = vunpack.c.l.b16 %v909
    %v942 = vunpack.c.l.b16 %v910
    %v943 = vunpack.c.l.b16 %v911
    %v944 = vunpack.c.l.b16 %v912
    %v945 = vunpack.c.l.b16 %v913
    %v946 = vunpack.c.l.b16 %v914
    %v947 = vunpack.c.l.b16 %v915
    %v948 = vunpack.c.l.b16 %v916
    %v949 = vunpack.c.l.b16 %v917
    %v950 = vunpack.c.l.b16 %v918
    %v951 = vunpack.c.l.b16 %v919
    %v952 = vunpack.c.l.b16 %v920
    %v953 = vunpack.c.l.b16 %v921
    %v954 = vunpack.c.l.b16 %v922
    %v955 = vunpack.c.l.b16 %v923
    %v956 = vpack.c.b16 %v941, %v940
    %v957 = vpack.c.b16 %v943, %v942
    %v958 = vpack.c.b16 %v945, %v944
    %v959 = vpack.c.b16 %v947, %v946
    %v960 = vpack.c.b16 %v949, %v948
    %v961 = vpack.c.b16 %v951, %v950
    %v962 = vpack.c.b16 %v953, %v952
    %v963 = vpack.c.b16 %v955, %v954
    %972 = vmatprep.subr.bf16.mxu0 0
    %973 = vmatpush1.bf16.msra.mxu0 %v963
    %974 = vmatprep.subr.bf16.mxu0 0
    %975 = vmatpush1.bf16.msra.mxu0 %v962
    %976 = vmatprep.subr.bf16.mxu0 0
    %977 = vmatpush1.bf16.msra.mxu0 %v961
    %978 = vmatprep.subr.bf16.mxu0 0
    %979 = vmatpush1.bf16.msra.mxu0 %v960
    %980 = vmatprep.subr.bf16.mxu0 0
    %981 = vmatpush1.bf16.msra.mxu0 %v959
    %982 = vmatprep.subr.bf16.mxu0 0
    %983 = vmatpush1.bf16.msra.mxu0 %v958
    %984 = vmatprep.subr.bf16.mxu0 0
    %985 = vmatpush1.bf16.msra.mxu0 %v957
    %986 = vmatprep.subr.bf16.mxu0 0
    %987 = vmatpush1.bf16.msra.mxu0 %v956
    %988 = vmatprep.subr.bf16.mxu0 0
    %989 = vmatpush2.bf16.msra.mxu0 0
    %990 = vmatprep.subr.bf16.mxu0 0
    %991 = vmatpush2.bf16.msra.mxu0 0
    %992 = vmatprep.subr.bf16.mxu0 0
    %993 = vmatpush2.bf16.msra.mxu0 0
    %994 = vmatprep.subr.bf16.mxu0 0
    %995 = vmatpush2.bf16.msra.mxu0 0
    %996 = vmatprep.subr.bf16.mxu0 0
    %997 = vmatpush2.bf16.msra.mxu0 0
    %998 = vmatprep.subr.bf16.mxu0 0
    %999 = vmatpush2.bf16.msra.mxu0 0
    %1000 = vmatprep.subr.bf16.mxu0 0
    %1001 = vmatpush2.bf16.msra.mxu0 0
    %1002 = vmatprep.subr.bf16.mxu0 0
    %1003 = vmatpush2.bf16.msra.mxu0 0
    %1004 = vmatprep.mubr.bf16.mxu0 0
    %1005 = vmatmul.mubr.bf16.gmra.mxu0 %v892
    %v1006 = vpop.f32.mrf.mxu0
    %v1007 = vadd.f32 0.0, %v1006
    %v1008 = vpop.f32.mrf.mxu0
    %v1009 = vpop.f32.mrf.mxu0
    %v1010 = vadd.f32 0.0, %v1009
    %v1011 = vpop.f32.mrf.mxu0
    %1012 = vmatprep.mubr.bf16.mxu0 0
    %1013 = vmatmul.mubr.bf16.gmra.mxu0 %v893
    %v1014 = vpop.f32.mrf.mxu0
    %v1015 = vadd.f32 0.0, %v1014
    %v1016 = vpop.f32.mrf.mxu0
    %v1017 = vpop.f32.mrf.mxu0
    %v1018 = vadd.f32 0.0, %v1017
    %v1019 = vpop.f32.mrf.mxu0
    %1020 = vmatprep.mubr.bf16.mxu0 0
    %1021 = vmatmul.mubr.bf16.gmra.mxu0 %v894
    %v1022 = vpop.f32.mrf.mxu0
    %v1023 = vadd.f32 0.0, %v1022
    %v1024 = vpop.f32.mrf.mxu0
    %v1025 = vpop.f32.mrf.mxu0
    %v1026 = vadd.f32 0.0, %v1025
    %v1027 = vpop.f32.mrf.mxu0
    %1028 = vmatprep.mubr.bf16.mxu0 0
    %1029 = vmatmul.mubr.bf16.gmra.mxu0 %v895
    %v1030 = vpop.f32.mrf.mxu0
    %v1031 = vadd.f32 0.0, %v1030
    %v1032 = vpop.f32.mrf.mxu0
    %v1033 = vpop.f32.mrf.mxu0
    %v1034 = vadd.f32 0.0, %v1033
    %v1035 = vpop.f32.mrf.mxu0
    %1036 = vmatprep.mubr.bf16.mxu0 0
    %1037 = vmatmul.mubr.bf16.gmra.mxu0 %v896
    %v1038 = vpop.f32.mrf.mxu0
    %v1039 = vadd.f32 0.0, %v1038
    %v1040 = vpop.f32.mrf.mxu0
    %v1041 = vpop.f32.mrf.mxu0
    %v1042 = vadd.f32 0.0, %v1041
    %v1043 = vpop.f32.mrf.mxu0
    %1044 = vmatprep.mubr.bf16.mxu0 0
    %1045 = vmatmul.mubr.bf16.gmra.mxu0 %v897
    %v1046 = vpop.f32.mrf.mxu0
    %v1047 = vadd.f32 0.0, %v1046
    %v1048 = vpop.f32.mrf.mxu0
    %v1049 = vpop.f32.mrf.mxu0
    %v1050 = vadd.f32 0.0, %v1049
    %v1051 = vpop.f32.mrf.mxu0
    %1052 = vmatprep.mubr.bf16.mxu0 0
    %1053 = vmatmul.mubr.bf16.gmra.mxu0 %v898
    %v1054 = vpop.f32.mrf.mxu0
    %v1055 = vadd.f32 0.0, %v1054
    %v1056 = vpop.f32.mrf.mxu0
    %v1057 = vpop.f32.mrf.mxu0
    %v1058 = vadd.f32 0.0, %v1057
    %v1059 = vpop.f32.mrf.mxu0
    %1060 = vmatprep.mubr.bf16.mxu0 0
    %1061 = vmatmul.mubr.bf16.gmra.mxu0 %v899
    %v1062 = vpop.f32.mrf.mxu0
    %v1063 = vadd.f32 0.0, %v1062
    %v1064 = vpop.f32.mrf.mxu0
    %v1065 = vpop.f32.mrf.mxu0
    %v1066 = vadd.f32 0.0, %v1065
    %v1067 = vpop.f32.mrf.mxu0
    %1068 = vmatprep.mubr.bf16.mxu0 0
    %1069 = vmatmul.mubr.bf16.gmra.mxu0 %v900
    %v1070 = vpop.f32.mrf.mxu0
    %v1071 = vadd.f32 0.0, %v1070
    %v1072 = vpop.f32.mrf.mxu0
    %v1073 = vpop.f32.mrf.mxu0
    %v1074 = vadd.f32 0.0, %v1073
    %v1075 = vpop.f32.mrf.mxu0
    %1076 = vmatprep.mubr.bf16.mxu0 0
    %1077 = vmatmul.mubr.bf16.gmra.mxu0 %v901
    %v1078 = vpop.f32.mrf.mxu0
    %v1079 = vadd.f32 0.0, %v1078
    %v1080 = vpop.f32.mrf.mxu0
    %v1081 = vpop.f32.mrf.mxu0
    %v1082 = vadd.f32 0.0, %v1081
    %v1083 = vpop.f32.mrf.mxu0
    %1084 = vmatprep.mubr.bf16.mxu0 0
    %1085 = vmatmul.mubr.bf16.gmra.mxu0 %v902
    %v1086 = vpop.f32.mrf.mxu0
    %v1087 = vadd.f32 0.0, %v1086
    %v1088 = vpop.f32.mrf.mxu0
    %v1089 = vpop.f32.mrf.mxu0
    %v1090 = vadd.f32 0.0, %v1089
    %v1091 = vpop.f32.mrf.mxu0
    %1092 = vmatprep.mubr.bf16.mxu0 0
    %1093 = vmatmul.mubr.bf16.gmra.mxu0 %v903
    %v1094 = vpop.f32.mrf.mxu0
    %v1095 = vadd.f32 0.0, %v1094
    %v1096 = vpop.f32.mrf.mxu0
    %v1097 = vpop.f32.mrf.mxu0
    %v1098 = vadd.f32 0.0, %v1097
    %v1099 = vpop.f32.mrf.mxu0
    %1100 = vmatprep.mubr.bf16.mxu0 0
    %1101 = vmatmul.mubr.bf16.gmra.mxu0 %v904
    %v1102 = vpop.f32.mrf.mxu0
    %v1103 = vadd.f32 0.0, %v1102
    %v1104 = vpop.f32.mrf.mxu0
    %v1105 = vpop.f32.mrf.mxu0
    %v1106 = vadd.f32 0.0, %v1105
    %v1107 = vpop.f32.mrf.mxu0
    %1108 = vmatprep.mubr.bf16.mxu0 0
    %1109 = vmatmul.mubr.bf16.gmra.mxu0 %v905
    %v1110 = vpop.f32.mrf.mxu0
    %v1111 = vadd.f32 0.0, %v1110
    %v1112 = vpop.f32.mrf.mxu0
    %v1113 = vpop.f32.mrf.mxu0
    %v1114 = vadd.f32 0.0, %v1113
    %v1115 = vpop.f32.mrf.mxu0
    %1116 = vmatprep.mubr.bf16.mxu0 0
    %1117 = vmatmul.mubr.bf16.gmra.mxu0 %v906
    %v1118 = vpop.f32.mrf.mxu0
    %v1119 = vadd.f32 0.0, %v1118
    %v1120 = vpop.f32.mrf.mxu0
    %v1121 = vpop.f32.mrf.mxu0
    %v1122 = vadd.f32 0.0, %v1121
    %v1123 = vpop.f32.mrf.mxu0
    %1124 = vmatprep.mubr.bf16.mxu0 0
    %1125 = vmatmul.mubr.bf16.gmra.mxu0 %v907
    %v1126 = vpop.f32.mrf.mxu0
    %v1127 = vadd.f32 0.0, %v1126
    %v1128 = vpop.f32.mrf.mxu0
    %v1129 = vpop.f32.mrf.mxu0
    %v1130 = vadd.f32 0.0, %v1129
    %v1131 = vpop.f32.mrf.mxu0
    %1132 = vdwg.mxu0
    %1133 = vst [vmem:[#allocation11] sm:$0xff] %v1007
    %1134 = vst [vmem:[#allocation11 + $0x8] sm:$0xff] %v1010
    %1135 = vst [vmem:[#allocation11 + $0x10] sm:$0xff] %v1015
    %1136 = vst [vmem:[#allocation11 + $0x18] sm:$0xff] %v1018
    %1137 = vst [vmem:[#allocation11 + $0x20] sm:$0xff] %v1023
    %1138 = vst [vmem:[#allocation11 + $0x28] sm:$0xff] %v1026
    %1139 = vst [vmem:[#allocation11 + $0x30] sm:$0xff] %v1031
    %1140 = vst [vmem:[#allocation11 + $0x38] sm:$0xff] %v1034
    %1141 = vst [vmem:[#allocation11 + $0x40] sm:$0xff] %v1039
    %1142 = vst [vmem:[#allocation11 + $0x48] sm:$0xff] %v1042
    %1143 = vst [vmem:[#allocation11 + $0x50] sm:$0xff] %v1047
    %1144 = vst [vmem:[#allocation11 + $0x58] sm:$0xff] %v1050
    %1145 = vst [vmem:[#allocation11 + $0x60] sm:$0xff] %v1055
    %1146 = vst [vmem:[#allocation11 + $0x68] sm:$0xff] %v1058
    %1147 = vst [vmem:[#allocation11 + $0x70] sm:$0xff] %v1063
    %1148 = vst [vmem:[#allocation11 + $0x78] sm:$0xff] %v1066
    %1149 = vst [vmem:[#allocation11 + $0x80] sm:$0xff] %v1071
    %1150 = vst [vmem:[#allocation11 + $0x88] sm:$0xff] %v1074
    %1151 = vst [vmem:[#allocation11 + $0x90] sm:$0xff] %v1079
    %1152 = vst [vmem:[#allocation11 + $0x98] sm:$0xff] %v1082
    %1153 = vst [vmem:[#allocation11 + $0xa0] sm:$0xff] %v1087
    %1154 = vst [vmem:[#allocation11 + $0xa8] sm:$0xff] %v1090
    %1155 = vst [vmem:[#allocation11 + $0xb0] sm:$0xff] %v1095
    %1156 = vst [vmem:[#allocation11 + $0xb8] sm:$0xff] %v1098
    %1157 = vst [vmem:[#allocation11 + $0xc0] sm:$0xff] %v1103
    %1158 = vst [vmem:[#allocation11 + $0xc8] sm:$0xff] %v1106
    %1159 = vst [vmem:[#allocation11 + $0xd0] sm:$0xff] %v1111
    %1160 = vst [vmem:[#allocation11 + $0xd8] sm:$0xff] %v1114
    %1161 = vst [vmem:[#allocation11 + $0xe0] sm:$0xff] %v1119
    %1162 = vst [vmem:[#allocation11 + $0xe8] sm:$0xff] %v1122
    %1163 = vst [vmem:[#allocation11 + $0xf0] sm:$0xff] %v1127
    %1164 = vst [vmem:[#allocation11 + $0xf8] sm:$0xff] %v1130
    // Predicated region
    $region42: #{tpu_custom_call.1} parent=1 // pred_check
      _
    $region43: #{tpu_custom_call.1} parent=1 // pred_check_branch
      %1166 = sbr.rel (0) target = $region45
    $region44: #{tpu_custom_call.1} parent=1 // pred_region
      %s1168 = ssub.s32 4096, 4096
      %1169 = vsyncadd [#allocation5], %s1168
      %s1170 = sshll.u32 [#allocation11], 4
      %s1171 = int_to_ptr.vmem [resolvable:$true] %s1170
      %1176 = dma.vmem_to_hbm [thread:$0]  %s1171, 4096, %s6, [#allocation5], 128, 128, 8
    $region45: #{tpu_custom_call.1} parent=1 // pred_fallthru
      _
    // Predicated region
    $region46: #{tpu_custom_call.1} parent=1 // pred_check
      _
    $region47: #{tpu_custom_call.1} parent=1 // pred_check_branch
      %1178 = sbr.rel (0) target = $region49
    $region48: #{tpu_custom_call.1} parent=1 // pred_region
      %1179 = dma.done [#allocation5], 4096
    $region49: #{tpu_custom_call.1} parent=1 // pred_fallthru
      _
    %1180 = vsyncpa [#allocation4], 1
    %1181 = vsyncpa [#allocation7], 1
    %1182 = vsyncpa [#allocation10], 1
    %1183 = vsyncpa [#allocation5], 1

</llo_original>
